<compile_context>
chip_gen: v6e
topology: v6e:2x2x1
jax: 0.10.0
libtpu: 0.0.40
codegen_flags: <defaults>
</compile_context>

<pallas_src>
import numpy as np
import jax
import jax.numpy as jnp
from jax import lax
from jax.experimental import pallas as pl
from jax.experimental.pallas import tpu as pltpu

# ----------------------------- configuration --------------------------------
N_MASKS = 1
Z_DIM = 32
IMSIZE = 16
IN_CH = 3 + N_MASKS               # 4
IN_CH_PAD = 8                     # pad so layer-1 matmul K = 16 * 8 = 128 (lane dense)
BN_EPS = 1e-5
LEAKY_SLOPE = 0.2
CONV_OUT_CH = (16, 32, 64, 128)
N_LATENT = N_MASKS * Z_DIM
KK = 16                           # 4x4 kernel taps

# Per-sample spatial sizes along the conv stack: 16 -> 8 -> 4 -> 2 -> 1.
M1_OUT, M2_OUT, M3_OUT, M4_OUT = 64, 16, 4, 1
# Rows-per-tap in the stacked gather matrices (padded to multiples of 8 so every
# in-kernel sublane slice of the gather result is 8-aligned).
RPT2, RPT3, RPT4 = 16, 8, 8

# ---- constant slab layouts (static offsets shared by pack time and kernel) ----
# width-64 slab: W1 | W2 | W3 | Wfc | Q2stack | Q3stack | Q4stack
C64_W = 64
W1_OFF, W1_ROWS = 0, KK * IN_CH_PAD                          # (128, :16)
W2_OFF, W2_ROWS = W1_OFF + W1_ROWS, KK * CONV_OUT_CH[0]      # (256, :32)
W3_OFF, W3_ROWS = W2_OFF + W2_ROWS, KK * CONV_OUT_CH[1]      # (512, :64)
WFC_OFF, WFC_ROWS = W3_OFF + W3_ROWS, CONV_OUT_CH[3]         # (128, :32)
Q2_OFF, Q2_ROWS = WFC_OFF + WFC_ROWS, KK * RPT2              # (256, :64)
Q3_OFF, Q3_ROWS = Q2_OFF + Q2_ROWS, KK * RPT3                # (128, :16)
Q4_OFF, Q4_ROWS = Q3_OFF + Q3_ROWS, KK * RPT4                # (128, :4)
C64_ROWS = Q4_OFF + Q4_ROWS                                  # 1536 rows  (384 KiB)

# width-128 slab: W4 | biases (one bias per 8-row-aligned block: b1,b2,b3,b4,bfc)
WB_W = 128
W4_OFF, W4_ROWS = 0, KK * CONV_OUT_CH[2]                     # (1024, :128)
BIAS_OFF = W4_OFF + W4_ROWS                                  # bias l at row BIAS_OFF + 8*l
WB_ROWS = BIAS_OFF + 5 * 8                                   # 1064 rows  (532 KiB)


# ------------------------------ Pallas kernel --------------------------------
def _lrelu(v):
    # f32 LeakyReLU(0.2) epilogue (kept in f32; no sub-32-bit VPU ops).
    return jnp.where(v > 0, v, LEAKY_SLOPE * v)


def vae_encoder_kernel(p1_ref, c64_ref, wb_ref, out_ref):
    """One batch sample per grid step; all intermediates stay in VMEM/vregs."""
    f32 = jnp.float32

    def bias(idx, width):
        r = BIAS_OFF + 8 * idx                      # 8-row-aligned single-row load
        return wb_ref[r:r + 1, 0:width]             # (1, width)

    # ---- layer 1: lane-dense patches (64,128) @ W1 (128,16): one MXU push ----
    a = jnp.dot(p1_ref[0], c64_ref[W1_OFF:W1_OFF + W1_ROWS, 0:CONV_OUT_CH[0]],
                preferred_element_type=f32)
    a = _lrelu(a + bias(0, CONV_OUT_CH[0]))                          # (64, 16)

    # ---- layers 2-4: one stacked-Q gather push + 16 partial-sum matmuls ------
    # patches @ W == sum_k (Q_k @ a_prev) @ W_k : no lane concat, all slices are
    # static, 8-sublane-aligned (rows) or prefix (lanes).
    def conv_accum(a_prev, m_in, q_off, rpt, w_ref, w_off, c_prev, c_out, b_idx):
        g = jnp.dot(c64_ref[q_off:q_off + KK * rpt, 0:m_in], a_prev,
                    preferred_element_type=f32)                      # (16*rpt, c_prev)
        acc = jnp.zeros((rpt, c_out), f32)
        for k in range(KK):                                          # static unroll
            acc = acc + jnp.dot(
                g[k * rpt:(k + 1) * rpt, :],
                w_ref[w_off + k * c_prev:w_off + (k + 1) * c_prev, 0:c_out],
                preferred_element_type=f32)
        return _lrelu(acc + bias(b_idx, c_out))

    a = conv_accum(a, M1_OUT, Q2_OFF, RPT2, c64_ref, W2_OFF,
                   CONV_OUT_CH[0], CONV_OUT_CH[1], 1)                # (16, 32)
    a = conv_accum(a, M2_OUT, Q3_OFF, RPT3, c64_ref, W3_OFF,
                   CONV_OUT_CH[1], CONV_OUT_CH[2], 2)                # (8, 64); rows 0:4 real
    a = conv_accum(a[0:M3_OUT, :], M3_OUT, Q4_OFF, RPT4, wb_ref, W4_OFF,
                   CONV_OUT_CH[2], CONV_OUT_CH[3], 3)                # (8, 128); row 0 real

    # ---- final Linear: static "no activation" path ----
    out_ref[0] = (jnp.dot(a[0:1, :],
                          c64_ref[WFC_OFF:WFC_OFF + WFC_ROWS, 0:N_LATENT],
                          preferred_element_type=f32)
                  + bias(4, N_LATENT))


# --------------------------- host-side preparation ---------------------------
def _conv_w_to_mat(w_oihw, c_in_pad=None):
    """torch Conv2d weight (C_out, C_in, 4, 4) -> (16*C_in[_pad], C_out) with rows
    ordered (ki, kj, c_in): simultaneously the layer-1 im2col matmul weight and
    the tap-stacked W_k blocks (W_k = rows [k*C_in:(k+1)*C_in]) for layers 2-4."""
    c_out, c_in, kh, kw = w_oihw.shape
    if c_in_pad is not None and c_in_pad > c_in:
        w_oihw = jnp.pad(w_oihw, ((0, 0), (0, c_in_pad - c_in), (0, 0), (0, 0)))
        c_in = c_in_pad
    return jnp.transpose(w_oihw, (2, 3, 1, 0)).reshape(kh * kw * c_in, c_out)


def _make_q_stack(h_in, h_out, rpt):
    """Batch-independent stride-2 gather matrices for a 4x4/s2/p1 conv, stacked
    along rows: block k = tap (ki,kj) holds the (h_out^2, h_in^2) 0/1 gather in
    its first h_out^2 rows; all-zero entries encode the p=1 zero padding and the
    8-row alignment padding.  Row order everywhere is (row, col) spatial."""
    m_in = h_in * h_in
    q = np.zeros((KK * rpt, m_in), np.float32)
    for ki in range(4):
        for kj in range(4):
            k = ki * 4 + kj
            for oh in range(h_out):
                for ow in range(h_out):
                    ih, iw = 2 * oh + ki - 1, 2 * ow + kj - 1
                    if 0 <= ih < h_in and 0 <= iw < h_in:
                        q[k * rpt + oh * h_out + ow, ih * h_in + iw] = 1.0
    return q


def pack_params(params):
    """One-time, batch-independent prep: fold eval-mode BN into conv weights /
    biases and pack every constant into two lane-aligned f32 slabs."""
    w = {1: _conv_w_to_mat(params['conv1_w'], IN_CH_PAD)}
    b = {1: params['conv1_b']}
    for i in (2, 3, 4):
        scale = params[f'bn{i}_gamma'] / jnp.sqrt(params[f'bn{i}_var'] + BN_EPS)
        w[i] = _conv_w_to_mat(params[f'conv{i}_w']) * scale[None, :]
        b[i] = (params[f'conv{i}_b'] - params[f'bn{i}_mean']) * scale + params[f'bn{i}_beta']
    wfc = jnp.transpose(params['fc_w'])                   # (128, 32)
    bfc = params['fc_b']

    c64 = jnp.zeros((C64_ROWS, C64_W), jnp.float32)
    c64 = c64.at[W1_OFF:W1_OFF + W1_ROWS, 0:CONV_OUT_CH[0]].set(w[1])
    c64 = c64.at[W2_OFF:W2_OFF + W2_ROWS, 0:CONV_OUT_CH[1]].set(w[2])
    c64 = c64.at[W3_OFF:W3_OFF + W3_ROWS, 0:CONV_OUT_CH[2]].set(w[3])
    c64 = c64.at[WFC_OFF:WFC_OFF + WFC_ROWS, 0:N_LATENT].set(wfc)
    c64 = c64.at[Q2_OFF:Q2_OFF + Q2_ROWS, 0:M1_OUT].set(_make_q_stack(8, 4, RPT2))
    c64 = c64.at[Q3_OFF:Q3_OFF + Q3_ROWS, 0:M2_OUT].set(_make_q_stack(4, 2, RPT3))
    c64 = c64.at[Q4_OFF:Q4_OFF + Q4_ROWS, 0:M3_OUT].set(_make_q_stack(2, 1, RPT4))

    wb = jnp.zeros((WB_ROWS, WB_W), jnp.float32)
    wb = wb.at[W4_OFF:W4_OFF + W4_ROWS, :].set(w[4])
    wb = wb.at[BIAS_OFF + 0, 0:CONV_OUT_CH[0]].set(b[1])
    wb = wb.at[BIAS_OFF + 8, 0:CONV_OUT_CH[1]].set(b[2])
    wb = wb.at[BIAS_OFF + 16, 0:CONV_OUT_CH[2]].set(b[3])
    wb = wb.at[BIAS_OFF + 24, 0:CONV_OUT_CH[3]].set(b[4])
    wb = wb.at[BIAS_OFF + 32, 0:N_LATENT].set(bfc)
    return {'c64': c64, 'wb': wb}


def _im2col_conv1(x_nchw):
    """conv1 im2col in the same jit (lane-dense (B, 64, 128) slab; K ordered
    (ki, kj, c_pad) to match the W1 matrix rows)."""
    b = x_nchw.shape[0]
    h_out = IMSIZE // 2
    x = jnp.transpose(x_nchw, (0, 2, 3, 1))                            # NCHW -> NHWC
    x = jnp.pad(x, ((0, 0), (0, 0), (0, 0), (0, IN_CH_PAD - IN_CH)))   # channel lane pad
    x = jnp.pad(x, ((0, 0), (1, 1), (1, 1), (0, 0)))                   # conv padding = 1
    cols = [x[:, ki:ki + 2 * h_out:2, kj:kj + 2 * h_out:2, :]
            for ki in range(4) for kj in range(4)]
    patches = jnp.concatenate(cols, axis=-1)                 # (B, 8, 8, 128)
    return patches.reshape(b, h_out * h_out, KK * IN_CH_PAD)  # (B, 64, 128)


# ------------------------------- forward pass --------------------------------
@jax.jit
def vae_encoder_forward(x, packed):
    batch = x.shape[0]
    p1 = _im2col_conv1(x)
    out = pl.pallas_call(
        vae_encoder_kernel,
        out_shape=jax.ShapeDtypeStruct((batch, 1, N_LATENT), jnp.float32),
        grid=(batch,),
        in_specs=[
            pl.BlockSpec((1, M1_OUT, KK * IN_CH_PAD), lambda i: (i, 0, 0)),  # per-sample patches
            pl.BlockSpec((C64_ROWS, C64_W), lambda i: (0, 0)),               # constant slab (resident)
            pl.BlockSpec((WB_ROWS, WB_W), lambda i: (0, 0)),                 # constant slab (resident)
        ],
        out_specs=pl.BlockSpec((1, 1, N_LATENT), lambda i: (i, 0, 0)),
        compiler_params=pltpu.CompilerParams(
            dimension_semantics=("parallel",)),     # batch axis -> both v7x TensorCores
    )(p1, packed['c64'], packed['wb'])
    return out.reshape(batch, N_MASKS, Z_DIM)


# ------------------------- parameters & pure-JAX ref --------------------------
def init_params(key):
    keys = iter(jax.random.split(key, 24))
    p = {}
    c_in = IN_CH
    for i, c_out in enumerate(CONV_OUT_CH, start=1):
        std = 1.0 / np.sqrt(c_in * 16)
        p[f'conv{i}_w'] = std * jax.random.normal(next(keys), (c_out, c_in, 4, 4), jnp.float32)
        p[f'conv{i}_b'] = std * jax.random.normal(next(keys), (c_out,), jnp.float32)
        if i >= 2:
            p[f'bn{i}_gamma'] = 0.5 + jax.random.uniform(next(keys), (c_out,), jnp.float32)
            p[f'bn{i}_beta'] = 0.1 * jax.random.normal(next(keys), (c_out,), jnp.float32)
            p[f'bn{i}_mean'] = 0.1 * jax.random.normal(next(keys), (c_out,), jnp.float32)
            p[f'bn{i}_var'] = 0.5 + jax.random.uniform(next(keys), (c_out,), jnp.float32)
        c_in = c_out
    fc_in = 128 * (IMSIZE // 2 ** 4) ** 2
    std = 1.0 / np.sqrt(fc_in)
    p['fc_w'] = std * jax.random.normal(next(keys), (N_LATENT, fc_in), jnp.float32)
    p['fc_b'] = std * jax.random.normal(next(keys), (N_LATENT,), jnp.float32)
    return p


def reference_forward(x, params):
    """Pure-JAX/XLA reference mirroring the PyTorch module (eval-mode BN)."""
    hp = lax.Precision.HIGHEST

    def conv(y, w, b):
        y = lax.conv_general_dilated(
            y, w, window_strides=(2, 2), padding=((1, 1), (1, 1)),
            dimension_numbers=('NCHW', 'OIHW', 'NCHW'), precision=hp)
        return y + b[None, :, None, None]

    def bn(y, g, bt, m, v):
        inv = g / jnp.sqrt(v + BN_EPS)
        return (y - m[None, :, None, None]) * inv[None, :, None, None] + bt[None, :, None, None]

    def lrelu(y):
        return jnp.where(y > 0, y, LEAKY_SLOPE * y)

    y = lrelu(conv(x, params['conv1_w'], params['conv1_b']))
    for i in (2, 3, 4):
        y = conv(y, params[f'conv{i}_w'], params[f'conv{i}_b'])
        y = bn(y, params[f'bn{i}_gamma'], params[f'bn{i}_beta'],
               params[f'bn{i}_mean'], params[f'bn{i}_var'])
        y = lrelu(y)
    n = x.shape[0]
    y = y.reshape(n, -1)
    out = jnp.dot(y, params['fc_w'].T, precision=hp) + params['fc_b']
    return out.reshape(n, N_MASKS, Z_DIM)


# ------------------------------------ main ------------------------------------
if __name__ == "__main__":
    key = jax.random.PRNGKey(0)
    k_x, k_p = jax.random.split(key)
    batch = 2
    x = jax.random.normal(k_x, (batch, IN_CH, IMSIZE, IMSIZE), jnp.float32)

    params = init_params(k_p)
    packed = pack_params(params)   # batch-independent packing

    out = jax.block_until_ready(vae_encoder_forward(x, packed))
    assert out.shape == (batch, N_MASKS, Z_DIM)

    ref = jax.block_until_ready(reference_forward(x, params))
    # All-f32 path: tight tolerance (a gather/layout bug would be O(1) off).
    np.testing.assert_allclose(np.asarray(out), np.asarray(ref), rtol=1e-4, atol=1e-4)

    print("KERNEL_OK")
</pallas_src>

<mosaic_0001>
module attributes {stable_mosaic.version = 11 : i64} {
  func.func @vae_encoder_kernel(%arg0: i32, %arg1: memref<1x64x128xf32, #tpu.memory_space<vmem>>, %arg2: memref<1536x64xf32, #tpu.memory_space<vmem>>, %arg3: memref<1064x128xf32, #tpu.memory_space<vmem>>, %arg4: memref<1x1x32xf32, #tpu.memory_space<vmem>>) attributes {dimension_semantics = [#tpu.dimension_semantics<parallel>], iteration_bounds = array<i64: 2>, scalar_prefetch = 0 : i64, scratch_operands = 0 : i64, tpu.core_type = #tpu.core_type<tc>, window_params = [{transform_indices = @transform_0, window_bounds = array<i64: 1, 64, 128>}, {pipeline_mode = #tpu.pipeline_mode<synchronous>, transform_indices = @transform_1, window_bounds = array<i64: 1536, 64>}, {pipeline_mode = #tpu.pipeline_mode<synchronous>, transform_indices = @transform_2, window_bounds = array<i64: 1064, 128>}, {transform_indices = @transform_3, window_bounds = array<i64: 1, 1, 32>}]} {
    %c0 = arith.constant 0 : index
    %c0_0 = arith.constant 0 : index
    %c0_1 = arith.constant 0 : index
    %0 = vector.load %arg1[%c0, %c0_0, %c0_1] : memref<1x64x128xf32, #tpu.memory_space<vmem>>, vector<1x64x128xf32>
    %1 = vector.shape_cast %0 : vector<1x64x128xf32> to vector<64x128xf32>
    %c0_2 = arith.constant 0 : index
    %c0_3 = arith.constant 0 : index
    %2 = vector.load %arg2[%c0_2, %c0_3] : memref<1536x64xf32, #tpu.memory_space<vmem>>, vector<128x16xf32>
    %cst = arith.constant dense<0.000000e+00> : vector<64x16xf32>
    %3 = tpu.matmul %1, %2, %cst {dimension_numbers = #tpu.dot_dimension_numbers<[1], [0], [0], [1], [0, 0, 1, 1], [], []>} : vector<64x128xf32>, vector<128x16xf32>, vector<64x16xf32> -> vector<64x16xf32>
    %c1024 = arith.constant 1024 : index
    %c0_4 = arith.constant 0 : index
    %4 = vector.load %arg3[%c1024, %c0_4] : memref<1064x128xf32, #tpu.memory_space<vmem>>, vector<1x16xf32>
    %5 = vector.broadcast %4 : vector<1x16xf32> to vector<64x16xf32>
    %6 = arith.addf %3, %5 : vector<64x16xf32>
    %cst_5 = arith.constant 0.000000e+00 : f32
    %7 = vector.broadcast %cst_5 : f32 to vector<64x16xf32>
    %8 = arith.cmpf ogt, %6, %7 : vector<64x16xf32>
    %cst_6 = arith.constant 2.000000e-01 : f32
    %9 = vector.broadcast %cst_6 : f32 to vector<64x16xf32>
    %10 = arith.mulf %9, %6 : vector<64x16xf32>
    %11 = arith.select %8, %6, %10 : vector<64x16xi1>, vector<64x16xf32>
    %c1024_7 = arith.constant 1024 : index
    %c0_8 = arith.constant 0 : index
    %12 = vector.load %arg2[%c1024_7, %c0_8] : memref<1536x64xf32, #tpu.memory_space<vmem>>, vector<256x64xf32>
    %cst_9 = arith.constant dense<0.000000e+00> : vector<256x16xf32>
    %13 = tpu.matmul %12, %11, %cst_9 {dimension_numbers = #tpu.dot_dimension_numbers<[1], [0], [0], [1], [0, 0, 1, 1], [], []>} : vector<256x64xf32>, vector<64x16xf32>, vector<256x16xf32> -> vector<256x16xf32>
    %cst_10 = arith.constant 0.000000e+00 : f32
    %14 = vector.broadcast %cst_10 : f32 to vector<16x32xf32>
    %15 = vector.extract_strided_slice %13 {offsets = [0, 0], sizes = [16, 16], strides = [1, 1]} : vector<256x16xf32> to vector<16x16xf32>
    %c128 = arith.constant 128 : index
    %c0_11 = arith.constant 0 : index
    %16 = vector.load %arg2[%c128, %c0_11] : memref<1536x64xf32, #tpu.memory_space<vmem>>, vector<16x32xf32>
    %cst_12 = arith.constant dense<0.000000e+00> : vector<16x32xf32>
    %17 = tpu.matmul %15, %16, %cst_12 {dimension_numbers = #tpu.dot_dimension_numbers<[1], [0], [0], [1], [0, 0, 1, 1], [], []>} : vector<16x16xf32>, vector<16x32xf32>, vector<16x32xf32> -> vector<16x32xf32>
    %18 = arith.addf %14, %17 : vector<16x32xf32>
    %19 = vector.extract_strided_slice %13 {offsets = [16, 0], sizes = [16, 16], strides = [1, 1]} : vector<256x16xf32> to vector<16x16xf32>
    %c144 = arith.constant 144 : index
    %c0_13 = arith.constant 0 : index
    %20 = vector.load %arg2[%c144, %c0_13] : memref<1536x64xf32, #tpu.memory_space<vmem>>, vector<16x32xf32>
    %cst_14 = arith.constant dense<0.000000e+00> : vector<16x32xf32>
    %21 = tpu.matmul %19, %20, %cst_14 {dimension_numbers = #tpu.dot_dimension_numbers<[1], [0], [0], [1], [0, 0, 1, 1], [], []>} : vector<16x16xf32>, vector<16x32xf32>, vector<16x32xf32> -> vector<16x32xf32>
    %22 = arith.addf %18, %21 : vector<16x32xf32>
    %23 = vector.extract_strided_slice %13 {offsets = [32, 0], sizes = [16, 16], strides = [1, 1]} : vector<256x16xf32> to vector<16x16xf32>
    %c160 = arith.constant 160 : index
    %c0_15 = arith.constant 0 : index
    %24 = vector.load %arg2[%c160, %c0_15] : memref<1536x64xf32, #tpu.memory_space<vmem>>, vector<16x32xf32>
    %cst_16 = arith.constant dense<0.000000e+00> : vector<16x32xf32>
    %25 = tpu.matmul %23, %24, %cst_16 {dimension_numbers = #tpu.dot_dimension_numbers<[1], [0], [0], [1], [0, 0, 1, 1], [], []>} : vector<16x16xf32>, vector<16x32xf32>, vector<16x32xf32> -> vector<16x32xf32>
    %26 = arith.addf %22, %25 : vector<16x32xf32>
    %27 = vector.extract_strided_slice %13 {offsets = [48, 0], sizes = [16, 16], strides = [1, 1]} : vector<256x16xf32> to vector<16x16xf32>
    %c176 = arith.constant 176 : index
    %c0_17 = arith.constant 0 : index
    %28 = vector.load %arg2[%c176, %c0_17] : memref<1536x64xf32, #tpu.memory_space<vmem>>, vector<16x32xf32>
    %cst_18 = arith.constant dense<0.000000e+00> : vector<16x32xf32>
    %29 = tpu.matmul %27, %28, %cst_18 {dimension_numbers = #tpu.dot_dimension_numbers<[1], [0], [0], [1], [0, 0, 1, 1], [], []>} : vector<16x16xf32>, vector<16x32xf32>, vector<16x32xf32> -> vector<16x32xf32>
    %30 = arith.addf %26, %29 : vector<16x32xf32>
    %31 = vector.extract_strided_slice %13 {offsets = [64, 0], sizes = [16, 16], strides = [1, 1]} : vector<256x16xf32> to vector<16x16xf32>
    %c192 = arith.constant 192 : index
    %c0_19 = arith.constant 0 : index
    %32 = vector.load %arg2[%c192, %c0_19] : memref<1536x64xf32, #tpu.memory_space<vmem>>, vector<16x32xf32>
    %cst_20 = arith.constant dense<0.000000e+00> : vector<16x32xf32>
    %33 = tpu.matmul %31, %32, %cst_20 {dimension_numbers = #tpu.dot_dimension_numbers<[1], [0], [0], [1], [0, 0, 1, 1], [], []>} : vector<16x16xf32>, vector<16x32xf32>, vector<16x32xf32> -> vector<16x32xf32>
    %34 = arith.addf %30, %33 : vector<16x32xf32>
    %35 = vector.extract_strided_slice %13 {offsets = [80, 0], sizes = [16, 16], strides = [1, 1]} : vector<256x16xf32> to vector<16x16xf32>
    %c208 = arith.constant 208 : index
    %c0_21 = arith.constant 0 : index
    %36 = vector.load %arg2[%c208, %c0_21] : memref<1536x64xf32, #tpu.memory_space<vmem>>, vector<16x32xf32>
    %cst_22 = arith.constant dense<0.000000e+00> : vector<16x32xf32>
    %37 = tpu.matmul %35, %36, %cst_22 {dimension_numbers = #tpu.dot_dimension_numbers<[1], [0], [0], [1], [0, 0, 1, 1], [], []>} : vector<16x16xf32>, vector<16x32xf32>, vector<16x32xf32> -> vector<16x32xf32>
    %38 = arith.addf %34, %37 : vector<16x32xf32>
    %39 = vector.extract_strided_slice %13 {offsets = [96, 0], sizes = [16, 16], strides = [1, 1]} : vector<256x16xf32> to vector<16x16xf32>
    %c224 = arith.constant 224 : index
    %c0_23 = arith.constant 0 : index
    %40 = vector.load %arg2[%c224, %c0_23] : memref<1536x64xf32, #tpu.memory_space<vmem>>, vector<16x32xf32>
    %cst_24 = arith.constant dense<0.000000e+00> : vector<16x32xf32>
    %41 = tpu.matmul %39, %40, %cst_24 {dimension_numbers = #tpu.dot_dimension_numbers<[1], [0], [0], [1], [0, 0, 1, 1], [], []>} : vector<16x16xf32>, vector<16x32xf32>, vector<16x32xf32> -> vector<16x32xf32>
    %42 = arith.addf %38, %41 : vector<16x32xf32>
    %43 = vector.extract_strided_slice %13 {offsets = [112, 0], sizes = [16, 16], strides = [1, 1]} : vector<256x16xf32> to vector<16x16xf32>
    %c240 = arith.constant 240 : index
    %c0_25 = arith.constant 0 : index
    %44 = vector.load %arg2[%c240, %c0_25] : memref<1536x64xf32, #tpu.memory_space<vmem>>, vector<16x32xf32>
    %cst_26 = arith.constant dense<0.000000e+00> : vector<16x32xf32>
    %45 = tpu.matmul %43, %44, %cst_26 {dimension_numbers = #tpu.dot_dimension_numbers<[1], [0], [0], [1], [0, 0, 1, 1], [], []>} : vector<16x16xf32>, vector<16x32xf32>, vector<16x32xf32> -> vector<16x32xf32>
    %46 = arith.addf %42, %45 : vector<16x32xf32>
    %47 = vector.extract_strided_slice %13 {offsets = [128, 0], sizes = [16, 16], strides = [1, 1]} : vector<256x16xf32> to vector<16x16xf32>
    %c256 = arith.constant 256 : index
    %c0_27 = arith.constant 0 : index
    %48 = vector.load %arg2[%c256, %c0_27] : memref<1536x64xf32, #tpu.memory_space<vmem>>, vector<16x32xf32>
    %cst_28 = arith.constant dense<0.000000e+00> : vector<16x32xf32>
    %49 = tpu.matmul %47, %48, %cst_28 {dimension_numbers = #tpu.dot_dimension_numbers<[1], [0], [0], [1], [0, 0, 1, 1], [], []>} : vector<16x16xf32>, vector<16x32xf32>, vector<16x32xf32> -> vector<16x32xf32>
    %50 = arith.addf %46, %49 : vector<16x32xf32>
    %51 = vector.extract_strided_slice %13 {offsets = [144, 0], sizes = [16, 16], strides = [1, 1]} : vector<256x16xf32> to vector<16x16xf32>
    %c272 = arith.constant 272 : index
    %c0_29 = arith.constant 0 : index
    %52 = vector.load %arg2[%c272, %c0_29] : memref<1536x64xf32, #tpu.memory_space<vmem>>, vector<16x32xf32>
    %cst_30 = arith.constant dense<0.000000e+00> : vector<16x32xf32>
    %53 = tpu.matmul %51, %52, %cst_30 {dimension_numbers = #tpu.dot_dimension_numbers<[1], [0], [0], [1], [0, 0, 1, 1], [], []>} : vector<16x16xf32>, vector<16x32xf32>, vector<16x32xf32> -> vector<16x32xf32>
    %54 = arith.addf %50, %53 : vector<16x32xf32>
    %55 = vector.extract_strided_slice %13 {offsets = [160, 0], sizes = [16, 16], strides = [1, 1]} : vector<256x16xf32> to vector<16x16xf32>
    %c288 = arith.constant 288 : index
    %c0_31 = arith.constant 0 : index
    %56 = vector.load %arg2[%c288, %c0_31] : memref<1536x64xf32, #tpu.memory_space<vmem>>, vector<16x32xf32>
    %cst_32 = arith.constant dense<0.000000e+00> : vector<16x32xf32>
    %57 = tpu.matmul %55, %56, %cst_32 {dimension_numbers = #tpu.dot_dimension_numbers<[1], [0], [0], [1], [0, 0, 1, 1], [], []>} : vector<16x16xf32>, vector<16x32xf32>, vector<16x32xf32> -> vector<16x32xf32>
    %58 = arith.addf %54, %57 : vector<16x32xf32>
    %59 = vector.extract_strided_slice %13 {offsets = [176, 0], sizes = [16, 16], strides = [1, 1]} : vector<256x16xf32> to vector<16x16xf32>
    %c304 = arith.constant 304 : index
    %c0_33 = arith.constant 0 : index
    %60 = vector.load %arg2[%c304, %c0_33] : memref<1536x64xf32, #tpu.memory_space<vmem>>, vector<16x32xf32>
    %cst_34 = arith.constant dense<0.000000e+00> : vector<16x32xf32>
    %61 = tpu.matmul %59, %60, %cst_34 {dimension_numbers = #tpu.dot_dimension_numbers<[1], [0], [0], [1], [0, 0, 1, 1], [], []>} : vector<16x16xf32>, vector<16x32xf32>, vector<16x32xf32> -> vector<16x32xf32>
    %62 = arith.addf %58, %61 : vector<16x32xf32>
    %63 = vector.extract_strided_slice %13 {offsets = [192, 0], sizes = [16, 16], strides = [1, 1]} : vector<256x16xf32> to vector<16x16xf32>
    %c320 = arith.constant 320 : index
    %c0_35 = arith.constant 0 : index
    %64 = vector.load %arg2[%c320, %c0_35] : memref<1536x64xf32, #tpu.memory_space<vmem>>, vector<16x32xf32>
    %cst_36 = arith.constant dense<0.000000e+00> : vector<16x32xf32>
    %65 = tpu.matmul %63, %64, %cst_36 {dimension_numbers = #tpu.dot_dimension_numbers<[1], [0], [0], [1], [0, 0, 1, 1], [], []>} : vector<16x16xf32>, vector<16x32xf32>, vector<16x32xf32> -> vector<16x32xf32>
    %66 = arith.addf %62, %65 : vector<16x32xf32>
    %67 = vector.extract_strided_slice %13 {offsets = [208, 0], sizes = [16, 16], strides = [1, 1]} : vector<256x16xf32> to vector<16x16xf32>
    %c336 = arith.constant 336 : index
    %c0_37 = arith.constant 0 : index
    %68 = vector.load %arg2[%c336, %c0_37] : memref<1536x64xf32, #tpu.memory_space<vmem>>, vector<16x32xf32>
    %cst_38 = arith.constant dense<0.000000e+00> : vector<16x32xf32>
    %69 = tpu.matmul %67, %68, %cst_38 {dimension_numbers = #tpu.dot_dimension_numbers<[1], [0], [0], [1], [0, 0, 1, 1], [], []>} : vector<16x16xf32>, vector<16x32xf32>, vector<16x32xf32> -> vector<16x32xf32>
    %70 = arith.addf %66, %69 : vector<16x32xf32>
    %71 = vector.extract_strided_slice %13 {offsets = [224, 0], sizes = [16, 16], strides = [1, 1]} : vector<256x16xf32> to vector<16x16xf32>
    %c352 = arith.constant 352 : index
    %c0_39 = arith.constant 0 : index
    %72 = vector.load %arg2[%c352, %c0_39] : memref<1536x64xf32, #tpu.memory_space<vmem>>, vector<16x32xf32>
    %cst_40 = arith.constant dense<0.000000e+00> : vector<16x32xf32>
    %73 = tpu.matmul %71, %72, %cst_40 {dimension_numbers = #tpu.dot_dimension_numbers<[1], [0], [0], [1], [0, 0, 1, 1], [], []>} : vector<16x16xf32>, vector<16x32xf32>, vector<16x32xf32> -> vector<16x32xf32>
    %74 = arith.addf %70, %73 : vector<16x32xf32>
    %75 = vector.extract_strided_slice %13 {offsets = [240, 0], sizes = [16, 16], strides = [1, 1]} : vector<256x16xf32> to vector<16x16xf32>
    %c368 = arith.constant 368 : index
    %c0_41 = arith.constant 0 : index
    %76 = vector.load %arg2[%c368, %c0_41] : memref<1536x64xf32, #tpu.memory_space<vmem>>, vector<16x32xf32>
    %cst_42 = arith.constant dense<0.000000e+00> : vector<16x32xf32>
    %77 = tpu.matmul %75, %76, %cst_42 {dimension_numbers = #tpu.dot_dimension_numbers<[1], [0], [0], [1], [0, 0, 1, 1], [], []>} : vector<16x16xf32>, vector<16x32xf32>, vector<16x32xf32> -> vector<16x32xf32>
    %78 = arith.addf %74, %77 : vector<16x32xf32>
    %c1032 = arith.constant 1032 : index
    %c0_43 = arith.constant 0 : index
    %79 = vector.load %arg3[%c1032, %c0_43] : memref<1064x128xf32, #tpu.memory_space<vmem>>, vector<1x32xf32>
    %80 = vector.broadcast %79 : vector<1x32xf32> to vector<16x32xf32>
    %81 = arith.addf %78, %80 : vector<16x32xf32>
    %cst_44 = arith.constant 0.000000e+00 : f32
    %82 = vector.broadcast %cst_44 : f32 to vector<16x32xf32>
    %83 = arith.cmpf ogt, %81, %82 : vector<16x32xf32>
    %cst_45 = arith.constant 2.000000e-01 : f32
    %84 = vector.broadcast %cst_45 : f32 to vector<16x32xf32>
    %85 = arith.mulf %84, %81 : vector<16x32xf32>
    %86 = arith.select %83, %81, %85 : vector<16x32xi1>, vector<16x32xf32>
    %c1280 = arith.constant 1280 : index
    %c0_46 = arith.constant 0 : index
    %87 = vector.load %arg2[%c1280, %c0_46] : memref<1536x64xf32, #tpu.memory_space<vmem>>, vector<128x16xf32>
    %cst_47 = arith.constant dense<0.000000e+00> : vector<128x32xf32>
    %88 = tpu.matmul %87, %86, %cst_47 {dimension_numbers = #tpu.dot_dimension_numbers<[1], [0], [0], [1], [0, 0, 1, 1], [], []>} : vector<128x16xf32>, vector<16x32xf32>, vector<128x32xf32> -> vector<128x32xf32>
    %cst_48 = arith.constant 0.000000e+00 : f32
    %89 = vector.broadcast %cst_48 : f32 to vector<8x64xf32>
    %90 = vector.extract_strided_slice %88 {offsets = [0, 0], sizes = [8, 32], strides = [1, 1]} : vector<128x32xf32> to vector<8x32xf32>
    %c384 = arith.constant 384 : index
    %c0_49 = arith.constant 0 : index
    %91 = vector.load %arg2[%c384, %c0_49] : memref<1536x64xf32, #tpu.memory_space<vmem>>, vector<32x64xf32>
    %cst_50 = arith.constant dense<0.000000e+00> : vector<8x64xf32>
    %92 = tpu.matmul %90, %91, %cst_50 {dimension_numbers = #tpu.dot_dimension_numbers<[1], [0], [0], [1], [0, 0, 1, 1], [], []>} : vector<8x32xf32>, vector<32x64xf32>, vector<8x64xf32> -> vector<8x64xf32>
    %93 = arith.addf %89, %92 : vector<8x64xf32>
    %94 = vector.extract_strided_slice %88 {offsets = [8, 0], sizes = [8, 32], strides = [1, 1]} : vector<128x32xf32> to vector<8x32xf32>
    %c416 = arith.constant 416 : index
    %c0_51 = arith.constant 0 : index
    %95 = vector.load %arg2[%c416, %c0_51] : memref<1536x64xf32, #tpu.memory_space<vmem>>, vector<32x64xf32>
    %cst_52 = arith.constant dense<0.000000e+00> : vector<8x64xf32>
    %96 = tpu.matmul %94, %95, %cst_52 {dimension_numbers = #tpu.dot_dimension_numbers<[1], [0], [0], [1], [0, 0, 1, 1], [], []>} : vector<8x32xf32>, vector<32x64xf32>, vector<8x64xf32> -> vector<8x64xf32>
    %97 = arith.addf %93, %96 : vector<8x64xf32>
    %98 = vector.extract_strided_slice %88 {offsets = [16, 0], sizes = [8, 32], strides = [1, 1]} : vector<128x32xf32> to vector<8x32xf32>
    %c448 = arith.constant 448 : index
    %c0_53 = arith.constant 0 : index
    %99 = vector.load %arg2[%c448, %c0_53] : memref<1536x64xf32, #tpu.memory_space<vmem>>, vector<32x64xf32>
    %cst_54 = arith.constant dense<0.000000e+00> : vector<8x64xf32>
    %100 = tpu.matmul %98, %99, %cst_54 {dimension_numbers = #tpu.dot_dimension_numbers<[1], [0], [0], [1], [0, 0, 1, 1], [], []>} : vector<8x32xf32>, vector<32x64xf32>, vector<8x64xf32> -> vector<8x64xf32>
    %101 = arith.addf %97, %100 : vector<8x64xf32>
    %102 = vector.extract_strided_slice %88 {offsets = [24, 0], sizes = [8, 32], strides = [1, 1]} : vector<128x32xf32> to vector<8x32xf32>
    %c480 = arith.constant 480 : index
    %c0_55 = arith.constant 0 : index
    %103 = vector.load %arg2[%c480, %c0_55] : memref<1536x64xf32, #tpu.memory_space<vmem>>, vector<32x64xf32>
    %cst_56 = arith.constant dense<0.000000e+00> : vector<8x64xf32>
    %104 = tpu.matmul %102, %103, %cst_56 {dimension_numbers = #tpu.dot_dimension_numbers<[1], [0], [0], [1], [0, 0, 1, 1], [], []>} : vector<8x32xf32>, vector<32x64xf32>, vector<8x64xf32> -> vector<8x64xf32>
    %105 = arith.addf %101, %104 : vector<8x64xf32>
    %106 = vector.extract_strided_slice %88 {offsets = [32, 0], sizes = [8, 32], strides = [1, 1]} : vector<128x32xf32> to vector<8x32xf32>
    %c512 = arith.constant 512 : index
    %c0_57 = arith.constant 0 : index
    %107 = vector.load %arg2[%c512, %c0_57] : memref<1536x64xf32, #tpu.memory_space<vmem>>, vector<32x64xf32>
    %cst_58 = arith.constant dense<0.000000e+00> : vector<8x64xf32>
    %108 = tpu.matmul %106, %107, %cst_58 {dimension_numbers = #tpu.dot_dimension_numbers<[1], [0], [0], [1], [0, 0, 1, 1], [], []>} : vector<8x32xf32>, vector<32x64xf32>, vector<8x64xf32> -> vector<8x64xf32>
    %109 = arith.addf %105, %108 : vector<8x64xf32>
    %110 = vector.extract_strided_slice %88 {offsets = [40, 0], sizes = [8, 32], strides = [1, 1]} : vector<128x32xf32> to vector<8x32xf32>
    %c544 = arith.constant 544 : index
    %c0_59 = arith.constant 0 : index
    %111 = vector.load %arg2[%c544, %c0_59] : memref<1536x64xf32, #tpu.memory_space<vmem>>, vector<32x64xf32>
    %cst_60 = arith.constant dense<0.000000e+00> : vector<8x64xf32>
    %112 = tpu.matmul %110, %111, %cst_60 {dimension_numbers = #tpu.dot_dimension_numbers<[1], [0], [0], [1], [0, 0, 1, 1], [], []>} : vector<8x32xf32>, vector<32x64xf32>, vector<8x64xf32> -> vector<8x64xf32>
    %113 = arith.addf %109, %112 : vector<8x64xf32>
    %114 = vector.extract_strided_slice %88 {offsets = [48, 0], sizes = [8, 32], strides = [1, 1]} : vector<128x32xf32> to vector<8x32xf32>
    %c576 = arith.constant 576 : index
    %c0_61 = arith.constant 0 : index
    %115 = vector.load %arg2[%c576, %c0_61] : memref<1536x64xf32, #tpu.memory_space<vmem>>, vector<32x64xf32>
    %cst_62 = arith.constant dense<0.000000e+00> : vector<8x64xf32>
    %116 = tpu.matmul %114, %115, %cst_62 {dimension_numbers = #tpu.dot_dimension_numbers<[1], [0], [0], [1], [0, 0, 1, 1], [], []>} : vector<8x32xf32>, vector<32x64xf32>, vector<8x64xf32> -> vector<8x64xf32>
    %117 = arith.addf %113, %116 : vector<8x64xf32>
    %118 = vector.extract_strided_slice %88 {offsets = [56, 0], sizes = [8, 32], strides = [1, 1]} : vector<128x32xf32> to vector<8x32xf32>
    %c608 = arith.constant 608 : index
    %c0_63 = arith.constant 0 : index
    %119 = vector.load %arg2[%c608, %c0_63] : memref<1536x64xf32, #tpu.memory_space<vmem>>, vector<32x64xf32>
    %cst_64 = arith.constant dense<0.000000e+00> : vector<8x64xf32>
    %120 = tpu.matmul %118, %119, %cst_64 {dimension_numbers = #tpu.dot_dimension_numbers<[1], [0], [0], [1], [0, 0, 1, 1], [], []>} : vector<8x32xf32>, vector<32x64xf32>, vector<8x64xf32> -> vector<8x64xf32>
    %121 = arith.addf %117, %120 : vector<8x64xf32>
    %122 = vector.extract_strided_slice %88 {offsets = [64, 0], sizes = [8, 32], strides = [1, 1]} : vector<128x32xf32> to vector<8x32xf32>
    %c640 = arith.constant 640 : index
    %c0_65 = arith.constant 0 : index
    %123 = vector.load %arg2[%c640, %c0_65] : memref<1536x64xf32, #tpu.memory_space<vmem>>, vector<32x64xf32>
    %cst_66 = arith.constant dense<0.000000e+00> : vector<8x64xf32>
    %124 = tpu.matmul %122, %123, %cst_66 {dimension_numbers = #tpu.dot_dimension_numbers<[1], [0], [0], [1], [0, 0, 1, 1], [], []>} : vector<8x32xf32>, vector<32x64xf32>, vector<8x64xf32> -> vector<8x64xf32>
    %125 = arith.addf %121, %124 : vector<8x64xf32>
    %126 = vector.extract_strided_slice %88 {offsets = [72, 0], sizes = [8, 32], strides = [1, 1]} : vector<128x32xf32> to vector<8x32xf32>
    %c672 = arith.constant 672 : index
    %c0_67 = arith.constant 0 : index
    %127 = vector.load %arg2[%c672, %c0_67] : memref<1536x64xf32, #tpu.memory_space<vmem>>, vector<32x64xf32>
    %cst_68 = arith.constant dense<0.000000e+00> : vector<8x64xf32>
    %128 = tpu.matmul %126, %127, %cst_68 {dimension_numbers = #tpu.dot_dimension_numbers<[1], [0], [0], [1], [0, 0, 1, 1], [], []>} : vector<8x32xf32>, vector<32x64xf32>, vector<8x64xf32> -> vector<8x64xf32>
    %129 = arith.addf %125, %128 : vector<8x64xf32>
    %130 = vector.extract_strided_slice %88 {offsets = [80, 0], sizes = [8, 32], strides = [1, 1]} : vector<128x32xf32> to vector<8x32xf32>
    %c704 = arith.constant 704 : index
    %c0_69 = arith.constant 0 : index
    %131 = vector.load %arg2[%c704, %c0_69] : memref<1536x64xf32, #tpu.memory_space<vmem>>, vector<32x64xf32>
    %cst_70 = arith.constant dense<0.000000e+00> : vector<8x64xf32>
    %132 = tpu.matmul %130, %131, %cst_70 {dimension_numbers = #tpu.dot_dimension_numbers<[1], [0], [0], [1], [0, 0, 1, 1], [], []>} : vector<8x32xf32>, vector<32x64xf32>, vector<8x64xf32> -> vector<8x64xf32>
    %133 = arith.addf %129, %132 : vector<8x64xf32>
    %134 = vector.extract_strided_slice %88 {offsets = [88, 0], sizes = [8, 32], strides = [1, 1]} : vector<128x32xf32> to vector<8x32xf32>
    %c736 = arith.constant 736 : index
    %c0_71 = arith.constant 0 : index
    %135 = vector.load %arg2[%c736, %c0_71] : memref<1536x64xf32, #tpu.memory_space<vmem>>, vector<32x64xf32>
    %cst_72 = arith.constant dense<0.000000e+00> : vector<8x64xf32>
    %136 = tpu.matmul %134, %135, %cst_72 {dimension_numbers = #tpu.dot_dimension_numbers<[1], [0], [0], [1], [0, 0, 1, 1], [], []>} : vector<8x32xf32>, vector<32x64xf32>, vector<8x64xf32> -> vector<8x64xf32>
    %137 = arith.addf %133, %136 : vector<8x64xf32>
    %138 = vector.extract_strided_slice %88 {offsets = [96, 0], sizes = [8, 32], strides = [1, 1]} : vector<128x32xf32> to vector<8x32xf32>
    %c768 = arith.constant 768 : index
    %c0_73 = arith.constant 0 : index
    %139 = vector.load %arg2[%c768, %c0_73] : memref<1536x64xf32, #tpu.memory_space<vmem>>, vector<32x64xf32>
    %cst_74 = arith.constant dense<0.000000e+00> : vector<8x64xf32>
    %140 = tpu.matmul %138, %139, %cst_74 {dimension_numbers = #tpu.dot_dimension_numbers<[1], [0], [0], [1], [0, 0, 1, 1], [], []>} : vector<8x32xf32>, vector<32x64xf32>, vector<8x64xf32> -> vector<8x64xf32>
    %141 = arith.addf %137, %140 : vector<8x64xf32>
    %142 = vector.extract_strided_slice %88 {offsets = [104, 0], sizes = [8, 32], strides = [1, 1]} : vector<128x32xf32> to vector<8x32xf32>
    %c800 = arith.constant 800 : index
    %c0_75 = arith.constant 0 : index
    %143 = vector.load %arg2[%c800, %c0_75] : memref<1536x64xf32, #tpu.memory_space<vmem>>, vector<32x64xf32>
    %cst_76 = arith.constant dense<0.000000e+00> : vector<8x64xf32>
    %144 = tpu.matmul %142, %143, %cst_76 {dimension_numbers = #tpu.dot_dimension_numbers<[1], [0], [0], [1], [0, 0, 1, 1], [], []>} : vector<8x32xf32>, vector<32x64xf32>, vector<8x64xf32> -> vector<8x64xf32>
    %145 = arith.addf %141, %144 : vector<8x64xf32>
    %146 = vector.extract_strided_slice %88 {offsets = [112, 0], sizes = [8, 32], strides = [1, 1]} : vector<128x32xf32> to vector<8x32xf32>
    %c832 = arith.constant 832 : index
    %c0_77 = arith.constant 0 : index
    %147 = vector.load %arg2[%c832, %c0_77] : memref<1536x64xf32, #tpu.memory_space<vmem>>, vector<32x64xf32>
    %cst_78 = arith.constant dense<0.000000e+00> : vector<8x64xf32>
    %148 = tpu.matmul %146, %147, %cst_78 {dimension_numbers = #tpu.dot_dimension_numbers<[1], [0], [0], [1], [0, 0, 1, 1], [], []>} : vector<8x32xf32>, vector<32x64xf32>, vector<8x64xf32> -> vector<8x64xf32>
    %149 = arith.addf %145, %148 : vector<8x64xf32>
    %150 = vector.extract_strided_slice %88 {offsets = [120, 0], sizes = [8, 32], strides = [1, 1]} : vector<128x32xf32> to vector<8x32xf32>
    %c864 = arith.constant 864 : index
    %c0_79 = arith.constant 0 : index
    %151 = vector.load %arg2[%c864, %c0_79] : memref<1536x64xf32, #tpu.memory_space<vmem>>, vector<32x64xf32>
    %cst_80 = arith.constant dense<0.000000e+00> : vector<8x64xf32>
    %152 = tpu.matmul %150, %151, %cst_80 {dimension_numbers = #tpu.dot_dimension_numbers<[1], [0], [0], [1], [0, 0, 1, 1], [], []>} : vector<8x32xf32>, vector<32x64xf32>, vector<8x64xf32> -> vector<8x64xf32>
    %153 = arith.addf %149, %152 : vector<8x64xf32>
    %c1040 = arith.constant 1040 : index
    %c0_81 = arith.constant 0 : index
    %154 = vector.load %arg3[%c1040, %c0_81] : memref<1064x128xf32, #tpu.memory_space<vmem>>, vector<1x64xf32>
    %155 = vector.broadcast %154 : vector<1x64xf32> to vector<8x64xf32>
    %156 = arith.addf %153, %155 : vector<8x64xf32>
    %cst_82 = arith.constant 0.000000e+00 : f32
    %157 = vector.broadcast %cst_82 : f32 to vector<8x64xf32>
    %158 = arith.cmpf ogt, %156, %157 : vector<8x64xf32>
    %cst_83 = arith.constant 2.000000e-01 : f32
    %159 = vector.broadcast %cst_83 : f32 to vector<8x64xf32>
    %160 = arith.mulf %159, %156 : vector<8x64xf32>
    %161 = arith.select %158, %156, %160 : vector<8x64xi1>, vector<8x64xf32>
    %162 = vector.extract_strided_slice %161 {offsets = [0, 0], sizes = [4, 64], strides = [1, 1]} : vector<8x64xf32> to vector<4x64xf32>
    %c1408 = arith.constant 1408 : index
    %c0_84 = arith.constant 0 : index
    %163 = vector.load %arg2[%c1408, %c0_84] : memref<1536x64xf32, #tpu.memory_space<vmem>>, vector<128x4xf32>
    %cst_85 = arith.constant dense<0.000000e+00> : vector<128x64xf32>
    %164 = tpu.matmul %163, %162, %cst_85 {dimension_numbers = #tpu.dot_dimension_numbers<[1], [0], [0], [1], [0, 0, 1, 1], [], []>} : vector<128x4xf32>, vector<4x64xf32>, vector<128x64xf32> -> vector<128x64xf32>
    %cst_86 = arith.constant 0.000000e+00 : f32
    %165 = vector.broadcast %cst_86 : f32 to vector<8x128xf32>
    %166 = vector.extract_strided_slice %164 {offsets = [0, 0], sizes = [8, 64], strides = [1, 1]} : vector<128x64xf32> to vector<8x64xf32>
    %c0_87 = arith.constant 0 : index
    %c0_88 = arith.constant 0 : index
    %167 = vector.load %arg3[%c0_87, %c0_88] : memref<1064x128xf32, #tpu.memory_space<vmem>>, vector<64x128xf32>
    %cst_89 = arith.constant dense<0.000000e+00> : vector<8x128xf32>
    %168 = tpu.matmul %166, %167, %cst_89 {dimension_numbers = #tpu.dot_dimension_numbers<[1], [0], [0], [1], [0, 0, 1, 1], [], []>} : vector<8x64xf32>, vector<64x128xf32>, vector<8x128xf32> -> vector<8x128xf32>
    %169 = arith.addf %165, %168 : vector<8x128xf32>
    %170 = vector.extract_strided_slice %164 {offsets = [8, 0], sizes = [8, 64], strides = [1, 1]} : vector<128x64xf32> to vector<8x64xf32>
    %c64 = arith.constant 64 : index
    %c0_90 = arith.constant 0 : index
    %171 = vector.load %arg3[%c64, %c0_90] : memref<1064x128xf32, #tpu.memory_space<vmem>>, vector<64x128xf32>
    %cst_91 = arith.constant dense<0.000000e+00> : vector<8x128xf32>
    %172 = tpu.matmul %170, %171, %cst_91 {dimension_numbers = #tpu.dot_dimension_numbers<[1], [0], [0], [1], [0, 0, 1, 1], [], []>} : vector<8x64xf32>, vector<64x128xf32>, vector<8x128xf32> -> vector<8x128xf32>
    %173 = arith.addf %169, %172 : vector<8x128xf32>
    %174 = vector.extract_strided_slice %164 {offsets = [16, 0], sizes = [8, 64], strides = [1, 1]} : vector<128x64xf32> to vector<8x64xf32>
    %c128_92 = arith.constant 128 : index
    %c0_93 = arith.constant 0 : index
    %175 = vector.load %arg3[%c128_92, %c0_93] : memref<1064x128xf32, #tpu.memory_space<vmem>>, vector<64x128xf32>
    %cst_94 = arith.constant dense<0.000000e+00> : vector<8x128xf32>
    %176 = tpu.matmul %174, %175, %cst_94 {dimension_numbers = #tpu.dot_dimension_numbers<[1], [0], [0], [1], [0, 0, 1, 1], [], []>} : vector<8x64xf32>, vector<64x128xf32>, vector<8x128xf32> -> vector<8x128xf32>
    %177 = arith.addf %173, %176 : vector<8x128xf32>
    %178 = vector.extract_strided_slice %164 {offsets = [24, 0], sizes = [8, 64], strides = [1, 1]} : vector<128x64xf32> to vector<8x64xf32>
    %c192_95 = arith.constant 192 : index
    %c0_96 = arith.constant 0 : index
    %179 = vector.load %arg3[%c192_95, %c0_96] : memref<1064x128xf32, #tpu.memory_space<vmem>>, vector<64x128xf32>
    %cst_97 = arith.constant dense<0.000000e+00> : vector<8x128xf32>
    %180 = tpu.matmul %178, %179, %cst_97 {dimension_numbers = #tpu.dot_dimension_numbers<[1], [0], [0], [1], [0, 0, 1, 1], [], []>} : vector<8x64xf32>, vector<64x128xf32>, vector<8x128xf32> -> vector<8x128xf32>
    %181 = arith.addf %177, %180 : vector<8x128xf32>
    %182 = vector.extract_strided_slice %164 {offsets = [32, 0], sizes = [8, 64], strides = [1, 1]} : vector<128x64xf32> to vector<8x64xf32>
    %c256_98 = arith.constant 256 : index
    %c0_99 = arith.constant 0 : index
    %183 = vector.load %arg3[%c256_98, %c0_99] : memref<1064x128xf32, #tpu.memory_space<vmem>>, vector<64x128xf32>
    %cst_100 = arith.constant dense<0.000000e+00> : vector<8x128xf32>
    %184 = tpu.matmul %182, %183, %cst_100 {dimension_numbers = #tpu.dot_dimension_numbers<[1], [0], [0], [1], [0, 0, 1, 1], [], []>} : vector<8x64xf32>, vector<64x128xf32>, vector<8x128xf32> -> vector<8x128xf32>
    %185 = arith.addf %181, %184 : vector<8x128xf32>
    %186 = vector.extract_strided_slice %164 {offsets = [40, 0], sizes = [8, 64], strides = [1, 1]} : vector<128x64xf32> to vector<8x64xf32>
    %c320_101 = arith.constant 320 : index
    %c0_102 = arith.constant 0 : index
    %187 = vector.load %arg3[%c320_101, %c0_102] : memref<1064x128xf32, #tpu.memory_space<vmem>>, vector<64x128xf32>
    %cst_103 = arith.constant dense<0.000000e+00> : vector<8x128xf32>
    %188 = tpu.matmul %186, %187, %cst_103 {dimension_numbers = #tpu.dot_dimension_numbers<[1], [0], [0], [1], [0, 0, 1, 1], [], []>} : vector<8x64xf32>, vector<64x128xf32>, vector<8x128xf32> -> vector<8x128xf32>
    %189 = arith.addf %185, %188 : vector<8x128xf32>
    %190 = vector.extract_strided_slice %164 {offsets = [48, 0], sizes = [8, 64], strides = [1, 1]} : vector<128x64xf32> to vector<8x64xf32>
    %c384_104 = arith.constant 384 : index
    %c0_105 = arith.constant 0 : index
    %191 = vector.load %arg3[%c384_104, %c0_105] : memref<1064x128xf32, #tpu.memory_space<vmem>>, vector<64x128xf32>
    %cst_106 = arith.constant dense<0.000000e+00> : vector<8x128xf32>
    %192 = tpu.matmul %190, %191, %cst_106 {dimension_numbers = #tpu.dot_dimension_numbers<[1], [0], [0], [1], [0, 0, 1, 1], [], []>} : vector<8x64xf32>, vector<64x128xf32>, vector<8x128xf32> -> vector<8x128xf32>
    %193 = arith.addf %189, %192 : vector<8x128xf32>
    %194 = vector.extract_strided_slice %164 {offsets = [56, 0], sizes = [8, 64], strides = [1, 1]} : vector<128x64xf32> to vector<8x64xf32>
    %c448_107 = arith.constant 448 : index
    %c0_108 = arith.constant 0 : index
    %195 = vector.load %arg3[%c448_107, %c0_108] : memref<1064x128xf32, #tpu.memory_space<vmem>>, vector<64x128xf32>
    %cst_109 = arith.constant dense<0.000000e+00> : vector<8x128xf32>
    %196 = tpu.matmul %194, %195, %cst_109 {dimension_numbers = #tpu.dot_dimension_numbers<[1], [0], [0], [1], [0, 0, 1, 1], [], []>} : vector<8x64xf32>, vector<64x128xf32>, vector<8x128xf32> -> vector<8x128xf32>
    %197 = arith.addf %193, %196 : vector<8x128xf32>
    %198 = vector.extract_strided_slice %164 {offsets = [64, 0], sizes = [8, 64], strides = [1, 1]} : vector<128x64xf32> to vector<8x64xf32>
    %c512_110 = arith.constant 512 : index
    %c0_111 = arith.constant 0 : index
    %199 = vector.load %arg3[%c512_110, %c0_111] : memref<1064x128xf32, #tpu.memory_space<vmem>>, vector<64x128xf32>
    %cst_112 = arith.constant dense<0.000000e+00> : vector<8x128xf32>
    %200 = tpu.matmul %198, %199, %cst_112 {dimension_numbers = #tpu.dot_dimension_numbers<[1], [0], [0], [1], [0, 0, 1, 1], [], []>} : vector<8x64xf32>, vector<64x128xf32>, vector<8x128xf32> -> vector<8x128xf32>
    %201 = arith.addf %197, %200 : vector<8x128xf32>
    %202 = vector.extract_strided_slice %164 {offsets = [72, 0], sizes = [8, 64], strides = [1, 1]} : vector<128x64xf32> to vector<8x64xf32>
    %c576_113 = arith.constant 576 : index
    %c0_114 = arith.constant 0 : index
    %203 = vector.load %arg3[%c576_113, %c0_114] : memref<1064x128xf32, #tpu.memory_space<vmem>>, vector<64x128xf32>
    %cst_115 = arith.constant dense<0.000000e+00> : vector<8x128xf32>
    %204 = tpu.matmul %202, %203, %cst_115 {dimension_numbers = #tpu.dot_dimension_numbers<[1], [0], [0], [1], [0, 0, 1, 1], [], []>} : vector<8x64xf32>, vector<64x128xf32>, vector<8x128xf32> -> vector<8x128xf32>
    %205 = arith.addf %201, %204 : vector<8x128xf32>
    %206 = vector.extract_strided_slice %164 {offsets = [80, 0], sizes = [8, 64], strides = [1, 1]} : vector<128x64xf32> to vector<8x64xf32>
    %c640_116 = arith.constant 640 : index
    %c0_117 = arith.constant 0 : index
    %207 = vector.load %arg3[%c640_116, %c0_117] : memref<1064x128xf32, #tpu.memory_space<vmem>>, vector<64x128xf32>
    %cst_118 = arith.constant dense<0.000000e+00> : vector<8x128xf32>
    %208 = tpu.matmul %206, %207, %cst_118 {dimension_numbers = #tpu.dot_dimension_numbers<[1], [0], [0], [1], [0, 0, 1, 1], [], []>} : vector<8x64xf32>, vector<64x128xf32>, vector<8x128xf32> -> vector<8x128xf32>
    %209 = arith.addf %205, %208 : vector<8x128xf32>
    %210 = vector.extract_strided_slice %164 {offsets = [88, 0], sizes = [8, 64], strides = [1, 1]} : vector<128x64xf32> to vector<8x64xf32>
    %c704_119 = arith.constant 704 : index
    %c0_120 = arith.constant 0 : index
    %211 = vector.load %arg3[%c704_119, %c0_120] : memref<1064x128xf32, #tpu.memory_space<vmem>>, vector<64x128xf32>
    %cst_121 = arith.constant dense<0.000000e+00> : vector<8x128xf32>
    %212 = tpu.matmul %210, %211, %cst_121 {dimension_numbers = #tpu.dot_dimension_numbers<[1], [0], [0], [1], [0, 0, 1, 1], [], []>} : vector<8x64xf32>, vector<64x128xf32>, vector<8x128xf32> -> vector<8x128xf32>
    %213 = arith.addf %209, %212 : vector<8x128xf32>
    %214 = vector.extract_strided_slice %164 {offsets = [96, 0], sizes = [8, 64], strides = [1, 1]} : vector<128x64xf32> to vector<8x64xf32>
    %c768_122 = arith.constant 768 : index
    %c0_123 = arith.constant 0 : index
    %215 = vector.load %arg3[%c768_122, %c0_123] : memref<1064x128xf32, #tpu.memory_space<vmem>>, vector<64x128xf32>
    %cst_124 = arith.constant dense<0.000000e+00> : vector<8x128xf32>
    %216 = tpu.matmul %214, %215, %cst_124 {dimension_numbers = #tpu.dot_dimension_numbers<[1], [0], [0], [1], [0, 0, 1, 1], [], []>} : vector<8x64xf32>, vector<64x128xf32>, vector<8x128xf32> -> vector<8x128xf32>
    %217 = arith.addf %213, %216 : vector<8x128xf32>
    %218 = vector.extract_strided_slice %164 {offsets = [104, 0], sizes = [8, 64], strides = [1, 1]} : vector<128x64xf32> to vector<8x64xf32>
    %c832_125 = arith.constant 832 : index
    %c0_126 = arith.constant 0 : index
    %219 = vector.load %arg3[%c832_125, %c0_126] : memref<1064x128xf32, #tpu.memory_space<vmem>>, vector<64x128xf32>
    %cst_127 = arith.constant dense<0.000000e+00> : vector<8x128xf32>
    %220 = tpu.matmul %218, %219, %cst_127 {dimension_numbers = #tpu.dot_dimension_numbers<[1], [0], [0], [1], [0, 0, 1, 1], [], []>} : vector<8x64xf32>, vector<64x128xf32>, vector<8x128xf32> -> vector<8x128xf32>
    %221 = arith.addf %217, %220 : vector<8x128xf32>
    %222 = vector.extract_strided_slice %164 {offsets = [112, 0], sizes = [8, 64], strides = [1, 1]} : vector<128x64xf32> to vector<8x64xf32>
    %c896 = arith.constant 896 : index
    %c0_128 = arith.constant 0 : index
    %223 = vector.load %arg3[%c896, %c0_128] : memref<1064x128xf32, #tpu.memory_space<vmem>>, vector<64x128xf32>
    %cst_129 = arith.constant dense<0.000000e+00> : vector<8x128xf32>
    %224 = tpu.matmul %222, %223, %cst_129 {dimension_numbers = #tpu.dot_dimension_numbers<[1], [0], [0], [1], [0, 0, 1, 1], [], []>} : vector<8x64xf32>, vector<64x128xf32>, vector<8x128xf32> -> vector<8x128xf32>
    %225 = arith.addf %221, %224 : vector<8x128xf32>
    %226 = vector.extract_strided_slice %164 {offsets = [120, 0], sizes = [8, 64], strides = [1, 1]} : vector<128x64xf32> to vector<8x64xf32>
    %c960 = arith.constant 960 : index
    %c0_130 = arith.constant 0 : index
    %227 = vector.load %arg3[%c960, %c0_130] : memref<1064x128xf32, #tpu.memory_space<vmem>>, vector<64x128xf32>
    %cst_131 = arith.constant dense<0.000000e+00> : vector<8x128xf32>
    %228 = tpu.matmul %226, %227, %cst_131 {dimension_numbers = #tpu.dot_dimension_numbers<[1], [0], [0], [1], [0, 0, 1, 1], [], []>} : vector<8x64xf32>, vector<64x128xf32>, vector<8x128xf32> -> vector<8x128xf32>
    %229 = arith.addf %225, %228 : vector<8x128xf32>
    %c1048 = arith.constant 1048 : index
    %c0_132 = arith.constant 0 : index
    %230 = vector.load %arg3[%c1048, %c0_132] : memref<1064x128xf32, #tpu.memory_space<vmem>>, vector<1x128xf32>
    %231 = vector.broadcast %230 : vector<1x128xf32> to vector<8x128xf32>
    %232 = arith.addf %229, %231 : vector<8x128xf32>
    %cst_133 = arith.constant 0.000000e+00 : f32
    %233 = vector.broadcast %cst_133 : f32 to vector<8x128xf32>
    %234 = arith.cmpf ogt, %232, %233 : vector<8x128xf32>
    %cst_134 = arith.constant 2.000000e-01 : f32
    %235 = vector.broadcast %cst_134 : f32 to vector<8x128xf32>
    %236 = arith.mulf %235, %232 : vector<8x128xf32>
    %237 = arith.select %234, %232, %236 : vector<8x128xi1>, vector<8x128xf32>
    %238 = vector.extract_strided_slice %237 {offsets = [0, 0], sizes = [1, 128], strides = [1, 1]} : vector<8x128xf32> to vector<1x128xf32>
    %c896_135 = arith.constant 896 : index
    %c0_136 = arith.constant 0 : index
    %239 = vector.load %arg2[%c896_135, %c0_136] : memref<1536x64xf32, #tpu.memory_space<vmem>>, vector<128x32xf32>
    %cst_137 = arith.constant dense<0.000000e+00> : vector<1x32xf32>
    %240 = tpu.matmul %238, %239, %cst_137 {dimension_numbers = #tpu.dot_dimension_numbers<[1], [0], [0], [1], [0, 0, 1, 1], [], []>} : vector<1x128xf32>, vector<128x32xf32>, vector<1x32xf32> -> vector<1x32xf32>
    %c1056 = arith.constant 1056 : index
    %c0_138 = arith.constant 0 : index
    %241 = vector.load %arg3[%c1056, %c0_138] : memref<1064x128xf32, #tpu.memory_space<vmem>>, vector<1x32xf32>
    %242 = arith.addf %240, %241 : vector<1x32xf32>
    %c0_139 = arith.constant 0 : index
    %c0_140 = arith.constant 0 : index
    %c0_141 = arith.constant 0 : index
    %243 = vector.load %arg4[%c0_139, %c0_140, %c0_141] : memref<1x1x32xf32, #tpu.memory_space<vmem>>, vector<1x1x32xf32>
    %244 = vector.shape_cast %243 : vector<1x1x32xf32> to vector<1x32xf32>
    %245 = vector.shape_cast %242 : vector<1x32xf32> to vector<1x1x32xf32>
    tpu.vector_store %arg4[%c0_139, %c0_140, %c0_141], %245 {strides = array<i32>} : memref<1x1x32xf32, #tpu.memory_space<vmem>>, vector<1x1x32xf32>,
    return
  }
  func.func @transform_0(%arg0: i32) -> (i32, i32, i32) {
    %c0_i32 = arith.constant 0 : i32
    %c0_i32_0 = arith.constant 0 : i32
    %c0_i32_1 = arith.constant 0 : i32
    return %arg0, %c0_i32, %c0_i32_0 : i32, i32, i32
  }
  func.func @transform_1(%arg0: i32) -> (i32, i32) {
    %c0_i32 = arith.constant 0 : i32
    %c0_i32_0 = arith.constant 0 : i32
    %c0_i32_1 = arith.constant 0 : i32
    return %c0_i32, %c0_i32_0 : i32, i32
  }
  func.func @transform_2(%arg0: i32) -> (i32, i32) {
    %c0_i32 = arith.constant 0 : i32
    %c0_i32_0 = arith.constant 0 : i32
    %c0_i32_1 = arith.constant 0 : i32
    return %c0_i32, %c0_i32_0 : i32, i32
  }
  func.func @transform_3(%arg0: i32) -> (i32, i32, i32) {
    %c0_i32 = arith.constant 0 : i32
    %c0_i32_0 = arith.constant 0 : i32
    %c0_i32_1 = arith.constant 0 : i32
    return %arg0, %c0_i32, %c0_i32_0 : i32, i32, i32
  }
}

</mosaic_0001>

<llo_original>
// kernel: vae_encoder_forward.1
$region0: #{vae_encoder_forward.1}
  #allocation0 [shape = 'u32[]', space=smem, size = 0x4, offset = 0x4, fixed_abs, tag = 'smem constant byte address 0x4 - core index']
  #allocation1 [shape = 'u32[144,128]{1,0:T(1,128)}', space=vmem, size = 0x12000, scoped, tag = 'internal scratch']
  %s0 = inlined_call_operand.vmem [shape: f32[2,64,128], index: 0, kind: input, shape index: {}]
  %s1 = inlined_call_operand.vmem [shape: f32[1536,64], index: 1, kind: input, shape index: {}]
  %s2 = inlined_call_operand.vmem [shape: f32[1064,128], index: 2, kind: input, shape index: {}]
  %s3 = inlined_call_operand.hbm [shape: f32[2,1,32], index: 3, kind: output, shape index: {}]
  %s4 = sld [smem:[#allocation0]]
  $region45: #{vae_encoder_forward.1} parent=0
    _
  %s6 = ssub.s32 1, %s4
  %s7 = scalar_select 0, %s6, %s4
  $region1: #{vae_encoder_forward.1} parent=0
    #allocation2 [shape = 'u8[1024]{0}', space=vmem, size = 0x400, scoped, tag = 'output window, operand 0']
    #allocation3 [shape = 's32[2]{0}', space=sflag, size = 0x8, scoped, tag = 'scoped memory for vae_encoder_forward.1']
    %8 = vsyncpa [#allocation3], 0
    %s9 = scalar_lea.sflag [#allocation3], 1
    %10 = vsyncpa %s9, 0
    loop: start=0, step=1, limit=4
    $region2: #{vae_encoder_forward.1} parent=1 // loop_pre_header
      _
    $region3: #{vae_encoder_forward.1} parent=1 // loop_header
      %s12 = sphi 0, %s16
      %p13 = scmp.ge.s32.totalorder %s12, 4
      %s22 = sphi 0, %s24
      %s25 = sphi 0, %s22
      %s26 = sphi 0, %s25
      %s42 = sphi 0, %s26
      %s46 = sphi 0, %s46
      %s48 = sphi 0, %s46
      %s49 = sphi 0, %s48
      %s63 = sphi 0, %s49
      %s67 = sphi 0, %s67
      %s69 = sphi 0, %s67
      %s70 = sphi 0, %s69
      %s84 = sphi 0, %s70
      %s90 = sphi 0, %s92
      %s93 = sphi 0, %s90
      %s94 = sphi 0, %s93
      %s110 = sphi 0, %s94
    $region4: #{vae_encoder_forward.1} parent=1 // loop_header_branch
      %15 = sbr.rel (%p13) target = $region8
    $region5: #{vae_encoder_forward.1} parent=1 // loop_body
      %s17 = ssub.s32 %s12, 1
      %s18 = ssub.s32 %s12, 2
      %s19 = sadd.s32 %s12, 1
      %s20 = ssub.s32 %s12, %s19
      %p21 = scmp.eq.s32.totalorder %s20, 0
      %s23 = sadd.s32 %s22, 1
      %s24 = scalar_select %p21, %s22, %s23
      %p27 = pneg %p21
      %p28 = scmp.eq.s32.totalorder %s12, 1
      %p29 = por %p27, %p28
      %p30 = scmp.ne.s32.totalorder %s22, %s25
      %p31 = scmp.eq.s32.totalorder %s12, 0
      %p32 = por %p30, %p31
      %p33 = scmp.ne.s32.totalorder %s22, %s25
      %p34 = scmp.eq.s32.totalorder %s17, 1
      %p35 = por %p33, %p34
      %p36 = scmp.ne.s32.totalorder %s25, %s26
      %p37 = scmp.eq.s32.totalorder %s17, 0
      %p38 = por %p36, %p37
      %p39 = scmp.ne.s32.totalorder %s25, %s26
      %p40 = scmp.eq.s32.totalorder %s18, 1
      %p41 = por %p39, %p40
      %p43 = scmp.ne.s32.totalorder %s26, %s42
      %p44 = scmp.eq.s32.totalorder %s18, 0
      %p45 = por %p43, %p44
      %s47 = sadd.s32 %s46, 1
      %p50 = scmp.eq.s32.totalorder %s12, 1
      %p51 = scmp.ne.s32.totalorder %s46, %s48
      %p52 = scmp.eq.s32.totalorder %s12, 0
      %p53 = por %p51, %p52
      %p54 = scmp.ne.s32.totalorder %s46, %s48
      %p55 = scmp.eq.s32.totalorder %s17, 1
      %p56 = por %p54, %p55
      %p57 = scmp.ne.s32.totalorder %s48, %s49
      %p58 = scmp.eq.s32.totalorder %s17, 0
      %p59 = por %p57, %p58
      %p60 = scmp.ne.s32.totalorder %s48, %s49
      %p61 = scmp.eq.s32.totalorder %s18, 1
      %p62 = por %p60, %p61
      %p64 = scmp.ne.s32.totalorder %s49, %s63
      %p65 = scmp.eq.s32.totalorder %s18, 0
      %p66 = por %p64, %p65
      %s68 = sadd.s32 %s67, 1
      %p71 = scmp.eq.s32.totalorder %s12, 1
      %p72 = scmp.ne.s32.totalorder %s67, %s69
      %p73 = scmp.eq.s32.totalorder %s12, 0
      %p74 = por %p72, %p73
      %p75 = scmp.ne.s32.totalorder %s67, %s69
      %p76 = scmp.eq.s32.totalorder %s17, 1
      %p77 = por %p75, %p76
      %p78 = scmp.ne.s32.totalorder %s69, %s70
      %p79 = scmp.eq.s32.totalorder %s17, 0
      %p80 = por %p78, %p79
      %p81 = scmp.ne.s32.totalorder %s69, %s70
      %p82 = scmp.eq.s32.totalorder %s18, 1
      %p83 = por %p81, %p82
      %p85 = scmp.ne.s32.totalorder %s70, %s84
      %p86 = scmp.eq.s32.totalorder %s18, 0
      %p87 = por %p85, %p86
      %s88 = ssub.s32 %s12, %s19
      %p89 = scmp.eq.s32.totalorder %s88, 0
      %s91 = sadd.s32 %s90, 1
      %s92 = scalar_select %p89, %s90, %s91
      %p95 = pneg %p89
      %p96 = scmp.eq.s32.totalorder %s12, 1
      %p97 = por %p95, %p96
      %p98 = scmp.ne.s32.totalorder %s90, %s93
      %p99 = scmp.eq.s32.totalorder %s12, 0
      %p100 = por %p98, %p99
      %p101 = scmp.ne.s32.totalorder %s90, %s93
      %p102 = scmp.eq.s32.totalorder %s17, 1
      %p103 = por %p101, %p102
      %p104 = scmp.ne.s32.totalorder %s93, %s94
      %p105 = scmp.eq.s32.totalorder %s17, 0
      %p106 = por %p104, %p105
      %p107 = scmp.ne.s32.totalorder %s93, %s94
      %p108 = scmp.eq.s32.totalorder %s18, 1
      %p109 = por %p107, %p108
      %p111 = scmp.ne.s32.totalorder %s94, %s110
      %p112 = scmp.eq.s32.totalorder %s18, 0
      %p113 = por %p111, %p112
      %p114 = scmp.le.s32.totalorder 1, %s12
      %p115 = scmp.lt.s32.totalorder %s12, 3
      %p116 = pnand %p114, %p115
      %p117 = pneg %p116
      // Predicated region
      $region9: #{vae_encoder_forward.1} parent=5 // pred_check
        _
      $region10: #{vae_encoder_forward.1} parent=5 // pred_check_branch
        %119 = sbr.rel (%p116) target = $region12
      $region11: #{vae_encoder_forward.1} parent=5 // pred_region
        %s120 = ssub.s32 %s12, 1
        // Predicated region
        $region13: #{vae_encoder_forward.1} parent=11 // pred_check
          %p121 = pneg %p59
        $region14: #{vae_encoder_forward.1} parent=11 // pred_check_branch
          %123 = sbr.rel (%p121) target = $region16
        $region15: #{vae_encoder_forward.1} parent=11 // pred_region
          _
        $region16: #{vae_encoder_forward.1} parent=11 // pred_fallthru
          _
        // Predicated region
        $region17: #{vae_encoder_forward.1} parent=11 // pred_check
          %p124 = pneg %p80
        $region18: #{vae_encoder_forward.1} parent=11 // pred_check_branch
          %126 = sbr.rel (%p124) target = $region20
        $region19: #{vae_encoder_forward.1} parent=11 // pred_region
          _
        $region20: #{vae_encoder_forward.1} parent=11 // pred_fallthru
          _
      $region12: #{vae_encoder_forward.1} parent=5 // pred_fallthru
        _
      %p127 = scmp.lt.s32.totalorder %s12, 2
      // Predicated region
      $region21: #{vae_encoder_forward.1} parent=5 // pred_check
        %p128 = pneg %p127
      $region22: #{vae_encoder_forward.1} parent=5 // pred_check_branch
        %130 = sbr.rel (%p128) target = $region24
      $region23: #{vae_encoder_forward.1} parent=5 // pred_region
        // Predicated region
        $region25: #{vae_encoder_forward.1} parent=23 // pred_check
          %p131 = pneg %p32
        $region26: #{vae_encoder_forward.1} parent=23 // pred_check_branch
          %133 = sbr.rel (%p131) target = $region28
        $region27: #{vae_encoder_forward.1} parent=23 // pred_region
          %p134 = scmp.lt.s32.totalorder %s12, 1
          %s135 = scalar_select %p134, %s12, 1
          %s136 = smul.addr %s135, 8
          %s137 = smul.addr %s136, 8
          %s138 = scalar_lea.vmem %s0, %s137
        $region28: #{vae_encoder_forward.1} parent=23 // pred_fallthru
          _
      $region24: #{vae_encoder_forward.1} parent=5 // pred_fallthru
        _
      %p139 = scmp.le.s32.totalorder 1, %s12
      %p140 = scmp.lt.s32.totalorder %s12, 3
      %p141 = pnand %p139, %p140
      %p142 = pneg %p141
      // Predicated region
      $region29: #{vae_encoder_forward.1} parent=5 // pred_check
        _
      $region30: #{vae_encoder_forward.1} parent=5 // pred_check_branch
        %144 = sbr.rel (%p141) target = $region32
      $region31: #{vae_encoder_forward.1} parent=5 // pred_region
        %s145 = ssub.s32 %s12, 1
        %p146 = scmp.lt.s32.totalorder %s17, 1
        %s147 = scalar_select %p146, %s17, 1
        %s148 = smul.addr %s147, 8
        %s149 = smul.addr %s148, 8
        %s150 = scalar_lea.vmem %s0, %s149
        %p151 = pneg %p38
        %p152 = pneg %p35
        %p153 = pneg %p59
        %p154 = pneg %p56
        %p155 = pneg %p80
        %p156 = pneg %p77
        %p157 = pneg %p106
        %p158 = pneg %p103
        %s159 = sand.u32 %s93, 1
        %s160 = scalar_lea.sflag [#allocation3], %s159
        %s161 = sand.u32 %s93, 1
        %s162 = scalar_lea.vmem [#allocation2], %s161
        %p163 = scmp.lt.s32.totalorder %s17, 1
        %s164 = scalar_select %p163, %s17, 1
        %s165 = smul.addr %s164, 8
        %s166 = smul.addr %s165, 8
        %s167 = scalar_lea.vmem %s0, %s166
        %v168 = vld [vmem:[%s167] sm:$0xff]
        %v169 = vld [vmem:[%s167 + $0x8] sm:$0xff]
        %v170 = vld [vmem:[%s167 + $0x10] sm:$0xff]
        %v171 = vld [vmem:[%s167 + $0x18] sm:$0xff]
        %v172 = vld [vmem:[%s167 + $0x20] sm:$0xff]
        %v173 = vld [vmem:[%s167 + $0x28] sm:$0xff]
        %v174 = vld [vmem:[%s167 + $0x30] sm:$0xff]
        %v175 = vld [vmem:[%s167 + $0x38] sm:$0xff]
        %v176 = vld [vmem:[%s1] sm:$0xff]
        %v177 = vld [vmem:[%s1 + $0x8] sm:$0xff]
        %v178 = vld [vmem:[%s1 + $0x10] sm:$0xff]
        %v179 = vld [vmem:[%s1 + $0x18] sm:$0xff]
        %v180 = vld [vmem:[%s1 + $0x20] sm:$0xff]
        %v181 = vld [vmem:[%s1 + $0x28] sm:$0xff]
        %v182 = vld [vmem:[%s1 + $0x30] sm:$0xff]
        %v183 = vld [vmem:[%s1 + $0x38] sm:$0xff]
        %v184 = vld [vmem:[%s1 + $0x40] sm:$0xff]
        %v185 = vld [vmem:[%s1 + $0x48] sm:$0xff]
        %v186 = vld [vmem:[%s1 + $0x50] sm:$0xff]
        %v187 = vld [vmem:[%s1 + $0x58] sm:$0xff]
        %v188 = vld [vmem:[%s1 + $0x60] sm:$0xff]
        %v189 = vld [vmem:[%s1 + $0x68] sm:$0xff]
        %v190 = vld [vmem:[%s1 + $0x70] sm:$0xff]
        %v191 = vld [vmem:[%s1 + $0x78] sm:$0xff]
        %v192 = vld [vmem:[%s2 + $0x400] sm:$0x1]
        %v193 = vlaneseq
        %v194 = vshrl.u32 %v193, 7
        %v195 = vsub.s32 0, %v194
        %v196 = vrot.slane %v192, %v195
        %197 = vmatprep.subr.mxu0 0.0
        %198 = vmatpush1.msra.mxu0 %v191
        %199 = vmatprep.subr.mxu0 0.0
        %200 = vmatpush1.msra.mxu0 %v190
        %201 = vmatprep.subr.mxu0 0.0
        %202 = vmatpush1.msra.mxu0 %v189
        %203 = vmatprep.subr.mxu0 0.0
        %204 = vmatpush1.msra.mxu0 %v188
        %205 = vmatprep.subr.mxu0 0.0
        %206 = vmatpush1.msra.mxu0 %v187
        %207 = vmatprep.subr.mxu0 0.0
        %208 = vmatpush1.msra.mxu0 %v186
        %209 = vmatprep.subr.mxu0 0.0
        %210 = vmatpush1.msra.mxu0 %v185
        %211 = vmatprep.subr.mxu0 0.0
        %212 = vmatpush1.msra.mxu0 %v184
        %213 = vmatprep.subr.mxu0 0.0
        %214 = vmatpush1.msra.mxu0 %v183
        %215 = vmatprep.subr.mxu0 0.0
        %216 = vmatpush1.msra.mxu0 %v182
        %217 = vmatprep.subr.mxu0 0.0
        %218 = vmatpush1.msra.mxu0 %v181
        %219 = vmatprep.subr.mxu0 0.0
        %220 = vmatpush1.msra.mxu0 %v180
        %221 = vmatprep.subr.mxu0 0.0
        %222 = vmatpush1.msra.mxu0 %v179
        %223 = vmatprep.subr.mxu0 0.0
        %224 = vmatpush1.msra.mxu0 %v178
        %225 = vmatprep.subr.mxu0 0.0
        %226 = vmatpush1.msra.mxu0 %v177
        %227 = vmatprep.subr.mxu0 0.0
        %228 = vmatpush1.msra.mxu0 %v176
        %229 = vmatprep.subr.mxu0 0.0
        %230 = vmatpush2.msra.mxu0 0.0
        %231 = vmatprep.subr.mxu0 0.0
        %232 = vmatpush2.msra.mxu0 0.0
        %233 = vmatprep.subr.mxu0 0.0
        %234 = vmatpush2.msra.mxu0 0.0
        %235 = vmatprep.subr.mxu0 0.0
        %236 = vmatpush2.msra.mxu0 0.0
        %237 = vmatprep.subr.mxu0 0.0
        %238 = vmatpush2.msra.mxu0 0.0
        %239 = vmatprep.subr.mxu0 0.0
        %240 = vmatpush2.msra.mxu0 0.0
        %241 = vmatprep.subr.mxu0 0.0
        %242 = vmatpush2.msra.mxu0 0.0
        %243 = vmatprep.subr.mxu0 0.0
        %244 = vmatpush2.msra.mxu0 0.0
        %245 = vmatprep.subr.mxu0 0.0
        %246 = vmatpush2.msra.mxu0 0.0
        %247 = vmatprep.subr.mxu0 0.0
        %248 = vmatpush2.msra.mxu0 0.0
        %249 = vmatprep.subr.mxu0 0.0
        %250 = vmatpush2.msra.mxu0 0.0
        %251 = vmatprep.subr.mxu0 0.0
        %252 = vmatpush2.msra.mxu0 0.0
        %253 = vmatprep.subr.mxu0 0.0
        %254 = vmatpush2.msra.mxu0 0.0
        %255 = vmatprep.subr.mxu0 0.0
        %256 = vmatpush2.msra.mxu0 0.0
        %257 = vmatprep.subr.mxu0 0.0
        %258 = vmatpush2.msra.mxu0 0.0
        %259 = vmatprep.subr.mxu0 0.0
        %260 = vmatpush2.msra.mxu0 0.0
        %261 = vmatprep.mubr.f32.mxu0 0.0
        %262 = vmatmul.mubr.f32.gmra.mxu0 %v168
        %v263 = vpop.f32.mrf.mxu0
        %v264 = vadd.f32 %v196, %v263
        %v265 = vpop.f32.mrf.mxu0
        %266 = vmatprep.mubr.f32.mxu0 0.0
        %267 = vmatmul.mubr.f32.gmra.mxu0 %v169
        %v268 = vpop.f32.mrf.mxu0
        %v269 = vadd.f32 %v196, %v268
        %v270 = vpop.f32.mrf.mxu0
        %271 = vmatprep.mubr.f32.mxu0 0.0
        %272 = vmatmul.mubr.f32.gmra.mxu0 %v170
        %v273 = vpop.f32.mrf.mxu0
        %v274 = vadd.f32 %v196, %v273
        %v275 = vpop.f32.mrf.mxu0
        %276 = vmatprep.mubr.f32.mxu0 0.0
        %277 = vmatmul.mubr.f32.gmra.mxu0 %v171
        %v278 = vpop.f32.mrf.mxu0
        %v279 = vadd.f32 %v196, %v278
        %v280 = vpop.f32.mrf.mxu0
        %281 = vmatprep.mubr.f32.mxu0 0.0
        %282 = vmatmul.mubr.f32.gmra.mxu0 %v172
        %v283 = vpop.f32.mrf.mxu0
        %v284 = vadd.f32 %v196, %v283
        %v285 = vpop.f32.mrf.mxu0
        %286 = vmatprep.mubr.f32.mxu0 0.0
        %287 = vmatmul.mubr.f32.gmra.mxu0 %v173
        %v288 = vpop.f32.mrf.mxu0
        %v289 = vadd.f32 %v196, %v288
        %v290 = vpop.f32.mrf.mxu0
        %291 = vmatprep.mubr.f32.mxu0 0.0
        %292 = vmatmul.mubr.f32.gmra.mxu0 %v174
        %v293 = vpop.f32.mrf.mxu0
        %v294 = vadd.f32 %v196, %v293
        %v295 = vpop.f32.mrf.mxu0
        %296 = vmatprep.mubr.f32.mxu0 0.0
        %297 = vmatmul.mubr.f32.gmra.mxu0 %v175
        %v298 = vpop.f32.mrf.mxu0
        %v299 = vadd.f32 %v196, %v298
        %v300 = vpop.f32.mrf.mxu0
        %301 = vdwg.mxu0
        %vm302 = vcmp.gt.f32.partialorder %v264, 0.0
        %vm303 = vcmp.gt.f32.partialorder %v269, 0.0
        %vm304 = vcmp.gt.f32.partialorder %v274, 0.0
        %vm305 = vcmp.gt.f32.partialorder %v279, 0.0
        %vm306 = vcmp.gt.f32.partialorder %v284, 0.0
        %vm307 = vcmp.gt.f32.partialorder %v289, 0.0
        %vm308 = vcmp.gt.f32.partialorder %v294, 0.0
        %vm309 = vcmp.gt.f32.partialorder %v299, 0.0
        %v310 = vmul.f32 %v264, 0.2
        %v311 = vmul.f32 %v269, 0.2
        %v312 = vmul.f32 %v274, 0.2
        %v313 = vmul.f32 %v279, 0.2
        %v314 = vmul.f32 %v284, 0.2
        %v315 = vmul.f32 %v289, 0.2
        %v316 = vmul.f32 %v294, 0.2
        %v317 = vmul.f32 %v299, 0.2
        %v318 = vsel %vm302, %v264, %v310
        %v319 = vsel %vm303, %v269, %v311
        %v320 = vsel %vm304, %v274, %v312
        %v321 = vsel %vm305, %v279, %v313
        %v322 = vsel %vm306, %v284, %v314
        %v323 = vsel %vm307, %v289, %v315
        %v324 = vsel %vm308, %v294, %v316
        %v325 = vsel %vm309, %v299, %v317
        %v326 = vld [vmem:[%s1 + $0x400] sm:$0xff]
        %v327 = vld [vmem:[%s1 + $0x408] sm:$0xff]
        %v328 = vld [vmem:[%s1 + $0x410] sm:$0xff]
        %v329 = vld [vmem:[%s1 + $0x418] sm:$0xff]
        %v330 = vld [vmem:[%s1 + $0x420] sm:$0xff]
        %v331 = vld [vmem:[%s1 + $0x428] sm:$0xff]
        %v332 = vld [vmem:[%s1 + $0x430] sm:$0xff]
        %v333 = vld [vmem:[%s1 + $0x438] sm:$0xff]
        %v334 = vld [vmem:[%s1 + $0x440] sm:$0xff]
        %v335 = vld [vmem:[%s1 + $0x448] sm:$0xff]
        %v336 = vld [vmem:[%s1 + $0x450] sm:$0xff]
        %v337 = vld [vmem:[%s1 + $0x458] sm:$0xff]
        %v338 = vld [vmem:[%s1 + $0x460] sm:$0xff]
        %v339 = vld [vmem:[%s1 + $0x468] sm:$0xff]
        %v340 = vld [vmem:[%s1 + $0x470] sm:$0xff]
        %v341 = vld [vmem:[%s1 + $0x478] sm:$0xff]
        %v342 = vld [vmem:[%s1 + $0x480] sm:$0xff]
        %v343 = vld [vmem:[%s1 + $0x488] sm:$0xff]
        %v344 = vld [vmem:[%s1 + $0x490] sm:$0xff]
        %v345 = vld [vmem:[%s1 + $0x498] sm:$0xff]
        %v346 = vld [vmem:[%s1 + $0x4a0] sm:$0xff]
        %v347 = vld [vmem:[%s1 + $0x4a8] sm:$0xff]
        %v348 = vld [vmem:[%s1 + $0x4b0] sm:$0xff]
        %v349 = vld [vmem:[%s1 + $0x4b8] sm:$0xff]
        %v350 = vld [vmem:[%s1 + $0x4c0] sm:$0xff]
        %v351 = vld [vmem:[%s1 + $0x4c8] sm:$0xff]
        %v352 = vld [vmem:[%s1 + $0x4d0] sm:$0xff]
        %v353 = vld [vmem:[%s1 + $0x4d8] sm:$0xff]
        %v354 = vld [vmem:[%s1 + $0x4e0] sm:$0xff]
        %v355 = vld [vmem:[%s1 + $0x4e8] sm:$0xff]
        %v356 = vld [vmem:[%s1 + $0x4f0] sm:$0xff]
        %v357 = vld [vmem:[%s1 + $0x4f8] sm:$0xff]
        %vm358 = vcmask 523264
        %v360 = vsel %vm358, %v326, 0
        %v363 = vsel %vm358, %v327, 0
        %v366 = vsel %vm358, %v328, 0
        %v369 = vsel %vm358, %v329, 0
        %v372 = vsel %vm358, %v330, 0
        %v375 = vsel %vm358, %v331, 0
        %v378 = vsel %vm358, %v332, 0
        %v381 = vsel %vm358, %v333, 0
        %v384 = vsel %vm358, %v334, 0
        %v387 = vsel %vm358, %v335, 0
        %v390 = vsel %vm358, %v336, 0
        %v393 = vsel %vm358, %v337, 0
        %v396 = vsel %vm358, %v338, 0
        %v399 = vsel %vm358, %v339, 0
        %v402 = vsel %vm358, %v340, 0
        %v405 = vsel %vm358, %v341, 0
        %v408 = vsel %vm358, %v342, 0
        %v411 = vsel %vm358, %v343, 0
        %v414 = vsel %vm358, %v344, 0
        %v417 = vsel %vm358, %v345, 0
        %v420 = vsel %vm358, %v346, 0
        %v423 = vsel %vm358, %v347, 0
        %v426 = vsel %vm358, %v348, 0
        %v429 = vsel %vm358, %v349, 0
        %v432 = vsel %vm358, %v350, 0
        %v435 = vsel %vm358, %v351, 0
        %v438 = vsel %vm358, %v352, 0
        %v441 = vsel %vm358, %v353, 0
        %v444 = vsel %vm358, %v354, 0
        %v447 = vsel %vm358, %v355, 0
        %v450 = vsel %vm358, %v356, 0
        %v453 = vsel %vm358, %v357, 0
        %455 = vmatprep.subr.mxu0 0.0
        %456 = vmatpush1.msra.mxu0 0.0
        %457 = vmatprep.subr.mxu0 0.0
        %458 = vmatpush1.msra.mxu0 0.0
        %459 = vmatprep.subr.mxu0 0.0
        %460 = vmatpush1.msra.mxu0 0.0
        %461 = vmatprep.subr.mxu0 0.0
        %462 = vmatpush1.msra.mxu0 0.0
        %463 = vmatprep.subr.mxu0 0.0
        %464 = vmatpush1.msra.mxu0 0.0
        %465 = vmatprep.subr.mxu0 0.0
        %466 = vmatpush1.msra.mxu0 0.0
        %467 = vmatprep.subr.mxu0 0.0
        %468 = vmatpush1.msra.mxu0 0.0
        %469 = vmatprep.subr.mxu0 0.0
        %470 = vmatpush1.msra.mxu0 0.0
        %471 = vmatprep.subr.mxu0 0.0
        %472 = vmatpush1.msra.mxu0 %v325
        %473 = vmatprep.subr.mxu0 0.0
        %474 = vmatpush1.msra.mxu0 %v324
        %475 = vmatprep.subr.mxu0 0.0
        %476 = vmatpush1.msra.mxu0 %v323
        %477 = vmatprep.subr.mxu0 0.0
        %478 = vmatpush1.msra.mxu0 %v322
        %479 = vmatprep.subr.mxu0 0.0
        %480 = vmatpush1.msra.mxu0 %v321
        %481 = vmatprep.subr.mxu0 0.0
        %482 = vmatpush1.msra.mxu0 %v320
        %483 = vmatprep.subr.mxu0 0.0
        %484 = vmatpush1.msra.mxu0 %v319
        %485 = vmatprep.subr.mxu0 0.0
        %486 = vmatpush1.msra.mxu0 %v318
        %487 = vmatprep.subr.mxu0 0.0
        %488 = vmatpush2.msra.mxu0 0.0
        %489 = vmatprep.subr.mxu0 0.0
        %490 = vmatpush2.msra.mxu0 0.0
        %491 = vmatprep.subr.mxu0 0.0
        %492 = vmatpush2.msra.mxu0 0.0
        %493 = vmatprep.subr.mxu0 0.0
        %494 = vmatpush2.msra.mxu0 0.0
        %495 = vmatprep.subr.mxu0 0.0
        %496 = vmatpush2.msra.mxu0 0.0
        %497 = vmatprep.subr.mxu0 0.0
        %498 = vmatpush2.msra.mxu0 0.0
        %499 = vmatprep.subr.mxu0 0.0
        %500 = vmatpush2.msra.mxu0 0.0
        %501 = vmatprep.subr.mxu0 0.0
        %502 = vmatpush2.msra.mxu0 0.0
        %503 = vmatprep.subr.mxu0 0.0
        %504 = vmatpush2.msra.mxu0 0.0
        %505 = vmatprep.subr.mxu0 0.0
        %506 = vmatpush2.msra.mxu0 0.0
        %507 = vmatprep.subr.mxu0 0.0
        %508 = vmatpush2.msra.mxu0 0.0
        %509 = vmatprep.subr.mxu0 0.0
        %510 = vmatpush2.msra.mxu0 0.0
        %511 = vmatprep.subr.mxu0 0.0
        %512 = vmatpush2.msra.mxu0 0.0
        %513 = vmatprep.subr.mxu0 0.0
        %514 = vmatpush2.msra.mxu0 0.0
        %515 = vmatprep.subr.mxu0 0.0
        %516 = vmatpush2.msra.mxu0 0.0
        %517 = vmatprep.subr.mxu0 0.0
        %518 = vmatpush2.msra.mxu0 0.0
        %519 = vmatprep.mubr.f32.mxu0 0.0
        %520 = vmatmul.mubr.f32.gmra.mxu0 %v360
        %v521 = vpop.f32.mrf.mxu0
        %v522 = vadd.f32 0.0, %v521
        %v523 = vpop.f32.mrf.mxu0
        %524 = vmatprep.mubr.f32.mxu0 0.0
        %525 = vmatmul.mubr.f32.gmra.mxu0 %v363
        %v526 = vpop.f32.mrf.mxu0
        %v527 = vadd.f32 0.0, %v526
        %v528 = vpop.f32.mrf.mxu0
        %529 = vmatprep.mubr.f32.mxu0 0.0
        %530 = vmatmul.mubr.f32.gmra.mxu0 %v366
        %v531 = vpop.f32.mrf.mxu0
        %v532 = vadd.f32 0.0, %v531
        %v533 = vpop.f32.mrf.mxu0
        %534 = vmatprep.mubr.f32.mxu0 0.0
        %535 = vmatmul.mubr.f32.gmra.mxu0 %v369
        %v536 = vpop.f32.mrf.mxu0
        %v537 = vadd.f32 0.0, %v536
        %v538 = vpop.f32.mrf.mxu0
        %539 = vmatprep.mubr.f32.mxu0 0.0
        %540 = vmatmul.mubr.f32.gmra.mxu0 %v372
        %v541 = vpop.f32.mrf.mxu0
        %v542 = vadd.f32 0.0, %v541
        %v543 = vpop.f32.mrf.mxu0
        %544 = vmatprep.mubr.f32.mxu0 0.0
        %545 = vmatmul.mubr.f32.gmra.mxu0 %v375
        %v546 = vpop.f32.mrf.mxu0
        %v547 = vadd.f32 0.0, %v546
        %v548 = vpop.f32.mrf.mxu0
        %549 = vmatprep.mubr.f32.mxu0 0.0
        %550 = vmatmul.mubr.f32.gmra.mxu0 %v378
        %v551 = vpop.f32.mrf.mxu0
        %v552 = vadd.f32 0.0, %v551
        %v553 = vpop.f32.mrf.mxu0
        %554 = vmatprep.mubr.f32.mxu0 0.0
        %555 = vmatmul.mubr.f32.gmra.mxu0 %v381
        %v556 = vpop.f32.mrf.mxu0
        %v557 = vadd.f32 0.0, %v556
        %v558 = vpop.f32.mrf.mxu0
        %559 = vmatprep.mubr.f32.mxu0 0.0
        %560 = vmatmul.mubr.f32.gmra.mxu0 %v384
        %v561 = vpop.f32.mrf.mxu0
        %v562 = vadd.f32 0.0, %v561
        %v563 = vpop.f32.mrf.mxu0
        %564 = vmatprep.mubr.f32.mxu0 0.0
        %565 = vmatmul.mubr.f32.gmra.mxu0 %v387
        %v566 = vpop.f32.mrf.mxu0
        %v567 = vadd.f32 0.0, %v566
        %v568 = vpop.f32.mrf.mxu0
        %569 = vmatprep.mubr.f32.mxu0 0.0
        %570 = vmatmul.mubr.f32.gmra.mxu0 %v390
        %v571 = vpop.f32.mrf.mxu0
        %v572 = vadd.f32 0.0, %v571
        %v573 = vpop.f32.mrf.mxu0
        %574 = vmatprep.mubr.f32.mxu0 0.0
        %575 = vmatmul.mubr.f32.gmra.mxu0 %v393
        %v576 = vpop.f32.mrf.mxu0
        %v577 = vadd.f32 0.0, %v576
        %v578 = vpop.f32.mrf.mxu0
        %579 = vmatprep.mubr.f32.mxu0 0.0
        %580 = vmatmul.mubr.f32.gmra.mxu0 %v396
        %v581 = vpop.f32.mrf.mxu0
        %v582 = vadd.f32 0.0, %v581
        %v583 = vpop.f32.mrf.mxu0
        %584 = vmatprep.mubr.f32.mxu0 0.0
        %585 = vmatmul.mubr.f32.gmra.mxu0 %v399
        %v586 = vpop.f32.mrf.mxu0
        %v587 = vadd.f32 0.0, %v586
        %v588 = vpop.f32.mrf.mxu0
        %589 = vmatprep.mubr.f32.mxu0 0.0
        %590 = vmatmul.mubr.f32.gmra.mxu0 %v402
        %v591 = vpop.f32.mrf.mxu0
        %v592 = vadd.f32 0.0, %v591
        %v593 = vpop.f32.mrf.mxu0
        %594 = vmatprep.mubr.f32.mxu0 0.0
        %595 = vmatmul.mubr.f32.gmra.mxu0 %v405
        %v596 = vpop.f32.mrf.mxu0
        %v597 = vadd.f32 0.0, %v596
        %v598 = vpop.f32.mrf.mxu0
        %599 = vmatprep.mubr.f32.mxu0 0.0
        %600 = vmatmul.mubr.f32.gmra.mxu0 %v408
        %v601 = vpop.f32.mrf.mxu0
        %v602 = vadd.f32 0.0, %v601
        %v603 = vpop.f32.mrf.mxu0
        %604 = vmatprep.mubr.f32.mxu0 0.0
        %605 = vmatmul.mubr.f32.gmra.mxu0 %v411
        %v606 = vpop.f32.mrf.mxu0
        %v607 = vadd.f32 0.0, %v606
        %v608 = vpop.f32.mrf.mxu0
        %609 = vmatprep.mubr.f32.mxu0 0.0
        %610 = vmatmul.mubr.f32.gmra.mxu0 %v414
        %v611 = vpop.f32.mrf.mxu0
        %v612 = vadd.f32 0.0, %v611
        %v613 = vpop.f32.mrf.mxu0
        %614 = vmatprep.mubr.f32.mxu0 0.0
        %615 = vmatmul.mubr.f32.gmra.mxu0 %v417
        %v616 = vpop.f32.mrf.mxu0
        %v617 = vadd.f32 0.0, %v616
        %v618 = vpop.f32.mrf.mxu0
        %619 = vmatprep.mubr.f32.mxu0 0.0
        %620 = vmatmul.mubr.f32.gmra.mxu0 %v420
        %v621 = vpop.f32.mrf.mxu0
        %v622 = vadd.f32 0.0, %v621
        %v623 = vpop.f32.mrf.mxu0
        %624 = vmatprep.mubr.f32.mxu0 0.0
        %625 = vmatmul.mubr.f32.gmra.mxu0 %v423
        %v626 = vpop.f32.mrf.mxu0
        %v627 = vadd.f32 0.0, %v626
        %v628 = vpop.f32.mrf.mxu0
        %629 = vmatprep.mubr.f32.mxu0 0.0
        %630 = vmatmul.mubr.f32.gmra.mxu0 %v426
        %v631 = vpop.f32.mrf.mxu0
        %v632 = vadd.f32 0.0, %v631
        %v633 = vpop.f32.mrf.mxu0
        %634 = vmatprep.mubr.f32.mxu0 0.0
        %635 = vmatmul.mubr.f32.gmra.mxu0 %v429
        %v636 = vpop.f32.mrf.mxu0
        %v637 = vadd.f32 0.0, %v636
        %v638 = vpop.f32.mrf.mxu0
        %639 = vmatprep.mubr.f32.mxu0 0.0
        %640 = vmatmul.mubr.f32.gmra.mxu0 %v432
        %v641 = vpop.f32.mrf.mxu0
        %v642 = vadd.f32 0.0, %v641
        %v643 = vpop.f32.mrf.mxu0
        %644 = vmatprep.mubr.f32.mxu0 0.0
        %645 = vmatmul.mubr.f32.gmra.mxu0 %v435
        %v646 = vpop.f32.mrf.mxu0
        %v647 = vadd.f32 0.0, %v646
        %v648 = vpop.f32.mrf.mxu0
        %649 = vmatprep.mubr.f32.mxu0 0.0
        %650 = vmatmul.mubr.f32.gmra.mxu0 %v438
        %v651 = vpop.f32.mrf.mxu0
        %v652 = vadd.f32 0.0, %v651
        %v653 = vpop.f32.mrf.mxu0
        %654 = vmatprep.mubr.f32.mxu0 0.0
        %655 = vmatmul.mubr.f32.gmra.mxu0 %v441
        %v656 = vpop.f32.mrf.mxu0
        %v657 = vadd.f32 0.0, %v656
        %v658 = vpop.f32.mrf.mxu0
        %659 = vmatprep.mubr.f32.mxu0 0.0
        %660 = vmatmul.mubr.f32.gmra.mxu0 %v444
        %v661 = vpop.f32.mrf.mxu0
        %v662 = vadd.f32 0.0, %v661
        %v663 = vpop.f32.mrf.mxu0
        %664 = vmatprep.mubr.f32.mxu0 0.0
        %665 = vmatmul.mubr.f32.gmra.mxu0 %v447
        %v666 = vpop.f32.mrf.mxu0
        %v667 = vadd.f32 0.0, %v666
        %v668 = vpop.f32.mrf.mxu0
        %669 = vmatprep.mubr.f32.mxu0 0.0
        %670 = vmatmul.mubr.f32.gmra.mxu0 %v450
        %v671 = vpop.f32.mrf.mxu0
        %v672 = vadd.f32 0.0, %v671
        %v673 = vpop.f32.mrf.mxu0
        %674 = vmatprep.mubr.f32.mxu0 0.0
        %675 = vmatmul.mubr.f32.gmra.mxu0 %v453
        %v676 = vpop.f32.mrf.mxu0
        %v677 = vadd.f32 0.0, %v676
        %v678 = vpop.f32.mrf.mxu0
        %679 = vdwg.mxu0
        %v680 = vld [vmem:[%s1 + $0x80] sm:$0xff]
        %v681 = vld [vmem:[%s1 + $0x88] sm:$0xff]
        %v682 = vld [vmem:[%s1 + $0x90] sm:$0xff]
        %v683 = vld [vmem:[%s1 + $0x98] sm:$0xff]
        %vm684 = vcmask 130048
        %v686 = vsel %vm684, %v532, 0
        %v689 = vsel %vm684, %v537, 0
        %691 = vmatprep.subr.mxu0 0.0
        %692 = vmatpush1.msra.mxu0 0.0
        %693 = vmatprep.subr.mxu0 0.0
        %694 = vmatpush1.msra.mxu0 0.0
        %695 = vmatprep.subr.mxu0 0.0
        %696 = vmatpush1.msra.mxu0 0.0
        %697 = vmatprep.subr.mxu0 0.0
        %698 = vmatpush1.msra.mxu0 0.0
        %699 = vmatprep.subr.mxu0 0.0
        %700 = vmatpush1.msra.mxu0 0.0
        %701 = vmatprep.subr.mxu0 0.0
        %702 = vmatpush1.msra.mxu0 0.0
        %703 = vmatprep.subr.mxu0 0.0
        %704 = vmatpush1.msra.mxu0 0.0
        %705 = vmatprep.subr.mxu0 0.0
        %706 = vmatpush1.msra.mxu0 0.0
        %707 = vmatprep.subr.mxu0 0.0
        %708 = vmatpush1.msra.mxu0 0.0
        %709 = vmatprep.subr.mxu0 0.0
        %710 = vmatpush1.msra.mxu0 0.0
        %711 = vmatprep.subr.mxu0 0.0
        %712 = vmatpush1.msra.mxu0 0.0
        %713 = vmatprep.subr.mxu0 0.0
        %714 = vmatpush1.msra.mxu0 0.0
        %715 = vmatprep.subr.mxu0 0.0
        %716 = vmatpush1.msra.mxu0 0.0
        %717 = vmatprep.subr.mxu0 0.0
        %718 = vmatpush1.msra.mxu0 0.0
        %719 = vmatprep.subr.mxu0 0.0
        %720 = vmatpush1.msra.mxu0 %v683
        %721 = vmatprep.subr.mxu0 0.0
        %722 = vmatpush1.msra.mxu0 %v682
        %723 = vmatprep.subr.mxu0 0.0
        %724 = vmatpush2.msra.mxu0 0.0
        %725 = vmatprep.subr.mxu0 0.0
        %726 = vmatpush2.msra.mxu0 0.0
        %727 = vmatprep.subr.mxu0 0.0
        %728 = vmatpush2.msra.mxu0 0.0
        %729 = vmatprep.subr.mxu0 0.0
        %730 = vmatpush2.msra.mxu0 0.0
        %731 = vmatprep.subr.mxu0 0.0
        %732 = vmatpush2.msra.mxu0 0.0
        %733 = vmatprep.subr.mxu0 0.0
        %734 = vmatpush2.msra.mxu0 0.0
        %735 = vmatprep.subr.mxu0 0.0
        %736 = vmatpush2.msra.mxu0 0.0
        %737 = vmatprep.subr.mxu0 0.0
        %738 = vmatpush2.msra.mxu0 0.0
        %739 = vmatprep.subr.mxu0 0.0
        %740 = vmatpush2.msra.mxu0 0.0
        %741 = vmatprep.subr.mxu0 0.0
        %742 = vmatpush2.msra.mxu0 0.0
        %743 = vmatprep.subr.mxu0 0.0
        %744 = vmatpush2.msra.mxu0 0.0
        %745 = vmatprep.subr.mxu0 0.0
        %746 = vmatpush2.msra.mxu0 0.0
        %747 = vmatprep.subr.mxu0 0.0
        %748 = vmatpush2.msra.mxu0 0.0
        %749 = vmatprep.subr.mxu0 0.0
        %750 = vmatpush2.msra.mxu0 0.0
        %751 = vmatprep.subr.mxu0 0.0
        %752 = vmatpush2.msra.mxu0 0.0
        %753 = vmatprep.subr.mxu0 0.0
        %754 = vmatpush2.msra.mxu0 0.0
        %755 = vmatprep.mubr.f32.mxu0 0.0
        %756 = vmatmul.mubr.f32.gmra.mxu0 %v686
        %v757 = vpop.f32.mrf.mxu0
        %v758 = vadd.f32 0.0, %v757
        %v759 = vpop.f32.mrf.mxu0
        %760 = vmatprep.mubr.f32.mxu0 0.0
        %761 = vmatmul.mubr.f32.gmra.mxu0 %v689
        %v762 = vpop.f32.mrf.mxu0
        %v763 = vadd.f32 0.0, %v762
        %v764 = vpop.f32.mrf.mxu0
        %765 = vdwg.mxu0
        %v767 = vsel %vm684, %v522, 0
        %v770 = vsel %vm684, %v527, 0
        %772 = vmatprep.subr.mxu0 0.0
        %773 = vmatpush1.msra.mxu0 0.0
        %774 = vmatprep.subr.mxu0 0.0
        %775 = vmatpush1.msra.mxu0 0.0
        %776 = vmatprep.subr.mxu0 0.0
        %777 = vmatpush1.msra.mxu0 0.0
        %778 = vmatprep.subr.mxu0 0.0
        %779 = vmatpush1.msra.mxu0 0.0
        %780 = vmatprep.subr.mxu0 0.0
        %781 = vmatpush1.msra.mxu0 0.0
        %782 = vmatprep.subr.mxu0 0.0
        %783 = vmatpush1.msra.mxu0 0.0
        %784 = vmatprep.subr.mxu0 0.0
        %785 = vmatpush1.msra.mxu0 0.0
        %786 = vmatprep.subr.mxu0 0.0
        %787 = vmatpush1.msra.mxu0 0.0
        %788 = vmatprep.subr.mxu0 0.0
        %789 = vmatpush1.msra.mxu0 0.0
        %790 = vmatprep.subr.mxu0 0.0
        %791 = vmatpush1.msra.mxu0 0.0
        %792 = vmatprep.subr.mxu0 0.0
        %793 = vmatpush1.msra.mxu0 0.0
        %794 = vmatprep.subr.mxu0 0.0
        %795 = vmatpush1.msra.mxu0 0.0
        %796 = vmatprep.subr.mxu0 0.0
        %797 = vmatpush1.msra.mxu0 0.0
        %798 = vmatprep.subr.mxu0 0.0
        %799 = vmatpush1.msra.mxu0 0.0
        %800 = vmatprep.subr.mxu0 0.0
        %801 = vmatpush1.msra.mxu0 %v681
        %802 = vmatprep.subr.mxu0 0.0
        %803 = vmatpush1.msra.mxu0 %v680
        %804 = vmatprep.subr.mxu0 0.0
        %805 = vmatpush2.msra.mxu0 0.0
        %806 = vmatprep.subr.mxu0 0.0
        %807 = vmatpush2.msra.mxu0 0.0
        %808 = vmatprep.subr.mxu0 0.0
        %809 = vmatpush2.msra.mxu0 0.0
        %810 = vmatprep.subr.mxu0 0.0
        %811 = vmatpush2.msra.mxu0 0.0
        %812 = vmatprep.subr.mxu0 0.0
        %813 = vmatpush2.msra.mxu0 0.0
        %814 = vmatprep.subr.mxu0 0.0
        %815 = vmatpush2.msra.mxu0 0.0
        %816 = vmatprep.subr.mxu0 0.0
        %817 = vmatpush2.msra.mxu0 0.0
        %818 = vmatprep.subr.mxu0 0.0
        %819 = vmatpush2.msra.mxu0 0.0
        %820 = vmatprep.subr.mxu0 0.0
        %821 = vmatpush2.msra.mxu0 0.0
        %822 = vmatprep.subr.mxu0 0.0
        %823 = vmatpush2.msra.mxu0 0.0
        %824 = vmatprep.subr.mxu0 0.0
        %825 = vmatpush2.msra.mxu0 0.0
        %826 = vmatprep.subr.mxu0 0.0
        %827 = vmatpush2.msra.mxu0 0.0
        %828 = vmatprep.subr.mxu0 0.0
        %829 = vmatpush2.msra.mxu0 0.0
        %830 = vmatprep.subr.mxu0 0.0
        %831 = vmatpush2.msra.mxu0 0.0
        %832 = vmatprep.subr.mxu0 0.0
        %833 = vmatpush2.msra.mxu0 0.0
        %834 = vmatprep.subr.mxu0 0.0
        %835 = vmatpush2.msra.mxu0 0.0
        %836 = vmatprep.mubr.f32.mxu0 0.0
        %837 = vmatmul.mubr.f32.gmra.mxu0 %v767
        %v838 = vpop.f32.mrf.mxu0
        %v839 = vadd.f32 %v758, %v838
        %v840 = vpop.f32.mrf.mxu0
        %841 = vmatprep.mubr.f32.mxu0 0.0
        %842 = vmatmul.mubr.f32.gmra.mxu0 %v770
        %v843 = vpop.f32.mrf.mxu0
        %v844 = vadd.f32 %v763, %v843
        %v845 = vpop.f32.mrf.mxu0
        %846 = vdwg.mxu0
        %v847 = vld [vmem:[%s1 + $0xa0] sm:$0xff]
        %v848 = vld [vmem:[%s1 + $0xa8] sm:$0xff]
        %v850 = vsel %vm684, %v542, 0
        %v853 = vsel %vm684, %v547, 0
        %855 = vmatprep.subr.mxu0 0.0
        %856 = vmatpush1.msra.mxu0 0.0
        %857 = vmatprep.subr.mxu0 0.0
        %858 = vmatpush1.msra.mxu0 0.0
        %859 = vmatprep.subr.mxu0 0.0
        %860 = vmatpush1.msra.mxu0 0.0
        %861 = vmatprep.subr.mxu0 0.0
        %862 = vmatpush1.msra.mxu0 0.0
        %863 = vmatprep.subr.mxu0 0.0
        %864 = vmatpush1.msra.mxu0 0.0
        %865 = vmatprep.subr.mxu0 0.0
        %866 = vmatpush1.msra.mxu0 0.0
        %867 = vmatprep.subr.mxu0 0.0
        %868 = vmatpush1.msra.mxu0 0.0
        %869 = vmatprep.subr.mxu0 0.0
        %870 = vmatpush1.msra.mxu0 0.0
        %871 = vmatprep.subr.mxu0 0.0
        %872 = vmatpush1.msra.mxu0 0.0
        %873 = vmatprep.subr.mxu0 0.0
        %874 = vmatpush1.msra.mxu0 0.0
        %875 = vmatprep.subr.mxu0 0.0
        %876 = vmatpush1.msra.mxu0 0.0
        %877 = vmatprep.subr.mxu0 0.0
        %878 = vmatpush1.msra.mxu0 0.0
        %879 = vmatprep.subr.mxu0 0.0
        %880 = vmatpush1.msra.mxu0 0.0
        %881 = vmatprep.subr.mxu0 0.0
        %882 = vmatpush1.msra.mxu0 0.0
        %883 = vmatprep.subr.mxu0 0.0
        %884 = vmatpush1.msra.mxu0 %v848
        %885 = vmatprep.subr.mxu0 0.0
        %886 = vmatpush1.msra.mxu0 %v847
        %887 = vmatprep.subr.mxu0 0.0
        %888 = vmatpush2.msra.mxu0 0.0
        %889 = vmatprep.subr.mxu0 0.0
        %890 = vmatpush2.msra.mxu0 0.0
        %891 = vmatprep.subr.mxu0 0.0
        %892 = vmatpush2.msra.mxu0 0.0
        %893 = vmatprep.subr.mxu0 0.0
        %894 = vmatpush2.msra.mxu0 0.0
        %895 = vmatprep.subr.mxu0 0.0
        %896 = vmatpush2.msra.mxu0 0.0
        %897 = vmatprep.subr.mxu0 0.0
        %898 = vmatpush2.msra.mxu0 0.0
        %899 = vmatprep.subr.mxu0 0.0
        %900 = vmatpush2.msra.mxu0 0.0
        %901 = vmatprep.subr.mxu0 0.0
        %902 = vmatpush2.msra.mxu0 0.0
        %903 = vmatprep.subr.mxu0 0.0
        %904 = vmatpush2.msra.mxu0 0.0
        %905 = vmatprep.subr.mxu0 0.0
        %906 = vmatpush2.msra.mxu0 0.0
        %907 = vmatprep.subr.mxu0 0.0
        %908 = vmatpush2.msra.mxu0 0.0
        %909 = vmatprep.subr.mxu0 0.0
        %910 = vmatpush2.msra.mxu0 0.0
        %911 = vmatprep.subr.mxu0 0.0
        %912 = vmatpush2.msra.mxu0 0.0
        %913 = vmatprep.subr.mxu0 0.0
        %914 = vmatpush2.msra.mxu0 0.0
        %915 = vmatprep.subr.mxu0 0.0
        %916 = vmatpush2.msra.mxu0 0.0
        %917 = vmatprep.subr.mxu0 0.0
        %918 = vmatpush2.msra.mxu0 0.0
        %919 = vmatprep.mubr.f32.mxu0 0.0
        %920 = vmatmul.mubr.f32.gmra.mxu0 %v850
        %v921 = vpop.f32.mrf.mxu0
        %v922 = vadd.f32 0.0, %v921
        %v923 = vpop.f32.mrf.mxu0
        %924 = vmatprep.mubr.f32.mxu0 0.0
        %925 = vmatmul.mubr.f32.gmra.mxu0 %v853
        %v926 = vpop.f32.mrf.mxu0
        %v927 = vadd.f32 0.0, %v926
        %v928 = vpop.f32.mrf.mxu0
        %929 = vdwg.mxu0
        %v930 = vadd.f32 %v839, %v922
        %v931 = vadd.f32 %v844, %v927
        %v932 = vld [vmem:[%s1 + $0xb0] sm:$0xff]
        %v933 = vld [vmem:[%s1 + $0xb8] sm:$0xff]
        %v935 = vsel %vm684, %v552, 0
        %v938 = vsel %vm684, %v557, 0
        %940 = vmatprep.subr.mxu0 0.0
        %941 = vmatpush1.msra.mxu0 0.0
        %942 = vmatprep.subr.mxu0 0.0
        %943 = vmatpush1.msra.mxu0 0.0
        %944 = vmatprep.subr.mxu0 0.0
        %945 = vmatpush1.msra.mxu0 0.0
        %946 = vmatprep.subr.mxu0 0.0
        %947 = vmatpush1.msra.mxu0 0.0
        %948 = vmatprep.subr.mxu0 0.0
        %949 = vmatpush1.msra.mxu0 0.0
        %950 = vmatprep.subr.mxu0 0.0
        %951 = vmatpush1.msra.mxu0 0.0
        %952 = vmatprep.subr.mxu0 0.0
        %953 = vmatpush1.msra.mxu0 0.0
        %954 = vmatprep.subr.mxu0 0.0
        %955 = vmatpush1.msra.mxu0 0.0
        %956 = vmatprep.subr.mxu0 0.0
        %957 = vmatpush1.msra.mxu0 0.0
        %958 = vmatprep.subr.mxu0 0.0
        %959 = vmatpush1.msra.mxu0 0.0
        %960 = vmatprep.subr.mxu0 0.0
        %961 = vmatpush1.msra.mxu0 0.0
        %962 = vmatprep.subr.mxu0 0.0
        %963 = vmatpush1.msra.mxu0 0.0
        %964 = vmatprep.subr.mxu0 0.0
        %965 = vmatpush1.msra.mxu0 0.0
        %966 = vmatprep.subr.mxu0 0.0
        %967 = vmatpush1.msra.mxu0 0.0
        %968 = vmatprep.subr.mxu0 0.0
        %969 = vmatpush1.msra.mxu0 %v933
        %970 = vmatprep.subr.mxu0 0.0
        %971 = vmatpush1.msra.mxu0 %v932
        %972 = vmatprep.subr.mxu0 0.0
        %973 = vmatpush2.msra.mxu0 0.0
        %974 = vmatprep.subr.mxu0 0.0
        %975 = vmatpush2.msra.mxu0 0.0
        %976 = vmatprep.subr.mxu0 0.0
        %977 = vmatpush2.msra.mxu0 0.0
        %978 = vmatprep.subr.mxu0 0.0
        %979 = vmatpush2.msra.mxu0 0.0
        %980 = vmatprep.subr.mxu0 0.0
        %981 = vmatpush2.msra.mxu0 0.0
        %982 = vmatprep.subr.mxu0 0.0
        %983 = vmatpush2.msra.mxu0 0.0
        %984 = vmatprep.subr.mxu0 0.0
        %985 = vmatpush2.msra.mxu0 0.0
        %986 = vmatprep.subr.mxu0 0.0
        %987 = vmatpush2.msra.mxu0 0.0
        %988 = vmatprep.subr.mxu0 0.0
        %989 = vmatpush2.msra.mxu0 0.0
        %990 = vmatprep.subr.mxu0 0.0
        %991 = vmatpush2.msra.mxu0 0.0
        %992 = vmatprep.subr.mxu0 0.0
        %993 = vmatpush2.msra.mxu0 0.0
        %994 = vmatprep.subr.mxu0 0.0
        %995 = vmatpush2.msra.mxu0 0.0
        %996 = vmatprep.subr.mxu0 0.0
        %997 = vmatpush2.msra.mxu0 0.0
        %998 = vmatprep.subr.mxu0 0.0
        %999 = vmatpush2.msra.mxu0 0.0
        %1000 = vmatprep.subr.mxu0 0.0
        %1001 = vmatpush2.msra.mxu0 0.0
        %1002 = vmatprep.subr.mxu0 0.0
        %1003 = vmatpush2.msra.mxu0 0.0
        %1004 = vmatprep.mubr.f32.mxu0 0.0
        %1005 = vmatmul.mubr.f32.gmra.mxu0 %v935
        %v1006 = vpop.f32.mrf.mxu0
        %v1007 = vadd.f32 0.0, %v1006
        %v1008 = vpop.f32.mrf.mxu0
        %1009 = vmatprep.mubr.f32.mxu0 0.0
        %1010 = vmatmul.mubr.f32.gmra.mxu0 %v938
        %v1011 = vpop.f32.mrf.mxu0
        %v1012 = vadd.f32 0.0, %v1011
        %v1013 = vpop.f32.mrf.mxu0
        %1014 = vdwg.mxu0
        %v1015 = vadd.f32 %v930, %v1007
        %v1016 = vadd.f32 %v931, %v1012
        %v1017 = vld [vmem:[%s1 + $0xc0] sm:$0xff]
        %v1018 = vld [vmem:[%s1 + $0xc8] sm:$0xff]
        %v1020 = vsel %vm684, %v562, 0
        %v1023 = vsel %vm684, %v567, 0
        %1025 = vmatprep.subr.mxu0 0.0
        %1026 = vmatpush1.msra.mxu0 0.0
        %1027 = vmatprep.subr.mxu0 0.0
        %1028 = vmatpush1.msra.mxu0 0.0
        %1029 = vmatprep.subr.mxu0 0.0
        %1030 = vmatpush1.msra.mxu0 0.0
        %1031 = vmatprep.subr.mxu0 0.0
        %1032 = vmatpush1.msra.mxu0 0.0
        %1033 = vmatprep.subr.mxu0 0.0
        %1034 = vmatpush1.msra.mxu0 0.0
        %1035 = vmatprep.subr.mxu0 0.0
        %1036 = vmatpush1.msra.mxu0 0.0
        %1037 = vmatprep.subr.mxu0 0.0
        %1038 = vmatpush1.msra.mxu0 0.0
        %1039 = vmatprep.subr.mxu0 0.0
        %1040 = vmatpush1.msra.mxu0 0.0
        %1041 = vmatprep.subr.mxu0 0.0
        %1042 = vmatpush1.msra.mxu0 0.0
        %1043 = vmatprep.subr.mxu0 0.0
        %1044 = vmatpush1.msra.mxu0 0.0
        %1045 = vmatprep.subr.mxu0 0.0
        %1046 = vmatpush1.msra.mxu0 0.0
        %1047 = vmatprep.subr.mxu0 0.0
        %1048 = vmatpush1.msra.mxu0 0.0
        %1049 = vmatprep.subr.mxu0 0.0
        %1050 = vmatpush1.msra.mxu0 0.0
        %1051 = vmatprep.subr.mxu0 0.0
        %1052 = vmatpush1.msra.mxu0 0.0
        %1053 = vmatprep.subr.mxu0 0.0
        %1054 = vmatpush1.msra.mxu0 %v1018
        %1055 = vmatprep.subr.mxu0 0.0
        %1056 = vmatpush1.msra.mxu0 %v1017
        %1057 = vmatprep.subr.mxu0 0.0
        %1058 = vmatpush2.msra.mxu0 0.0
        %1059 = vmatprep.subr.mxu0 0.0
        %1060 = vmatpush2.msra.mxu0 0.0
        %1061 = vmatprep.subr.mxu0 0.0
        %1062 = vmatpush2.msra.mxu0 0.0
        %1063 = vmatprep.subr.mxu0 0.0
        %1064 = vmatpush2.msra.mxu0 0.0
        %1065 = vmatprep.subr.mxu0 0.0
        %1066 = vmatpush2.msra.mxu0 0.0
        %1067 = vmatprep.subr.mxu0 0.0
        %1068 = vmatpush2.msra.mxu0 0.0
        %1069 = vmatprep.subr.mxu0 0.0
        %1070 = vmatpush2.msra.mxu0 0.0
        %1071 = vmatprep.subr.mxu0 0.0
        %1072 = vmatpush2.msra.mxu0 0.0
        %1073 = vmatprep.subr.mxu0 0.0
        %1074 = vmatpush2.msra.mxu0 0.0
        %1075 = vmatprep.subr.mxu0 0.0
        %1076 = vmatpush2.msra.mxu0 0.0
        %1077 = vmatprep.subr.mxu0 0.0
        %1078 = vmatpush2.msra.mxu0 0.0
        %1079 = vmatprep.subr.mxu0 0.0
        %1080 = vmatpush2.msra.mxu0 0.0
        %1081 = vmatprep.subr.mxu0 0.0
        %1082 = vmatpush2.msra.mxu0 0.0
        %1083 = vmatprep.subr.mxu0 0.0
        %1084 = vmatpush2.msra.mxu0 0.0
        %1085 = vmatprep.subr.mxu0 0.0
        %1086 = vmatpush2.msra.mxu0 0.0
        %1087 = vmatprep.subr.mxu0 0.0
        %1088 = vmatpush2.msra.mxu0 0.0
        %1089 = vmatprep.mubr.f32.mxu0 0.0
        %1090 = vmatmul.mubr.f32.gmra.mxu0 %v1020
        %v1091 = vpop.f32.mrf.mxu0
        %v1092 = vadd.f32 0.0, %v1091
        %v1093 = vpop.f32.mrf.mxu0
        %1094 = vmatprep.mubr.f32.mxu0 0.0
        %1095 = vmatmul.mubr.f32.gmra.mxu0 %v1023
        %v1096 = vpop.f32.mrf.mxu0
        %v1097 = vadd.f32 0.0, %v1096
        %v1098 = vpop.f32.mrf.mxu0
        %1099 = vdwg.mxu0
        %v1100 = vadd.f32 %v1015, %v1092
        %v1101 = vadd.f32 %v1016, %v1097
        %v1102 = vld [vmem:[%s1 + $0xd0] sm:$0xff]
        %v1103 = vld [vmem:[%s1 + $0xd8] sm:$0xff]
        %v1105 = vsel %vm684, %v572, 0
        %v1108 = vsel %vm684, %v577, 0
        %1110 = vmatprep.subr.mxu0 0.0
        %1111 = vmatpush1.msra.mxu0 0.0
        %1112 = vmatprep.subr.mxu0 0.0
        %1113 = vmatpush1.msra.mxu0 0.0
        %1114 = vmatprep.subr.mxu0 0.0
        %1115 = vmatpush1.msra.mxu0 0.0
        %1116 = vmatprep.subr.mxu0 0.0
        %1117 = vmatpush1.msra.mxu0 0.0
        %1118 = vmatprep.subr.mxu0 0.0
        %1119 = vmatpush1.msra.mxu0 0.0
        %1120 = vmatprep.subr.mxu0 0.0
        %1121 = vmatpush1.msra.mxu0 0.0
        %1122 = vmatprep.subr.mxu0 0.0
        %1123 = vmatpush1.msra.mxu0 0.0
        %1124 = vmatprep.subr.mxu0 0.0
        %1125 = vmatpush1.msra.mxu0 0.0
        %1126 = vmatprep.subr.mxu0 0.0
        %1127 = vmatpush1.msra.mxu0 0.0
        %1128 = vmatprep.subr.mxu0 0.0
        %1129 = vmatpush1.msra.mxu0 0.0
        %1130 = vmatprep.subr.mxu0 0.0
        %1131 = vmatpush1.msra.mxu0 0.0
        %1132 = vmatprep.subr.mxu0 0.0
        %1133 = vmatpush1.msra.mxu0 0.0
        %1134 = vmatprep.subr.mxu0 0.0
        %1135 = vmatpush1.msra.mxu0 0.0
        %1136 = vmatprep.subr.mxu0 0.0
        %1137 = vmatpush1.msra.mxu0 0.0
        %1138 = vmatprep.subr.mxu0 0.0
        %1139 = vmatpush1.msra.mxu0 %v1103
        %1140 = vmatprep.subr.mxu0 0.0
        %1141 = vmatpush1.msra.mxu0 %v1102
        %1142 = vmatprep.subr.mxu0 0.0
        %1143 = vmatpush2.msra.mxu0 0.0
        %1144 = vmatprep.subr.mxu0 0.0
        %1145 = vmatpush2.msra.mxu0 0.0
        %1146 = vmatprep.subr.mxu0 0.0
        %1147 = vmatpush2.msra.mxu0 0.0
        %1148 = vmatprep.subr.mxu0 0.0
        %1149 = vmatpush2.msra.mxu0 0.0
        %1150 = vmatprep.subr.mxu0 0.0
        %1151 = vmatpush2.msra.mxu0 0.0
        %1152 = vmatprep.subr.mxu0 0.0
        %1153 = vmatpush2.msra.mxu0 0.0
        %1154 = vmatprep.subr.mxu0 0.0
        %1155 = vmatpush2.msra.mxu0 0.0
        %1156 = vmatprep.subr.mxu0 0.0
        %1157 = vmatpush2.msra.mxu0 0.0
        %1158 = vmatprep.subr.mxu0 0.0
        %1159 = vmatpush2.msra.mxu0 0.0
        %1160 = vmatprep.subr.mxu0 0.0
        %1161 = vmatpush2.msra.mxu0 0.0
        %1162 = vmatprep.subr.mxu0 0.0
        %1163 = vmatpush2.msra.mxu0 0.0
        %1164 = vmatprep.subr.mxu0 0.0
        %1165 = vmatpush2.msra.mxu0 0.0
        %1166 = vmatprep.subr.mxu0 0.0
        %1167 = vmatpush2.msra.mxu0 0.0
        %1168 = vmatprep.subr.mxu0 0.0
        %1169 = vmatpush2.msra.mxu0 0.0
        %1170 = vmatprep.subr.mxu0 0.0
        %1171 = vmatpush2.msra.mxu0 0.0
        %1172 = vmatprep.subr.mxu0 0.0
        %1173 = vmatpush2.msra.mxu0 0.0
        %1174 = vmatprep.mubr.f32.mxu0 0.0
        %1175 = vmatmul.mubr.f32.gmra.mxu0 %v1105
        %v1176 = vpop.f32.mrf.mxu0
        %v1177 = vadd.f32 0.0, %v1176
        %v1178 = vpop.f32.mrf.mxu0
        %1179 = vmatprep.mubr.f32.mxu0 0.0
        %1180 = vmatmul.mubr.f32.gmra.mxu0 %v1108
        %v1181 = vpop.f32.mrf.mxu0
        %v1182 = vadd.f32 0.0, %v1181
        %v1183 = vpop.f32.mrf.mxu0
        %1184 = vdwg.mxu0
        %v1185 = vadd.f32 %v1100, %v1177
        %v1186 = vadd.f32 %v1101, %v1182
        %v1187 = vld [vmem:[%s1 + $0xe0] sm:$0xff]
        %v1188 = vld [vmem:[%s1 + $0xe8] sm:$0xff]
        %v1190 = vsel %vm684, %v582, 0
        %v1193 = vsel %vm684, %v587, 0
        %1195 = vmatprep.subr.mxu0 0.0
        %1196 = vmatpush1.msra.mxu0 0.0
        %1197 = vmatprep.subr.mxu0 0.0
        %1198 = vmatpush1.msra.mxu0 0.0
        %1199 = vmatprep.subr.mxu0 0.0
        %1200 = vmatpush1.msra.mxu0 0.0
        %1201 = vmatprep.subr.mxu0 0.0
        %1202 = vmatpush1.msra.mxu0 0.0
        %1203 = vmatprep.subr.mxu0 0.0
        %1204 = vmatpush1.msra.mxu0 0.0
        %1205 = vmatprep.subr.mxu0 0.0
        %1206 = vmatpush1.msra.mxu0 0.0
        %1207 = vmatprep.subr.mxu0 0.0
        %1208 = vmatpush1.msra.mxu0 0.0
        %1209 = vmatprep.subr.mxu0 0.0
        %1210 = vmatpush1.msra.mxu0 0.0
        %1211 = vmatprep.subr.mxu0 0.0
        %1212 = vmatpush1.msra.mxu0 0.0
        %1213 = vmatprep.subr.mxu0 0.0
        %1214 = vmatpush1.msra.mxu0 0.0
        %1215 = vmatprep.subr.mxu0 0.0
        %1216 = vmatpush1.msra.mxu0 0.0
        %1217 = vmatprep.subr.mxu0 0.0
        %1218 = vmatpush1.msra.mxu0 0.0
        %1219 = vmatprep.subr.mxu0 0.0
        %1220 = vmatpush1.msra.mxu0 0.0
        %1221 = vmatprep.subr.mxu0 0.0
        %1222 = vmatpush1.msra.mxu0 0.0
        %1223 = vmatprep.subr.mxu0 0.0
        %1224 = vmatpush1.msra.mxu0 %v1188
        %1225 = vmatprep.subr.mxu0 0.0
        %1226 = vmatpush1.msra.mxu0 %v1187
        %1227 = vmatprep.subr.mxu0 0.0
        %1228 = vmatpush2.msra.mxu0 0.0
        %1229 = vmatprep.subr.mxu0 0.0
        %1230 = vmatpush2.msra.mxu0 0.0
        %1231 = vmatprep.subr.mxu0 0.0
        %1232 = vmatpush2.msra.mxu0 0.0
        %1233 = vmatprep.subr.mxu0 0.0
        %1234 = vmatpush2.msra.mxu0 0.0
        %1235 = vmatprep.subr.mxu0 0.0
        %1236 = vmatpush2.msra.mxu0 0.0
        %1237 = vmatprep.subr.mxu0 0.0
        %1238 = vmatpush2.msra.mxu0 0.0
        %1239 = vmatprep.subr.mxu0 0.0
        %1240 = vmatpush2.msra.mxu0 0.0
        %1241 = vmatprep.subr.mxu0 0.0
        %1242 = vmatpush2.msra.mxu0 0.0
        %1243 = vmatprep.subr.mxu0 0.0
        %1244 = vmatpush2.msra.mxu0 0.0
        %1245 = vmatprep.subr.mxu0 0.0
        %1246 = vmatpush2.msra.mxu0 0.0
        %1247 = vmatprep.subr.mxu0 0.0
        %1248 = vmatpush2.msra.mxu0 0.0
        %1249 = vmatprep.subr.mxu0 0.0
        %1250 = vmatpush2.msra.mxu0 0.0
        %1251 = vmatprep.subr.mxu0 0.0
        %1252 = vmatpush2.msra.mxu0 0.0
        %1253 = vmatprep.subr.mxu0 0.0
        %1254 = vmatpush2.msra.mxu0 0.0
        %1255 = vmatprep.subr.mxu0 0.0
        %1256 = vmatpush2.msra.mxu0 0.0
        %1257 = vmatprep.subr.mxu0 0.0
        %1258 = vmatpush2.msra.mxu0 0.0
        %1259 = vmatprep.mubr.f32.mxu0 0.0
        %1260 = vmatmul.mubr.f32.gmra.mxu0 %v1190
        %v1261 = vpop.f32.mrf.mxu0
        %v1262 = vadd.f32 0.0, %v1261
        %v1263 = vpop.f32.mrf.mxu0
        %1264 = vmatprep.mubr.f32.mxu0 0.0
        %1265 = vmatmul.mubr.f32.gmra.mxu0 %v1193
        %v1266 = vpop.f32.mrf.mxu0
        %v1267 = vadd.f32 0.0, %v1266
        %v1268 = vpop.f32.mrf.mxu0
        %1269 = vdwg.mxu0
        %v1270 = vadd.f32 %v1185, %v1262
        %v1271 = vadd.f32 %v1186, %v1267
        %v1272 = vld [vmem:[%s1 + $0xf0] sm:$0xff]
        %v1273 = vld [vmem:[%s1 + $0xf8] sm:$0xff]
        %v1275 = vsel %vm684, %v592, 0
        %v1278 = vsel %vm684, %v597, 0
        %1280 = vmatprep.subr.mxu0 0.0
        %1281 = vmatpush1.msra.mxu0 0.0
        %1282 = vmatprep.subr.mxu0 0.0
        %1283 = vmatpush1.msra.mxu0 0.0
        %1284 = vmatprep.subr.mxu0 0.0
        %1285 = vmatpush1.msra.mxu0 0.0
        %1286 = vmatprep.subr.mxu0 0.0
        %1287 = vmatpush1.msra.mxu0 0.0
        %1288 = vmatprep.subr.mxu0 0.0
        %1289 = vmatpush1.msra.mxu0 0.0
        %1290 = vmatprep.subr.mxu0 0.0
        %1291 = vmatpush1.msra.mxu0 0.0
        %1292 = vmatprep.subr.mxu0 0.0
        %1293 = vmatpush1.msra.mxu0 0.0
        %1294 = vmatprep.subr.mxu0 0.0
        %1295 = vmatpush1.msra.mxu0 0.0
        %1296 = vmatprep.subr.mxu0 0.0
        %1297 = vmatpush1.msra.mxu0 0.0
        %1298 = vmatprep.subr.mxu0 0.0
        %1299 = vmatpush1.msra.mxu0 0.0
        %1300 = vmatprep.subr.mxu0 0.0
        %1301 = vmatpush1.msra.mxu0 0.0
        %1302 = vmatprep.subr.mxu0 0.0
        %1303 = vmatpush1.msra.mxu0 0.0
        %1304 = vmatprep.subr.mxu0 0.0
        %1305 = vmatpush1.msra.mxu0 0.0
        %1306 = vmatprep.subr.mxu0 0.0
        %1307 = vmatpush1.msra.mxu0 0.0
        %1308 = vmatprep.subr.mxu0 0.0
        %1309 = vmatpush1.msra.mxu0 %v1273
        %1310 = vmatprep.subr.mxu0 0.0
        %1311 = vmatpush1.msra.mxu0 %v1272
        %1312 = vmatprep.subr.mxu0 0.0
        %1313 = vmatpush2.msra.mxu0 0.0
        %1314 = vmatprep.subr.mxu0 0.0
        %1315 = vmatpush2.msra.mxu0 0.0
        %1316 = vmatprep.subr.mxu0 0.0
        %1317 = vmatpush2.msra.mxu0 0.0
        %1318 = vmatprep.subr.mxu0 0.0
        %1319 = vmatpush2.msra.mxu0 0.0
        %1320 = vmatprep.subr.mxu0 0.0
        %1321 = vmatpush2.msra.mxu0 0.0
        %1322 = vmatprep.subr.mxu0 0.0
        %1323 = vmatpush2.msra.mxu0 0.0
        %1324 = vmatprep.subr.mxu0 0.0
        %1325 = vmatpush2.msra.mxu0 0.0
        %1326 = vmatprep.subr.mxu0 0.0
        %1327 = vmatpush2.msra.mxu0 0.0
        %1328 = vmatprep.subr.mxu0 0.0
        %1329 = vmatpush2.msra.mxu0 0.0
        %1330 = vmatprep.subr.mxu0 0.0
        %1331 = vmatpush2.msra.mxu0 0.0
        %1332 = vmatprep.subr.mxu0 0.0
        %1333 = vmatpush2.msra.mxu0 0.0
        %1334 = vmatprep.subr.mxu0 0.0
        %1335 = vmatpush2.msra.mxu0 0.0
        %1336 = vmatprep.subr.mxu0 0.0
        %1337 = vmatpush2.msra.mxu0 0.0
        %1338 = vmatprep.subr.mxu0 0.0
        %1339 = vmatpush2.msra.mxu0 0.0
        %1340 = vmatprep.subr.mxu0 0.0
        %1341 = vmatpush2.msra.mxu0 0.0
        %1342 = vmatprep.subr.mxu0 0.0
        %1343 = vmatpush2.msra.mxu0 0.0
        %1344 = vmatprep.mubr.f32.mxu0 0.0
        %1345 = vmatmul.mubr.f32.gmra.mxu0 %v1275
        %v1346 = vpop.f32.mrf.mxu0
        %v1347 = vadd.f32 0.0, %v1346
        %v1348 = vpop.f32.mrf.mxu0
        %1349 = vmatprep.mubr.f32.mxu0 0.0
        %1350 = vmatmul.mubr.f32.gmra.mxu0 %v1278
        %v1351 = vpop.f32.mrf.mxu0
        %v1352 = vadd.f32 0.0, %v1351
        %v1353 = vpop.f32.mrf.mxu0
        %1354 = vdwg.mxu0
        %v1355 = vadd.f32 %v1270, %v1347
        %v1356 = vadd.f32 %v1271, %v1352
        %v1357 = vld [vmem:[%s1 + $0x100] sm:$0xff]
        %v1358 = vld [vmem:[%s1 + $0x108] sm:$0xff]
        %v1360 = vsel %vm684, %v602, 0
        %v1363 = vsel %vm684, %v607, 0
        %1365 = vmatprep.subr.mxu0 0.0
        %1366 = vmatpush1.msra.mxu0 0.0
        %1367 = vmatprep.subr.mxu0 0.0
        %1368 = vmatpush1.msra.mxu0 0.0
        %1369 = vmatprep.subr.mxu0 0.0
        %1370 = vmatpush1.msra.mxu0 0.0
        %1371 = vmatprep.subr.mxu0 0.0
        %1372 = vmatpush1.msra.mxu0 0.0
        %1373 = vmatprep.subr.mxu0 0.0
        %1374 = vmatpush1.msra.mxu0 0.0
        %1375 = vmatprep.subr.mxu0 0.0
        %1376 = vmatpush1.msra.mxu0 0.0
        %1377 = vmatprep.subr.mxu0 0.0
        %1378 = vmatpush1.msra.mxu0 0.0
        %1379 = vmatprep.subr.mxu0 0.0
        %1380 = vmatpush1.msra.mxu0 0.0
        %1381 = vmatprep.subr.mxu0 0.0
        %1382 = vmatpush1.msra.mxu0 0.0
        %1383 = vmatprep.subr.mxu0 0.0
        %1384 = vmatpush1.msra.mxu0 0.0
        %1385 = vmatprep.subr.mxu0 0.0
        %1386 = vmatpush1.msra.mxu0 0.0
        %1387 = vmatprep.subr.mxu0 0.0
        %1388 = vmatpush1.msra.mxu0 0.0
        %1389 = vmatprep.subr.mxu0 0.0
        %1390 = vmatpush1.msra.mxu0 0.0
        %1391 = vmatprep.subr.mxu0 0.0
        %1392 = vmatpush1.msra.mxu0 0.0
        %1393 = vmatprep.subr.mxu0 0.0
        %1394 = vmatpush1.msra.mxu0 %v1358
        %1395 = vmatprep.subr.mxu0 0.0
        %1396 = vmatpush1.msra.mxu0 %v1357
        %1397 = vmatprep.subr.mxu0 0.0
        %1398 = vmatpush2.msra.mxu0 0.0
        %1399 = vmatprep.subr.mxu0 0.0
        %1400 = vmatpush2.msra.mxu0 0.0
        %1401 = vmatprep.subr.mxu0 0.0
        %1402 = vmatpush2.msra.mxu0 0.0
        %1403 = vmatprep.subr.mxu0 0.0
        %1404 = vmatpush2.msra.mxu0 0.0
        %1405 = vmatprep.subr.mxu0 0.0
        %1406 = vmatpush2.msra.mxu0 0.0
        %1407 = vmatprep.subr.mxu0 0.0
        %1408 = vmatpush2.msra.mxu0 0.0
        %1409 = vmatprep.subr.mxu0 0.0
        %1410 = vmatpush2.msra.mxu0 0.0
        %1411 = vmatprep.subr.mxu0 0.0
        %1412 = vmatpush2.msra.mxu0 0.0
        %1413 = vmatprep.subr.mxu0 0.0
        %1414 = vmatpush2.msra.mxu0 0.0
        %1415 = vmatprep.subr.mxu0 0.0
        %1416 = vmatpush2.msra.mxu0 0.0
        %1417 = vmatprep.subr.mxu0 0.0
        %1418 = vmatpush2.msra.mxu0 0.0
        %1419 = vmatprep.subr.mxu0 0.0
        %1420 = vmatpush2.msra.mxu0 0.0
        %1421 = vmatprep.subr.mxu0 0.0
        %1422 = vmatpush2.msra.mxu0 0.0
        %1423 = vmatprep.subr.mxu0 0.0
        %1424 = vmatpush2.msra.mxu0 0.0
        %1425 = vmatprep.subr.mxu0 0.0
        %1426 = vmatpush2.msra.mxu0 0.0
        %1427 = vmatprep.subr.mxu0 0.0
        %1428 = vmatpush2.msra.mxu0 0.0
        %1429 = vmatprep.mubr.f32.mxu0 0.0
        %1430 = vmatmul.mubr.f32.gmra.mxu0 %v1360
        %v1431 = vpop.f32.mrf.mxu0
        %v1432 = vadd.f32 0.0, %v1431
        %v1433 = vpop.f32.mrf.mxu0
        %1434 = vmatprep.mubr.f32.mxu0 0.0
        %1435 = vmatmul.mubr.f32.gmra.mxu0 %v1363
        %v1436 = vpop.f32.mrf.mxu0
        %v1437 = vadd.f32 0.0, %v1436
        %v1438 = vpop.f32.mrf.mxu0
        %1439 = vdwg.mxu0
        %v1440 = vadd.f32 %v1355, %v1432
        %v1441 = vadd.f32 %v1356, %v1437
        %v1442 = vld [vmem:[%s1 + $0x110] sm:$0xff]
        %v1443 = vld [vmem:[%s1 + $0x118] sm:$0xff]
        %v1445 = vsel %vm684, %v612, 0
        %v1448 = vsel %vm684, %v617, 0
        %1450 = vmatprep.subr.mxu0 0.0
        %1451 = vmatpush1.msra.mxu0 0.0
        %1452 = vmatprep.subr.mxu0 0.0
        %1453 = vmatpush1.msra.mxu0 0.0
        %1454 = vmatprep.subr.mxu0 0.0
        %1455 = vmatpush1.msra.mxu0 0.0
        %1456 = vmatprep.subr.mxu0 0.0
        %1457 = vmatpush1.msra.mxu0 0.0
        %1458 = vmatprep.subr.mxu0 0.0
        %1459 = vmatpush1.msra.mxu0 0.0
        %1460 = vmatprep.subr.mxu0 0.0
        %1461 = vmatpush1.msra.mxu0 0.0
        %1462 = vmatprep.subr.mxu0 0.0
        %1463 = vmatpush1.msra.mxu0 0.0
        %1464 = vmatprep.subr.mxu0 0.0
        %1465 = vmatpush1.msra.mxu0 0.0
        %1466 = vmatprep.subr.mxu0 0.0
        %1467 = vmatpush1.msra.mxu0 0.0
        %1468 = vmatprep.subr.mxu0 0.0
        %1469 = vmatpush1.msra.mxu0 0.0
        %1470 = vmatprep.subr.mxu0 0.0
        %1471 = vmatpush1.msra.mxu0 0.0
        %1472 = vmatprep.subr.mxu0 0.0
        %1473 = vmatpush1.msra.mxu0 0.0
        %1474 = vmatprep.subr.mxu0 0.0
        %1475 = vmatpush1.msra.mxu0 0.0
        %1476 = vmatprep.subr.mxu0 0.0
        %1477 = vmatpush1.msra.mxu0 0.0
        %1478 = vmatprep.subr.mxu0 0.0
        %1479 = vmatpush1.msra.mxu0 %v1443
        %1480 = vmatprep.subr.mxu0 0.0
        %1481 = vmatpush1.msra.mxu0 %v1442
        %1482 = vmatprep.subr.mxu0 0.0
        %1483 = vmatpush2.msra.mxu0 0.0
        %1484 = vmatprep.subr.mxu0 0.0
        %1485 = vmatpush2.msra.mxu0 0.0
        %1486 = vmatprep.subr.mxu0 0.0
        %1487 = vmatpush2.msra.mxu0 0.0
        %1488 = vmatprep.subr.mxu0 0.0
        %1489 = vmatpush2.msra.mxu0 0.0
        %1490 = vmatprep.subr.mxu0 0.0
        %1491 = vmatpush2.msra.mxu0 0.0
        %1492 = vmatprep.subr.mxu0 0.0
        %1493 = vmatpush2.msra.mxu0 0.0
        %1494 = vmatprep.subr.mxu0 0.0
        %1495 = vmatpush2.msra.mxu0 0.0
        %1496 = vmatprep.subr.mxu0 0.0
        %1497 = vmatpush2.msra.mxu0 0.0
        %1498 = vmatprep.subr.mxu0 0.0
        %1499 = vmatpush2.msra.mxu0 0.0
        %1500 = vmatprep.subr.mxu0 0.0
        %1501 = vmatpush2.msra.mxu0 0.0
        %1502 = vmatprep.subr.mxu0 0.0
        %1503 = vmatpush2.msra.mxu0 0.0
        %1504 = vmatprep.subr.mxu0 0.0
        %1505 = vmatpush2.msra.mxu0 0.0
        %1506 = vmatprep.subr.mxu0 0.0
        %1507 = vmatpush2.msra.mxu0 0.0
        %1508 = vmatprep.subr.mxu0 0.0
        %1509 = vmatpush2.msra.mxu0 0.0
        %1510 = vmatprep.subr.mxu0 0.0
        %1511 = vmatpush2.msra.mxu0 0.0
        %1512 = vmatprep.subr.mxu0 0.0
        %1513 = vmatpush2.msra.mxu0 0.0
        %1514 = vmatprep.mubr.f32.mxu0 0.0
        %1515 = vmatmul.mubr.f32.gmra.mxu0 %v1445
        %v1516 = vpop.f32.mrf.mxu0
        %v1517 = vadd.f32 0.0, %v1516
        %v1518 = vpop.f32.mrf.mxu0
        %1519 = vmatprep.mubr.f32.mxu0 0.0
        %1520 = vmatmul.mubr.f32.gmra.mxu0 %v1448
        %v1521 = vpop.f32.mrf.mxu0
        %v1522 = vadd.f32 0.0, %v1521
        %v1523 = vpop.f32.mrf.mxu0
        %1524 = vdwg.mxu0
        %v1525 = vadd.f32 %v1440, %v1517
        %v1526 = vadd.f32 %v1441, %v1522
        %v1527 = vld [vmem:[%s1 + $0x120] sm:$0xff]
        %v1528 = vld [vmem:[%s1 + $0x128] sm:$0xff]
        %v1530 = vsel %vm684, %v622, 0
        %v1533 = vsel %vm684, %v627, 0
        %1535 = vmatprep.subr.mxu0 0.0
        %1536 = vmatpush1.msra.mxu0 0.0
        %1537 = vmatprep.subr.mxu0 0.0
        %1538 = vmatpush1.msra.mxu0 0.0
        %1539 = vmatprep.subr.mxu0 0.0
        %1540 = vmatpush1.msra.mxu0 0.0
        %1541 = vmatprep.subr.mxu0 0.0
        %1542 = vmatpush1.msra.mxu0 0.0
        %1543 = vmatprep.subr.mxu0 0.0
        %1544 = vmatpush1.msra.mxu0 0.0
        %1545 = vmatprep.subr.mxu0 0.0
        %1546 = vmatpush1.msra.mxu0 0.0
        %1547 = vmatprep.subr.mxu0 0.0
        %1548 = vmatpush1.msra.mxu0 0.0
        %1549 = vmatprep.subr.mxu0 0.0
        %1550 = vmatpush1.msra.mxu0 0.0
        %1551 = vmatprep.subr.mxu0 0.0
        %1552 = vmatpush1.msra.mxu0 0.0
        %1553 = vmatprep.subr.mxu0 0.0
        %1554 = vmatpush1.msra.mxu0 0.0
        %1555 = vmatprep.subr.mxu0 0.0
        %1556 = vmatpush1.msra.mxu0 0.0
        %1557 = vmatprep.subr.mxu0 0.0
        %1558 = vmatpush1.msra.mxu0 0.0
        %1559 = vmatprep.subr.mxu0 0.0
        %1560 = vmatpush1.msra.mxu0 0.0
        %1561 = vmatprep.subr.mxu0 0.0
        %1562 = vmatpush1.msra.mxu0 0.0
        %1563 = vmatprep.subr.mxu0 0.0
        %1564 = vmatpush1.msra.mxu0 %v1528
        %1565 = vmatprep.subr.mxu0 0.0
        %1566 = vmatpush1.msra.mxu0 %v1527
        %1567 = vmatprep.subr.mxu0 0.0
        %1568 = vmatpush2.msra.mxu0 0.0
        %1569 = vmatprep.subr.mxu0 0.0
        %1570 = vmatpush2.msra.mxu0 0.0
        %1571 = vmatprep.subr.mxu0 0.0
        %1572 = vmatpush2.msra.mxu0 0.0
        %1573 = vmatprep.subr.mxu0 0.0
        %1574 = vmatpush2.msra.mxu0 0.0
        %1575 = vmatprep.subr.mxu0 0.0
        %1576 = vmatpush2.msra.mxu0 0.0
        %1577 = vmatprep.subr.mxu0 0.0
        %1578 = vmatpush2.msra.mxu0 0.0
        %1579 = vmatprep.subr.mxu0 0.0
        %1580 = vmatpush2.msra.mxu0 0.0
        %1581 = vmatprep.subr.mxu0 0.0
        %1582 = vmatpush2.msra.mxu0 0.0
        %1583 = vmatprep.subr.mxu0 0.0
        %1584 = vmatpush2.msra.mxu0 0.0
        %1585 = vmatprep.subr.mxu0 0.0
        %1586 = vmatpush2.msra.mxu0 0.0
        %1587 = vmatprep.subr.mxu0 0.0
        %1588 = vmatpush2.msra.mxu0 0.0
        %1589 = vmatprep.subr.mxu0 0.0
        %1590 = vmatpush2.msra.mxu0 0.0
        %1591 = vmatprep.subr.mxu0 0.0
        %1592 = vmatpush2.msra.mxu0 0.0
        %1593 = vmatprep.subr.mxu0 0.0
        %1594 = vmatpush2.msra.mxu0 0.0
        %1595 = vmatprep.subr.mxu0 0.0
        %1596 = vmatpush2.msra.mxu0 0.0
        %1597 = vmatprep.subr.mxu0 0.0
        %1598 = vmatpush2.msra.mxu0 0.0
        %1599 = vmatprep.mubr.f32.mxu0 0.0
        %1600 = vmatmul.mubr.f32.gmra.mxu0 %v1530
        %v1601 = vpop.f32.mrf.mxu0
        %v1602 = vadd.f32 0.0, %v1601
        %v1603 = vpop.f32.mrf.mxu0
        %1604 = vmatprep.mubr.f32.mxu0 0.0
        %1605 = vmatmul.mubr.f32.gmra.mxu0 %v1533
        %v1606 = vpop.f32.mrf.mxu0
        %v1607 = vadd.f32 0.0, %v1606
        %v1608 = vpop.f32.mrf.mxu0
        %1609 = vdwg.mxu0
        %v1610 = vadd.f32 %v1525, %v1602
        %v1611 = vadd.f32 %v1526, %v1607
        %v1612 = vld [vmem:[%s1 + $0x130] sm:$0xff]
        %v1613 = vld [vmem:[%s1 + $0x138] sm:$0xff]
        %v1615 = vsel %vm684, %v632, 0
        %v1618 = vsel %vm684, %v637, 0
        %1620 = vmatprep.subr.mxu0 0.0
        %1621 = vmatpush1.msra.mxu0 0.0
        %1622 = vmatprep.subr.mxu0 0.0
        %1623 = vmatpush1.msra.mxu0 0.0
        %1624 = vmatprep.subr.mxu0 0.0
        %1625 = vmatpush1.msra.mxu0 0.0
        %1626 = vmatprep.subr.mxu0 0.0
        %1627 = vmatpush1.msra.mxu0 0.0
        %1628 = vmatprep.subr.mxu0 0.0
        %1629 = vmatpush1.msra.mxu0 0.0
        %1630 = vmatprep.subr.mxu0 0.0
        %1631 = vmatpush1.msra.mxu0 0.0
        %1632 = vmatprep.subr.mxu0 0.0
        %1633 = vmatpush1.msra.mxu0 0.0
        %1634 = vmatprep.subr.mxu0 0.0
        %1635 = vmatpush1.msra.mxu0 0.0
        %1636 = vmatprep.subr.mxu0 0.0
        %1637 = vmatpush1.msra.mxu0 0.0
        %1638 = vmatprep.subr.mxu0 0.0
        %1639 = vmatpush1.msra.mxu0 0.0
        %1640 = vmatprep.subr.mxu0 0.0
        %1641 = vmatpush1.msra.mxu0 0.0
        %1642 = vmatprep.subr.mxu0 0.0
        %1643 = vmatpush1.msra.mxu0 0.0
        %1644 = vmatprep.subr.mxu0 0.0
        %1645 = vmatpush1.msra.mxu0 0.0
        %1646 = vmatprep.subr.mxu0 0.0
        %1647 = vmatpush1.msra.mxu0 0.0
        %1648 = vmatprep.subr.mxu0 0.0
        %1649 = vmatpush1.msra.mxu0 %v1613
        %1650 = vmatprep.subr.mxu0 0.0
        %1651 = vmatpush1.msra.mxu0 %v1612
        %1652 = vmatprep.subr.mxu0 0.0
        %1653 = vmatpush2.msra.mxu0 0.0
        %1654 = vmatprep.subr.mxu0 0.0
        %1655 = vmatpush2.msra.mxu0 0.0
        %1656 = vmatprep.subr.mxu0 0.0
        %1657 = vmatpush2.msra.mxu0 0.0
        %1658 = vmatprep.subr.mxu0 0.0
        %1659 = vmatpush2.msra.mxu0 0.0
        %1660 = vmatprep.subr.mxu0 0.0
        %1661 = vmatpush2.msra.mxu0 0.0
        %1662 = vmatprep.subr.mxu0 0.0
        %1663 = vmatpush2.msra.mxu0 0.0
        %1664 = vmatprep.subr.mxu0 0.0
        %1665 = vmatpush2.msra.mxu0 0.0
        %1666 = vmatprep.subr.mxu0 0.0
        %1667 = vmatpush2.msra.mxu0 0.0
        %1668 = vmatprep.subr.mxu0 0.0
        %1669 = vmatpush2.msra.mxu0 0.0
        %1670 = vmatprep.subr.mxu0 0.0
        %1671 = vmatpush2.msra.mxu0 0.0
        %1672 = vmatprep.subr.mxu0 0.0
        %1673 = vmatpush2.msra.mxu0 0.0
        %1674 = vmatprep.subr.mxu0 0.0
        %1675 = vmatpush2.msra.mxu0 0.0
        %1676 = vmatprep.subr.mxu0 0.0
        %1677 = vmatpush2.msra.mxu0 0.0
        %1678 = vmatprep.subr.mxu0 0.0
        %1679 = vmatpush2.msra.mxu0 0.0
        %1680 = vmatprep.subr.mxu0 0.0
        %1681 = vmatpush2.msra.mxu0 0.0
        %1682 = vmatprep.subr.mxu0 0.0
        %1683 = vmatpush2.msra.mxu0 0.0
        %1684 = vmatprep.mubr.f32.mxu0 0.0
        %1685 = vmatmul.mubr.f32.gmra.mxu0 %v1615
        %v1686 = vpop.f32.mrf.mxu0
        %v1687 = vadd.f32 0.0, %v1686
        %v1688 = vpop.f32.mrf.mxu0
        %1689 = vmatprep.mubr.f32.mxu0 0.0
        %1690 = vmatmul.mubr.f32.gmra.mxu0 %v1618
        %v1691 = vpop.f32.mrf.mxu0
        %v1692 = vadd.f32 0.0, %v1691
        %v1693 = vpop.f32.mrf.mxu0
        %1694 = vdwg.mxu0
        %v1695 = vadd.f32 %v1610, %v1687
        %v1696 = vadd.f32 %v1611, %v1692
        %v1697 = vld [vmem:[%s1 + $0x140] sm:$0xff]
        %v1698 = vld [vmem:[%s1 + $0x148] sm:$0xff]
        %v1700 = vsel %vm684, %v642, 0
        %v1703 = vsel %vm684, %v647, 0
        %1705 = vmatprep.subr.mxu0 0.0
        %1706 = vmatpush1.msra.mxu0 0.0
        %1707 = vmatprep.subr.mxu0 0.0
        %1708 = vmatpush1.msra.mxu0 0.0
        %1709 = vmatprep.subr.mxu0 0.0
        %1710 = vmatpush1.msra.mxu0 0.0
        %1711 = vmatprep.subr.mxu0 0.0
        %1712 = vmatpush1.msra.mxu0 0.0
        %1713 = vmatprep.subr.mxu0 0.0
        %1714 = vmatpush1.msra.mxu0 0.0
        %1715 = vmatprep.subr.mxu0 0.0
        %1716 = vmatpush1.msra.mxu0 0.0
        %1717 = vmatprep.subr.mxu0 0.0
        %1718 = vmatpush1.msra.mxu0 0.0
        %1719 = vmatprep.subr.mxu0 0.0
        %1720 = vmatpush1.msra.mxu0 0.0
        %1721 = vmatprep.subr.mxu0 0.0
        %1722 = vmatpush1.msra.mxu0 0.0
        %1723 = vmatprep.subr.mxu0 0.0
        %1724 = vmatpush1.msra.mxu0 0.0
        %1725 = vmatprep.subr.mxu0 0.0
        %1726 = vmatpush1.msra.mxu0 0.0
        %1727 = vmatprep.subr.mxu0 0.0
        %1728 = vmatpush1.msra.mxu0 0.0
        %1729 = vmatprep.subr.mxu0 0.0
        %1730 = vmatpush1.msra.mxu0 0.0
        %1731 = vmatprep.subr.mxu0 0.0
        %1732 = vmatpush1.msra.mxu0 0.0
        %1733 = vmatprep.subr.mxu0 0.0
        %1734 = vmatpush1.msra.mxu0 %v1698
        %1735 = vmatprep.subr.mxu0 0.0
        %1736 = vmatpush1.msra.mxu0 %v1697
        %1737 = vmatprep.subr.mxu0 0.0
        %1738 = vmatpush2.msra.mxu0 0.0
        %1739 = vmatprep.subr.mxu0 0.0
        %1740 = vmatpush2.msra.mxu0 0.0
        %1741 = vmatprep.subr.mxu0 0.0
        %1742 = vmatpush2.msra.mxu0 0.0
        %1743 = vmatprep.subr.mxu0 0.0
        %1744 = vmatpush2.msra.mxu0 0.0
        %1745 = vmatprep.subr.mxu0 0.0
        %1746 = vmatpush2.msra.mxu0 0.0
        %1747 = vmatprep.subr.mxu0 0.0
        %1748 = vmatpush2.msra.mxu0 0.0
        %1749 = vmatprep.subr.mxu0 0.0
        %1750 = vmatpush2.msra.mxu0 0.0
        %1751 = vmatprep.subr.mxu0 0.0
        %1752 = vmatpush2.msra.mxu0 0.0
        %1753 = vmatprep.subr.mxu0 0.0
        %1754 = vmatpush2.msra.mxu0 0.0
        %1755 = vmatprep.subr.mxu0 0.0
        %1756 = vmatpush2.msra.mxu0 0.0
        %1757 = vmatprep.subr.mxu0 0.0
        %1758 = vmatpush2.msra.mxu0 0.0
        %1759 = vmatprep.subr.mxu0 0.0
        %1760 = vmatpush2.msra.mxu0 0.0
        %1761 = vmatprep.subr.mxu0 0.0
        %1762 = vmatpush2.msra.mxu0 0.0
        %1763 = vmatprep.subr.mxu0 0.0
        %1764 = vmatpush2.msra.mxu0 0.0
        %1765 = vmatprep.subr.mxu0 0.0
        %1766 = vmatpush2.msra.mxu0 0.0
        %1767 = vmatprep.subr.mxu0 0.0
        %1768 = vmatpush2.msra.mxu0 0.0
        %1769 = vmatprep.mubr.f32.mxu0 0.0
        %1770 = vmatmul.mubr.f32.gmra.mxu0 %v1700
        %v1771 = vpop.f32.mrf.mxu0
        %v1772 = vadd.f32 0.0, %v1771
        %v1773 = vpop.f32.mrf.mxu0
        %1774 = vmatprep.mubr.f32.mxu0 0.0
        %1775 = vmatmul.mubr.f32.gmra.mxu0 %v1703
        %v1776 = vpop.f32.mrf.mxu0
        %v1777 = vadd.f32 0.0, %v1776
        %v1778 = vpop.f32.mrf.mxu0
        %1779 = vdwg.mxu0
        %v1780 = vadd.f32 %v1695, %v1772
        %v1781 = vadd.f32 %v1696, %v1777
        %v1782 = vld [vmem:[%s1 + $0x150] sm:$0xff]
        %v1783 = vld [vmem:[%s1 + $0x158] sm:$0xff]
        %v1785 = vsel %vm684, %v652, 0
        %v1788 = vsel %vm684, %v657, 0
        %1790 = vmatprep.subr.mxu0 0.0
        %1791 = vmatpush1.msra.mxu0 0.0
        %1792 = vmatprep.subr.mxu0 0.0
        %1793 = vmatpush1.msra.mxu0 0.0
        %1794 = vmatprep.subr.mxu0 0.0
        %1795 = vmatpush1.msra.mxu0 0.0
        %1796 = vmatprep.subr.mxu0 0.0
        %1797 = vmatpush1.msra.mxu0 0.0
        %1798 = vmatprep.subr.mxu0 0.0
        %1799 = vmatpush1.msra.mxu0 0.0
        %1800 = vmatprep.subr.mxu0 0.0
        %1801 = vmatpush1.msra.mxu0 0.0
        %1802 = vmatprep.subr.mxu0 0.0
        %1803 = vmatpush1.msra.mxu0 0.0
        %1804 = vmatprep.subr.mxu0 0.0
        %1805 = vmatpush1.msra.mxu0 0.0
        %1806 = vmatprep.subr.mxu0 0.0
        %1807 = vmatpush1.msra.mxu0 0.0
        %1808 = vmatprep.subr.mxu0 0.0
        %1809 = vmatpush1.msra.mxu0 0.0
        %1810 = vmatprep.subr.mxu0 0.0
        %1811 = vmatpush1.msra.mxu0 0.0
        %1812 = vmatprep.subr.mxu0 0.0
        %1813 = vmatpush1.msra.mxu0 0.0
        %1814 = vmatprep.subr.mxu0 0.0
        %1815 = vmatpush1.msra.mxu0 0.0
        %1816 = vmatprep.subr.mxu0 0.0
        %1817 = vmatpush1.msra.mxu0 0.0
        %1818 = vmatprep.subr.mxu0 0.0
        %1819 = vmatpush1.msra.mxu0 %v1783
        %1820 = vmatprep.subr.mxu0 0.0
        %1821 = vmatpush1.msra.mxu0 %v1782
        %1822 = vmatprep.subr.mxu0 0.0
        %1823 = vmatpush2.msra.mxu0 0.0
        %1824 = vmatprep.subr.mxu0 0.0
        %1825 = vmatpush2.msra.mxu0 0.0
        %1826 = vmatprep.subr.mxu0 0.0
        %1827 = vmatpush2.msra.mxu0 0.0
        %1828 = vmatprep.subr.mxu0 0.0
        %1829 = vmatpush2.msra.mxu0 0.0
        %1830 = vmatprep.subr.mxu0 0.0
        %1831 = vmatpush2.msra.mxu0 0.0
        %1832 = vmatprep.subr.mxu0 0.0
        %1833 = vmatpush2.msra.mxu0 0.0
        %1834 = vmatprep.subr.mxu0 0.0
        %1835 = vmatpush2.msra.mxu0 0.0
        %1836 = vmatprep.subr.mxu0 0.0
        %1837 = vmatpush2.msra.mxu0 0.0
        %1838 = vmatprep.subr.mxu0 0.0
        %1839 = vmatpush2.msra.mxu0 0.0
        %1840 = vmatprep.subr.mxu0 0.0
        %1841 = vmatpush2.msra.mxu0 0.0
        %1842 = vmatprep.subr.mxu0 0.0
        %1843 = vmatpush2.msra.mxu0 0.0
        %1844 = vmatprep.subr.mxu0 0.0
        %1845 = vmatpush2.msra.mxu0 0.0
        %1846 = vmatprep.subr.mxu0 0.0
        %1847 = vmatpush2.msra.mxu0 0.0
        %1848 = vmatprep.subr.mxu0 0.0
        %1849 = vmatpush2.msra.mxu0 0.0
        %1850 = vmatprep.subr.mxu0 0.0
        %1851 = vmatpush2.msra.mxu0 0.0
        %1852 = vmatprep.subr.mxu0 0.0
        %1853 = vmatpush2.msra.mxu0 0.0
        %1854 = vmatprep.mubr.f32.mxu0 0.0
        %1855 = vmatmul.mubr.f32.gmra.mxu0 %v1785
        %v1856 = vpop.f32.mrf.mxu0
        %v1857 = vadd.f32 0.0, %v1856
        %v1858 = vpop.f32.mrf.mxu0
        %1859 = vmatprep.mubr.f32.mxu0 0.0
        %1860 = vmatmul.mubr.f32.gmra.mxu0 %v1788
        %v1861 = vpop.f32.mrf.mxu0
        %v1862 = vadd.f32 0.0, %v1861
        %v1863 = vpop.f32.mrf.mxu0
        %1864 = vdwg.mxu0
        %v1865 = vadd.f32 %v1780, %v1857
        %v1866 = vadd.f32 %v1781, %v1862
        %v1867 = vld [vmem:[%s1 + $0x160] sm:$0xff]
        %v1868 = vld [vmem:[%s1 + $0x168] sm:$0xff]
        %v1870 = vsel %vm684, %v662, 0
        %v1873 = vsel %vm684, %v667, 0
        %1875 = vmatprep.subr.mxu0 0.0
        %1876 = vmatpush1.msra.mxu0 0.0
        %1877 = vmatprep.subr.mxu0 0.0
        %1878 = vmatpush1.msra.mxu0 0.0
        %1879 = vmatprep.subr.mxu0 0.0
        %1880 = vmatpush1.msra.mxu0 0.0
        %1881 = vmatprep.subr.mxu0 0.0
        %1882 = vmatpush1.msra.mxu0 0.0
        %1883 = vmatprep.subr.mxu0 0.0
        %1884 = vmatpush1.msra.mxu0 0.0
        %1885 = vmatprep.subr.mxu0 0.0
        %1886 = vmatpush1.msra.mxu0 0.0
        %1887 = vmatprep.subr.mxu0 0.0
        %1888 = vmatpush1.msra.mxu0 0.0
        %1889 = vmatprep.subr.mxu0 0.0
        %1890 = vmatpush1.msra.mxu0 0.0
        %1891 = vmatprep.subr.mxu0 0.0
        %1892 = vmatpush1.msra.mxu0 0.0
        %1893 = vmatprep.subr.mxu0 0.0
        %1894 = vmatpush1.msra.mxu0 0.0
        %1895 = vmatprep.subr.mxu0 0.0
        %1896 = vmatpush1.msra.mxu0 0.0
        %1897 = vmatprep.subr.mxu0 0.0
        %1898 = vmatpush1.msra.mxu0 0.0
        %1899 = vmatprep.subr.mxu0 0.0
        %1900 = vmatpush1.msra.mxu0 0.0
        %1901 = vmatprep.subr.mxu0 0.0
        %1902 = vmatpush1.msra.mxu0 0.0
        %1903 = vmatprep.subr.mxu0 0.0
        %1904 = vmatpush1.msra.mxu0 %v1868
        %1905 = vmatprep.subr.mxu0 0.0
        %1906 = vmatpush1.msra.mxu0 %v1867
        %1907 = vmatprep.subr.mxu0 0.0
        %1908 = vmatpush2.msra.mxu0 0.0
        %1909 = vmatprep.subr.mxu0 0.0
        %1910 = vmatpush2.msra.mxu0 0.0
        %1911 = vmatprep.subr.mxu0 0.0
        %1912 = vmatpush2.msra.mxu0 0.0
        %1913 = vmatprep.subr.mxu0 0.0
        %1914 = vmatpush2.msra.mxu0 0.0
        %1915 = vmatprep.subr.mxu0 0.0
        %1916 = vmatpush2.msra.mxu0 0.0
        %1917 = vmatprep.subr.mxu0 0.0
        %1918 = vmatpush2.msra.mxu0 0.0
        %1919 = vmatprep.subr.mxu0 0.0
        %1920 = vmatpush2.msra.mxu0 0.0
        %1921 = vmatprep.subr.mxu0 0.0
        %1922 = vmatpush2.msra.mxu0 0.0
        %1923 = vmatprep.subr.mxu0 0.0
        %1924 = vmatpush2.msra.mxu0 0.0
        %1925 = vmatprep.subr.mxu0 0.0
        %1926 = vmatpush2.msra.mxu0 0.0
        %1927 = vmatprep.subr.mxu0 0.0
        %1928 = vmatpush2.msra.mxu0 0.0
        %1929 = vmatprep.subr.mxu0 0.0
        %1930 = vmatpush2.msra.mxu0 0.0
        %1931 = vmatprep.subr.mxu0 0.0
        %1932 = vmatpush2.msra.mxu0 0.0
        %1933 = vmatprep.subr.mxu0 0.0
        %1934 = vmatpush2.msra.mxu0 0.0
        %1935 = vmatprep.subr.mxu0 0.0
        %1936 = vmatpush2.msra.mxu0 0.0
        %1937 = vmatprep.subr.mxu0 0.0
        %1938 = vmatpush2.msra.mxu0 0.0
        %1939 = vmatprep.mubr.f32.mxu0 0.0
        %1940 = vmatmul.mubr.f32.gmra.mxu0 %v1870
        %v1941 = vpop.f32.mrf.mxu0
        %v1942 = vadd.f32 0.0, %v1941
        %v1943 = vpop.f32.mrf.mxu0
        %1944 = vmatprep.mubr.f32.mxu0 0.0
        %1945 = vmatmul.mubr.f32.gmra.mxu0 %v1873
        %v1946 = vpop.f32.mrf.mxu0
        %v1947 = vadd.f32 0.0, %v1946
        %v1948 = vpop.f32.mrf.mxu0
        %1949 = vdwg.mxu0
        %v1950 = vadd.f32 %v1865, %v1942
        %v1951 = vadd.f32 %v1866, %v1947
        %v1952 = vld [vmem:[%s1 + $0x170] sm:$0xff]
        %v1953 = vld [vmem:[%s1 + $0x178] sm:$0xff]
        %v1955 = vsel %vm684, %v672, 0
        %v1958 = vsel %vm684, %v677, 0
        %1960 = vmatprep.subr.mxu0 0.0
        %1961 = vmatpush1.msra.mxu0 0.0
        %1962 = vmatprep.subr.mxu0 0.0
        %1963 = vmatpush1.msra.mxu0 0.0
        %1964 = vmatprep.subr.mxu0 0.0
        %1965 = vmatpush1.msra.mxu0 0.0
        %1966 = vmatprep.subr.mxu0 0.0
        %1967 = vmatpush1.msra.mxu0 0.0
        %1968 = vmatprep.subr.mxu0 0.0
        %1969 = vmatpush1.msra.mxu0 0.0
        %1970 = vmatprep.subr.mxu0 0.0
        %1971 = vmatpush1.msra.mxu0 0.0
        %1972 = vmatprep.subr.mxu0 0.0
        %1973 = vmatpush1.msra.mxu0 0.0
        %1974 = vmatprep.subr.mxu0 0.0
        %1975 = vmatpush1.msra.mxu0 0.0
        %1976 = vmatprep.subr.mxu0 0.0
        %1977 = vmatpush1.msra.mxu0 0.0
        %1978 = vmatprep.subr.mxu0 0.0
        %1979 = vmatpush1.msra.mxu0 0.0
        %1980 = vmatprep.subr.mxu0 0.0
        %1981 = vmatpush1.msra.mxu0 0.0
        %1982 = vmatprep.subr.mxu0 0.0
        %1983 = vmatpush1.msra.mxu0 0.0
        %1984 = vmatprep.subr.mxu0 0.0
        %1985 = vmatpush1.msra.mxu0 0.0
        %1986 = vmatprep.subr.mxu0 0.0
        %1987 = vmatpush1.msra.mxu0 0.0
        %1988 = vmatprep.subr.mxu0 0.0
        %1989 = vmatpush1.msra.mxu0 %v1953
        %1990 = vmatprep.subr.mxu0 0.0
        %1991 = vmatpush1.msra.mxu0 %v1952
        %1992 = vmatprep.subr.mxu0 0.0
        %1993 = vmatpush2.msra.mxu0 0.0
        %1994 = vmatprep.subr.mxu0 0.0
        %1995 = vmatpush2.msra.mxu0 0.0
        %1996 = vmatprep.subr.mxu0 0.0
        %1997 = vmatpush2.msra.mxu0 0.0
        %1998 = vmatprep.subr.mxu0 0.0
        %1999 = vmatpush2.msra.mxu0 0.0
        %2000 = vmatprep.subr.mxu0 0.0
        %2001 = vmatpush2.msra.mxu0 0.0
        %2002 = vmatprep.subr.mxu0 0.0
        %2003 = vmatpush2.msra.mxu0 0.0
        %2004 = vmatprep.subr.mxu0 0.0
        %2005 = vmatpush2.msra.mxu0 0.0
        %2006 = vmatprep.subr.mxu0 0.0
        %2007 = vmatpush2.msra.mxu0 0.0
        %2008 = vmatprep.subr.mxu0 0.0
        %2009 = vmatpush2.msra.mxu0 0.0
        %2010 = vmatprep.subr.mxu0 0.0
        %2011 = vmatpush2.msra.mxu0 0.0
        %2012 = vmatprep.subr.mxu0 0.0
        %2013 = vmatpush2.msra.mxu0 0.0
        %2014 = vmatprep.subr.mxu0 0.0
        %2015 = vmatpush2.msra.mxu0 0.0
        %2016 = vmatprep.subr.mxu0 0.0
        %2017 = vmatpush2.msra.mxu0 0.0
        %2018 = vmatprep.subr.mxu0 0.0
        %2019 = vmatpush2.msra.mxu0 0.0
        %2020 = vmatprep.subr.mxu0 0.0
        %2021 = vmatpush2.msra.mxu0 0.0
        %2022 = vmatprep.subr.mxu0 0.0
        %2023 = vmatpush2.msra.mxu0 0.0
        %2024 = vmatprep.mubr.f32.mxu0 0.0
        %2025 = vmatmul.mubr.f32.gmra.mxu0 %v1955
        %v2026 = vpop.f32.mrf.mxu0
        %v2027 = vadd.f32 0.0, %v2026
        %v2028 = vpop.f32.mrf.mxu0
        %2029 = vmatprep.mubr.f32.mxu0 0.0
        %2030 = vmatmul.mubr.f32.gmra.mxu0 %v1958
        %v2031 = vpop.f32.mrf.mxu0
        %v2032 = vadd.f32 0.0, %v2031
        %v2033 = vpop.f32.mrf.mxu0
        %2034 = vdwg.mxu0
        %v2035 = vadd.f32 %v1950, %v2027
        %v2036 = vadd.f32 %v1951, %v2032
        %v2037 = vld [vmem:[%s2 + $0x408] sm:$0x1]
        %v2038 = vlaneseq
        %v2039 = vshrl.u32 %v2038, 7
        %v2040 = vsub.s32 0, %v2039
        %v2041 = vrot.slane %v2037, %v2040
        %v2042 = vadd.f32 %v2035, %v2041
        %v2043 = vadd.f32 %v2036, %v2041
        %vm2044 = vcmp.gt.f32.partialorder %v2042, 0.0
        %vm2045 = vcmp.gt.f32.partialorder %v2043, 0.0
        %v2046 = vmul.f32 %v2042, 0.2
        %v2047 = vmul.f32 %v2043, 0.2
        %v2048 = vsel %vm2044, %v2042, %v2046
        %v2049 = vsel %vm2045, %v2043, %v2047
        %v2050 = vld [vmem:[%s1 + $0x500] sm:$0xff]
        %v2051 = vld [vmem:[%s1 + $0x508] sm:$0xff]
        %v2052 = vld [vmem:[%s1 + $0x510] sm:$0xff]
        %v2053 = vld [vmem:[%s1 + $0x518] sm:$0xff]
        %v2054 = vld [vmem:[%s1 + $0x520] sm:$0xff]
        %v2055 = vld [vmem:[%s1 + $0x528] sm:$0xff]
        %v2056 = vld [vmem:[%s1 + $0x530] sm:$0xff]
        %v2057 = vld [vmem:[%s1 + $0x538] sm:$0xff]
        %v2058 = vld [vmem:[%s1 + $0x540] sm:$0xff]
        %v2059 = vld [vmem:[%s1 + $0x548] sm:$0xff]
        %v2060 = vld [vmem:[%s1 + $0x550] sm:$0xff]
        %v2061 = vld [vmem:[%s1 + $0x558] sm:$0xff]
        %v2062 = vld [vmem:[%s1 + $0x560] sm:$0xff]
        %v2063 = vld [vmem:[%s1 + $0x568] sm:$0xff]
        %v2064 = vld [vmem:[%s1 + $0x570] sm:$0xff]
        %v2065 = vld [vmem:[%s1 + $0x578] sm:$0xff]
        %v2067 = vsel %vm684, %v2050, 0
        %v2070 = vsel %vm684, %v2051, 0
        %v2073 = vsel %vm684, %v2052, 0
        %v2076 = vsel %vm684, %v2053, 0
        %v2079 = vsel %vm684, %v2054, 0
        %v2082 = vsel %vm684, %v2055, 0
        %v2085 = vsel %vm684, %v2056, 0
        %v2088 = vsel %vm684, %v2057, 0
        %v2091 = vsel %vm684, %v2058, 0
        %v2094 = vsel %vm684, %v2059, 0
        %v2097 = vsel %vm684, %v2060, 0
        %v2100 = vsel %vm684, %v2061, 0
        %v2103 = vsel %vm684, %v2062, 0
        %v2106 = vsel %vm684, %v2063, 0
        %v2109 = vsel %vm684, %v2064, 0
        %v2112 = vsel %vm684, %v2065, 0
        %2114 = vmatprep.subr.mxu0 0.0
        %2115 = vmatpush1.msra.mxu0 0.0
        %2116 = vmatprep.subr.mxu0 0.0
        %2117 = vmatpush1.msra.mxu0 0.0
        %2118 = vmatprep.subr.mxu0 0.0
        %2119 = vmatpush1.msra.mxu0 0.0
        %2120 = vmatprep.subr.mxu0 0.0
        %2121 = vmatpush1.msra.mxu0 0.0
        %2122 = vmatprep.subr.mxu0 0.0
        %2123 = vmatpush1.msra.mxu0 0.0
        %2124 = vmatprep.subr.mxu0 0.0
        %2125 = vmatpush1.msra.mxu0 0.0
        %2126 = vmatprep.subr.mxu0 0.0
        %2127 = vmatpush1.msra.mxu0 0.0
        %2128 = vmatprep.subr.mxu0 0.0
        %2129 = vmatpush1.msra.mxu0 0.0
        %2130 = vmatprep.subr.mxu0 0.0
        %2131 = vmatpush1.msra.mxu0 0.0
        %2132 = vmatprep.subr.mxu0 0.0
        %2133 = vmatpush1.msra.mxu0 0.0
        %2134 = vmatprep.subr.mxu0 0.0
        %2135 = vmatpush1.msra.mxu0 0.0
        %2136 = vmatprep.subr.mxu0 0.0
        %2137 = vmatpush1.msra.mxu0 0.0
        %2138 = vmatprep.subr.mxu0 0.0
        %2139 = vmatpush1.msra.mxu0 0.0
        %2140 = vmatprep.subr.mxu0 0.0
        %2141 = vmatpush1.msra.mxu0 0.0
        %2142 = vmatprep.subr.mxu0 0.0
        %2143 = vmatpush1.msra.mxu0 %v2049
        %2144 = vmatprep.subr.mxu0 0.0
        %2145 = vmatpush1.msra.mxu0 %v2048
        %2146 = vmatprep.subr.mxu0 0.0
        %2147 = vmatpush2.msra.mxu0 0.0
        %2148 = vmatprep.subr.mxu0 0.0
        %2149 = vmatpush2.msra.mxu0 0.0
        %2150 = vmatprep.subr.mxu0 0.0
        %2151 = vmatpush2.msra.mxu0 0.0
        %2152 = vmatprep.subr.mxu0 0.0
        %2153 = vmatpush2.msra.mxu0 0.0
        %2154 = vmatprep.subr.mxu0 0.0
        %2155 = vmatpush2.msra.mxu0 0.0
        %2156 = vmatprep.subr.mxu0 0.0
        %2157 = vmatpush2.msra.mxu0 0.0
        %2158 = vmatprep.subr.mxu0 0.0
        %2159 = vmatpush2.msra.mxu0 0.0
        %2160 = vmatprep.subr.mxu0 0.0
        %2161 = vmatpush2.msra.mxu0 0.0
        %2162 = vmatprep.subr.mxu0 0.0
        %2163 = vmatpush2.msra.mxu0 0.0
        %2164 = vmatprep.subr.mxu0 0.0
        %2165 = vmatpush2.msra.mxu0 0.0
        %2166 = vmatprep.subr.mxu0 0.0
        %2167 = vmatpush2.msra.mxu0 0.0
        %2168 = vmatprep.subr.mxu0 0.0
        %2169 = vmatpush2.msra.mxu0 0.0
        %2170 = vmatprep.subr.mxu0 0.0
        %2171 = vmatpush2.msra.mxu0 0.0
        %2172 = vmatprep.subr.mxu0 0.0
        %2173 = vmatpush2.msra.mxu0 0.0
        %2174 = vmatprep.subr.mxu0 0.0
        %2175 = vmatpush2.msra.mxu0 0.0
        %2176 = vmatprep.subr.mxu0 0.0
        %2177 = vmatpush2.msra.mxu0 0.0
        %2178 = vmatprep.mubr.f32.mxu0 0.0
        %2179 = vmatmul.mubr.f32.gmra.mxu0 %v2067
        %v2180 = vpop.f32.mrf.mxu0
        %v2181 = vadd.f32 0.0, %v2180
        %v2182 = vpop.f32.mrf.mxu0
        %2183 = vmatprep.mubr.f32.mxu0 0.0
        %2184 = vmatmul.mubr.f32.gmra.mxu0 %v2070
        %v2185 = vpop.f32.mrf.mxu0
        %v2186 = vadd.f32 0.0, %v2185
        %v2187 = vpop.f32.mrf.mxu0
        %2188 = vmatprep.mubr.f32.mxu0 0.0
        %2189 = vmatmul.mubr.f32.gmra.mxu0 %v2073
        %v2190 = vpop.f32.mrf.mxu0
        %v2191 = vadd.f32 0.0, %v2190
        %v2192 = vpop.f32.mrf.mxu0
        %2193 = vmatprep.mubr.f32.mxu0 0.0
        %2194 = vmatmul.mubr.f32.gmra.mxu0 %v2076
        %v2195 = vpop.f32.mrf.mxu0
        %v2196 = vadd.f32 0.0, %v2195
        %v2197 = vpop.f32.mrf.mxu0
        %2198 = vmatprep.mubr.f32.mxu0 0.0
        %2199 = vmatmul.mubr.f32.gmra.mxu0 %v2079
        %v2200 = vpop.f32.mrf.mxu0
        %v2201 = vadd.f32 0.0, %v2200
        %v2202 = vpop.f32.mrf.mxu0
        %2203 = vmatprep.mubr.f32.mxu0 0.0
        %2204 = vmatmul.mubr.f32.gmra.mxu0 %v2082
        %v2205 = vpop.f32.mrf.mxu0
        %v2206 = vadd.f32 0.0, %v2205
        %v2207 = vpop.f32.mrf.mxu0
        %2208 = vmatprep.mubr.f32.mxu0 0.0
        %2209 = vmatmul.mubr.f32.gmra.mxu0 %v2085
        %v2210 = vpop.f32.mrf.mxu0
        %v2211 = vadd.f32 0.0, %v2210
        %v2212 = vpop.f32.mrf.mxu0
        %2213 = vmatprep.mubr.f32.mxu0 0.0
        %2214 = vmatmul.mubr.f32.gmra.mxu0 %v2088
        %v2215 = vpop.f32.mrf.mxu0
        %v2216 = vadd.f32 0.0, %v2215
        %v2217 = vpop.f32.mrf.mxu0
        %2218 = vmatprep.mubr.f32.mxu0 0.0
        %2219 = vmatmul.mubr.f32.gmra.mxu0 %v2091
        %v2220 = vpop.f32.mrf.mxu0
        %v2221 = vadd.f32 0.0, %v2220
        %v2222 = vpop.f32.mrf.mxu0
        %2223 = vmatprep.mubr.f32.mxu0 0.0
        %2224 = vmatmul.mubr.f32.gmra.mxu0 %v2094
        %v2225 = vpop.f32.mrf.mxu0
        %v2226 = vadd.f32 0.0, %v2225
        %v2227 = vpop.f32.mrf.mxu0
        %2228 = vmatprep.mubr.f32.mxu0 0.0
        %2229 = vmatmul.mubr.f32.gmra.mxu0 %v2097
        %v2230 = vpop.f32.mrf.mxu0
        %v2231 = vadd.f32 0.0, %v2230
        %v2232 = vpop.f32.mrf.mxu0
        %2233 = vmatprep.mubr.f32.mxu0 0.0
        %2234 = vmatmul.mubr.f32.gmra.mxu0 %v2100
        %v2235 = vpop.f32.mrf.mxu0
        %v2236 = vadd.f32 0.0, %v2235
        %v2237 = vpop.f32.mrf.mxu0
        %2238 = vmatprep.mubr.f32.mxu0 0.0
        %2239 = vmatmul.mubr.f32.gmra.mxu0 %v2103
        %v2240 = vpop.f32.mrf.mxu0
        %v2241 = vadd.f32 0.0, %v2240
        %v2242 = vpop.f32.mrf.mxu0
        %2243 = vmatprep.mubr.f32.mxu0 0.0
        %2244 = vmatmul.mubr.f32.gmra.mxu0 %v2106
        %v2245 = vpop.f32.mrf.mxu0
        %v2246 = vadd.f32 0.0, %v2245
        %v2247 = vpop.f32.mrf.mxu0
        %2248 = vmatprep.mubr.f32.mxu0 0.0
        %2249 = vmatmul.mubr.f32.gmra.mxu0 %v2109
        %v2250 = vpop.f32.mrf.mxu0
        %v2251 = vadd.f32 0.0, %v2250
        %v2252 = vpop.f32.mrf.mxu0
        %2253 = vmatprep.mubr.f32.mxu0 0.0
        %2254 = vmatmul.mubr.f32.gmra.mxu0 %v2112
        %v2255 = vpop.f32.mrf.mxu0
        %v2256 = vadd.f32 0.0, %v2255
        %v2257 = vpop.f32.mrf.mxu0
        %2258 = vdwg.mxu0
        %v2259 = vld [vmem:[%s1 + $0x180] sm:$0xff]
        %v2260 = vld [vmem:[%s1 + $0x188] sm:$0xff]
        %v2261 = vld [vmem:[%s1 + $0x190] sm:$0xff]
        %v2262 = vld [vmem:[%s1 + $0x198] sm:$0xff]
        %v2263 = vld [vmem:[%s1 + $0x1a0] sm:$0xff]
        %v2264 = vld [vmem:[%s1 + $0x1a8] sm:$0xff]
        %v2265 = vld [vmem:[%s1 + $0x1b0] sm:$0xff]
        %v2266 = vld [vmem:[%s1 + $0x1b8] sm:$0xff]
        %vm2267 = vcmask 261120
        %v2269 = vsel %vm2267, %v2186, 0
        %2271 = vmatprep.subr.mxu0 0.0
        %2272 = vmatpush1.msra.mxu0 0.0
        %2273 = vmatprep.subr.mxu0 0.0
        %2274 = vmatpush1.msra.mxu0 0.0
        %2275 = vmatprep.subr.mxu0 0.0
        %2276 = vmatpush1.msra.mxu0 0.0
        %2277 = vmatprep.subr.mxu0 0.0
        %2278 = vmatpush1.msra.mxu0 0.0
        %2279 = vmatprep.subr.mxu0 0.0
        %2280 = vmatpush1.msra.mxu0 0.0
        %2281 = vmatprep.subr.mxu0 0.0
        %2282 = vmatpush1.msra.mxu0 0.0
        %2283 = vmatprep.subr.mxu0 0.0
        %2284 = vmatpush1.msra.mxu0 0.0
        %2285 = vmatprep.subr.mxu0 0.0
        %2286 = vmatpush1.msra.mxu0 0.0
        %2287 = vmatprep.subr.mxu0 0.0
        %2288 = vmatpush1.msra.mxu0 0.0
        %2289 = vmatprep.subr.mxu0 0.0
        %2290 = vmatpush1.msra.mxu0 0.0
        %2291 = vmatprep.subr.mxu0 0.0
        %2292 = vmatpush1.msra.mxu0 0.0
        %2293 = vmatprep.subr.mxu0 0.0
        %2294 = vmatpush1.msra.mxu0 0.0
        %2295 = vmatprep.subr.mxu0 0.0
        %2296 = vmatpush1.msra.mxu0 %v2266
        %2297 = vmatprep.subr.mxu0 0.0
        %2298 = vmatpush1.msra.mxu0 %v2265
        %2299 = vmatprep.subr.mxu0 0.0
        %2300 = vmatpush1.msra.mxu0 %v2264
        %2301 = vmatprep.subr.mxu0 0.0
        %2302 = vmatpush1.msra.mxu0 %v2263
        %2303 = vmatprep.subr.mxu0 0.0
        %2304 = vmatpush2.msra.mxu0 0.0
        %2305 = vmatprep.subr.mxu0 0.0
        %2306 = vmatpush2.msra.mxu0 0.0
        %2307 = vmatprep.subr.mxu0 0.0
        %2308 = vmatpush2.msra.mxu0 0.0
        %2309 = vmatprep.subr.mxu0 0.0
        %2310 = vmatpush2.msra.mxu0 0.0
        %2311 = vmatprep.subr.mxu0 0.0
        %2312 = vmatpush2.msra.mxu0 0.0
        %2313 = vmatprep.subr.mxu0 0.0
        %2314 = vmatpush2.msra.mxu0 0.0
        %2315 = vmatprep.subr.mxu0 0.0
        %2316 = vmatpush2.msra.mxu0 0.0
        %2317 = vmatprep.subr.mxu0 0.0
        %2318 = vmatpush2.msra.mxu0 0.0
        %2319 = vmatprep.subr.mxu0 0.0
        %2320 = vmatpush2.msra.mxu0 0.0
        %2321 = vmatprep.subr.mxu0 0.0
        %2322 = vmatpush2.msra.mxu0 0.0
        %2323 = vmatprep.subr.mxu0 0.0
        %2324 = vmatpush2.msra.mxu0 0.0
        %2325 = vmatprep.subr.mxu0 0.0
        %2326 = vmatpush2.msra.mxu0 0.0
        %2327 = vmatprep.subr.mxu0 0.0
        %2328 = vmatpush2.msra.mxu0 0.0
        %2329 = vmatprep.subr.mxu0 0.0
        %2330 = vmatpush2.msra.mxu0 0.0
        %2331 = vmatprep.subr.mxu0 0.0
        %2332 = vmatpush2.msra.mxu0 0.0
        %2333 = vmatprep.subr.mxu0 0.0
        %2334 = vmatpush2.msra.mxu0 0.0
        %2335 = vmatprep.mubr.f32.mxu0 0.0
        %2336 = vmatmul.mubr.f32.gmra.mxu0 %v2269
        %v2337 = vpop.f32.mrf.mxu0
        %v2338 = vadd.f32 0.0, %v2337
        %v2339 = vpop.f32.mrf.mxu0
        %2340 = vdwg.mxu0
        %v2342 = vsel %vm2267, %v2181, 0
        %2344 = vmatprep.subr.mxu0 0.0
        %2345 = vmatpush1.msra.mxu0 0.0
        %2346 = vmatprep.subr.mxu0 0.0
        %2347 = vmatpush1.msra.mxu0 0.0
        %2348 = vmatprep.subr.mxu0 0.0
        %2349 = vmatpush1.msra.mxu0 0.0
        %2350 = vmatprep.subr.mxu0 0.0
        %2351 = vmatpush1.msra.mxu0 0.0
        %2352 = vmatprep.subr.mxu0 0.0
        %2353 = vmatpush1.msra.mxu0 0.0
        %2354 = vmatprep.subr.mxu0 0.0
        %2355 = vmatpush1.msra.mxu0 0.0
        %2356 = vmatprep.subr.mxu0 0.0
        %2357 = vmatpush1.msra.mxu0 0.0
        %2358 = vmatprep.subr.mxu0 0.0
        %2359 = vmatpush1.msra.mxu0 0.0
        %2360 = vmatprep.subr.mxu0 0.0
        %2361 = vmatpush1.msra.mxu0 0.0
        %2362 = vmatprep.subr.mxu0 0.0
        %2363 = vmatpush1.msra.mxu0 0.0
        %2364 = vmatprep.subr.mxu0 0.0
        %2365 = vmatpush1.msra.mxu0 0.0
        %2366 = vmatprep.subr.mxu0 0.0
        %2367 = vmatpush1.msra.mxu0 0.0
        %2368 = vmatprep.subr.mxu0 0.0
        %2369 = vmatpush1.msra.mxu0 %v2262
        %2370 = vmatprep.subr.mxu0 0.0
        %2371 = vmatpush1.msra.mxu0 %v2261
        %2372 = vmatprep.subr.mxu0 0.0
        %2373 = vmatpush1.msra.mxu0 %v2260
        %2374 = vmatprep.subr.mxu0 0.0
        %2375 = vmatpush1.msra.mxu0 %v2259
        %2376 = vmatprep.subr.mxu0 0.0
        %2377 = vmatpush2.msra.mxu0 0.0
        %2378 = vmatprep.subr.mxu0 0.0
        %2379 = vmatpush2.msra.mxu0 0.0
        %2380 = vmatprep.subr.mxu0 0.0
        %2381 = vmatpush2.msra.mxu0 0.0
        %2382 = vmatprep.subr.mxu0 0.0
        %2383 = vmatpush2.msra.mxu0 0.0
        %2384 = vmatprep.subr.mxu0 0.0
        %2385 = vmatpush2.msra.mxu0 0.0
        %2386 = vmatprep.subr.mxu0 0.0
        %2387 = vmatpush2.msra.mxu0 0.0
        %2388 = vmatprep.subr.mxu0 0.0
        %2389 = vmatpush2.msra.mxu0 0.0
        %2390 = vmatprep.subr.mxu0 0.0
        %2391 = vmatpush2.msra.mxu0 0.0
        %2392 = vmatprep.subr.mxu0 0.0
        %2393 = vmatpush2.msra.mxu0 0.0
        %2394 = vmatprep.subr.mxu0 0.0
        %2395 = vmatpush2.msra.mxu0 0.0
        %2396 = vmatprep.subr.mxu0 0.0
        %2397 = vmatpush2.msra.mxu0 0.0
        %2398 = vmatprep.subr.mxu0 0.0
        %2399 = vmatpush2.msra.mxu0 0.0
        %2400 = vmatprep.subr.mxu0 0.0
        %2401 = vmatpush2.msra.mxu0 0.0
        %2402 = vmatprep.subr.mxu0 0.0
        %2403 = vmatpush2.msra.mxu0 0.0
        %2404 = vmatprep.subr.mxu0 0.0
        %2405 = vmatpush2.msra.mxu0 0.0
        %2406 = vmatprep.subr.mxu0 0.0
        %2407 = vmatpush2.msra.mxu0 0.0
        %2408 = vmatprep.mubr.f32.mxu0 0.0
        %2409 = vmatmul.mubr.f32.gmra.mxu0 %v2342
        %v2410 = vpop.f32.mrf.mxu0
        %v2411 = vadd.f32 %v2338, %v2410
        %v2412 = vpop.f32.mrf.mxu0
        %2413 = vdwg.mxu0
        %v2414 = vld [vmem:[%s1 + $0x1c0] sm:$0xff]
        %v2415 = vld [vmem:[%s1 + $0x1c8] sm:$0xff]
        %v2416 = vld [vmem:[%s1 + $0x1d0] sm:$0xff]
        %v2417 = vld [vmem:[%s1 + $0x1d8] sm:$0xff]
        %v2419 = vsel %vm2267, %v2191, 0
        %2421 = vmatprep.subr.mxu0 0.0
        %2422 = vmatpush1.msra.mxu0 0.0
        %2423 = vmatprep.subr.mxu0 0.0
        %2424 = vmatpush1.msra.mxu0 0.0
        %2425 = vmatprep.subr.mxu0 0.0
        %2426 = vmatpush1.msra.mxu0 0.0
        %2427 = vmatprep.subr.mxu0 0.0
        %2428 = vmatpush1.msra.mxu0 0.0
        %2429 = vmatprep.subr.mxu0 0.0
        %2430 = vmatpush1.msra.mxu0 0.0
        %2431 = vmatprep.subr.mxu0 0.0
        %2432 = vmatpush1.msra.mxu0 0.0
        %2433 = vmatprep.subr.mxu0 0.0
        %2434 = vmatpush1.msra.mxu0 0.0
        %2435 = vmatprep.subr.mxu0 0.0
        %2436 = vmatpush1.msra.mxu0 0.0
        %2437 = vmatprep.subr.mxu0 0.0
        %2438 = vmatpush1.msra.mxu0 0.0
        %2439 = vmatprep.subr.mxu0 0.0
        %2440 = vmatpush1.msra.mxu0 0.0
        %2441 = vmatprep.subr.mxu0 0.0
        %2442 = vmatpush1.msra.mxu0 0.0
        %2443 = vmatprep.subr.mxu0 0.0
        %2444 = vmatpush1.msra.mxu0 0.0
        %2445 = vmatprep.subr.mxu0 0.0
        %2446 = vmatpush1.msra.mxu0 %v2417
        %2447 = vmatprep.subr.mxu0 0.0
        %2448 = vmatpush1.msra.mxu0 %v2416
        %2449 = vmatprep.subr.mxu0 0.0
        %2450 = vmatpush1.msra.mxu0 %v2415
        %2451 = vmatprep.subr.mxu0 0.0
        %2452 = vmatpush1.msra.mxu0 %v2414
        %2453 = vmatprep.subr.mxu0 0.0
        %2454 = vmatpush2.msra.mxu0 0.0
        %2455 = vmatprep.subr.mxu0 0.0
        %2456 = vmatpush2.msra.mxu0 0.0
        %2457 = vmatprep.subr.mxu0 0.0
        %2458 = vmatpush2.msra.mxu0 0.0
        %2459 = vmatprep.subr.mxu0 0.0
        %2460 = vmatpush2.msra.mxu0 0.0
        %2461 = vmatprep.subr.mxu0 0.0
        %2462 = vmatpush2.msra.mxu0 0.0
        %2463 = vmatprep.subr.mxu0 0.0
        %2464 = vmatpush2.msra.mxu0 0.0
        %2465 = vmatprep.subr.mxu0 0.0
        %2466 = vmatpush2.msra.mxu0 0.0
        %2467 = vmatprep.subr.mxu0 0.0
        %2468 = vmatpush2.msra.mxu0 0.0
        %2469 = vmatprep.subr.mxu0 0.0
        %2470 = vmatpush2.msra.mxu0 0.0
        %2471 = vmatprep.subr.mxu0 0.0
        %2472 = vmatpush2.msra.mxu0 0.0
        %2473 = vmatprep.subr.mxu0 0.0
        %2474 = vmatpush2.msra.mxu0 0.0
        %2475 = vmatprep.subr.mxu0 0.0
        %2476 = vmatpush2.msra.mxu0 0.0
        %2477 = vmatprep.subr.mxu0 0.0
        %2478 = vmatpush2.msra.mxu0 0.0
        %2479 = vmatprep.subr.mxu0 0.0
        %2480 = vmatpush2.msra.mxu0 0.0
        %2481 = vmatprep.subr.mxu0 0.0
        %2482 = vmatpush2.msra.mxu0 0.0
        %2483 = vmatprep.subr.mxu0 0.0
        %2484 = vmatpush2.msra.mxu0 0.0
        %2485 = vmatprep.mubr.f32.mxu0 0.0
        %2486 = vmatmul.mubr.f32.gmra.mxu0 %v2419
        %v2487 = vpop.f32.mrf.mxu0
        %v2488 = vadd.f32 0.0, %v2487
        %v2489 = vpop.f32.mrf.mxu0
        %2490 = vdwg.mxu0
        %v2491 = vadd.f32 %v2411, %v2488
        %v2492 = vld [vmem:[%s1 + $0x1e0] sm:$0xff]
        %v2493 = vld [vmem:[%s1 + $0x1e8] sm:$0xff]
        %v2494 = vld [vmem:[%s1 + $0x1f0] sm:$0xff]
        %v2495 = vld [vmem:[%s1 + $0x1f8] sm:$0xff]
        %v2497 = vsel %vm2267, %v2196, 0
        %2499 = vmatprep.subr.mxu0 0.0
        %2500 = vmatpush1.msra.mxu0 0.0
        %2501 = vmatprep.subr.mxu0 0.0
        %2502 = vmatpush1.msra.mxu0 0.0
        %2503 = vmatprep.subr.mxu0 0.0
        %2504 = vmatpush1.msra.mxu0 0.0
        %2505 = vmatprep.subr.mxu0 0.0
        %2506 = vmatpush1.msra.mxu0 0.0
        %2507 = vmatprep.subr.mxu0 0.0
        %2508 = vmatpush1.msra.mxu0 0.0
        %2509 = vmatprep.subr.mxu0 0.0
        %2510 = vmatpush1.msra.mxu0 0.0
        %2511 = vmatprep.subr.mxu0 0.0
        %2512 = vmatpush1.msra.mxu0 0.0
        %2513 = vmatprep.subr.mxu0 0.0
        %2514 = vmatpush1.msra.mxu0 0.0
        %2515 = vmatprep.subr.mxu0 0.0
        %2516 = vmatpush1.msra.mxu0 0.0
        %2517 = vmatprep.subr.mxu0 0.0
        %2518 = vmatpush1.msra.mxu0 0.0
        %2519 = vmatprep.subr.mxu0 0.0
        %2520 = vmatpush1.msra.mxu0 0.0
        %2521 = vmatprep.subr.mxu0 0.0
        %2522 = vmatpush1.msra.mxu0 0.0
        %2523 = vmatprep.subr.mxu0 0.0
        %2524 = vmatpush1.msra.mxu0 %v2495
        %2525 = vmatprep.subr.mxu0 0.0
        %2526 = vmatpush1.msra.mxu0 %v2494
        %2527 = vmatprep.subr.mxu0 0.0
        %2528 = vmatpush1.msra.mxu0 %v2493
        %2529 = vmatprep.subr.mxu0 0.0
        %2530 = vmatpush1.msra.mxu0 %v2492
        %2531 = vmatprep.subr.mxu0 0.0
        %2532 = vmatpush2.msra.mxu0 0.0
        %2533 = vmatprep.subr.mxu0 0.0
        %2534 = vmatpush2.msra.mxu0 0.0
        %2535 = vmatprep.subr.mxu0 0.0
        %2536 = vmatpush2.msra.mxu0 0.0
        %2537 = vmatprep.subr.mxu0 0.0
        %2538 = vmatpush2.msra.mxu0 0.0
        %2539 = vmatprep.subr.mxu0 0.0
        %2540 = vmatpush2.msra.mxu0 0.0
        %2541 = vmatprep.subr.mxu0 0.0
        %2542 = vmatpush2.msra.mxu0 0.0
        %2543 = vmatprep.subr.mxu0 0.0
        %2544 = vmatpush2.msra.mxu0 0.0
        %2545 = vmatprep.subr.mxu0 0.0
        %2546 = vmatpush2.msra.mxu0 0.0
        %2547 = vmatprep.subr.mxu0 0.0
        %2548 = vmatpush2.msra.mxu0 0.0
        %2549 = vmatprep.subr.mxu0 0.0
        %2550 = vmatpush2.msra.mxu0 0.0
        %2551 = vmatprep.subr.mxu0 0.0
        %2552 = vmatpush2.msra.mxu0 0.0
        %2553 = vmatprep.subr.mxu0 0.0
        %2554 = vmatpush2.msra.mxu0 0.0
        %2555 = vmatprep.subr.mxu0 0.0
        %2556 = vmatpush2.msra.mxu0 0.0
        %2557 = vmatprep.subr.mxu0 0.0
        %2558 = vmatpush2.msra.mxu0 0.0
        %2559 = vmatprep.subr.mxu0 0.0
        %2560 = vmatpush2.msra.mxu0 0.0
        %2561 = vmatprep.subr.mxu0 0.0
        %2562 = vmatpush2.msra.mxu0 0.0
        %2563 = vmatprep.mubr.f32.mxu0 0.0
        %2564 = vmatmul.mubr.f32.gmra.mxu0 %v2497
        %v2565 = vpop.f32.mrf.mxu0
        %v2566 = vadd.f32 0.0, %v2565
        %v2567 = vpop.f32.mrf.mxu0
        %2568 = vdwg.mxu0
        %v2569 = vadd.f32 %v2491, %v2566
        %v2570 = vld [vmem:[%s1 + $0x200] sm:$0xff]
        %v2571 = vld [vmem:[%s1 + $0x208] sm:$0xff]
        %v2572 = vld [vmem:[%s1 + $0x210] sm:$0xff]
        %v2573 = vld [vmem:[%s1 + $0x218] sm:$0xff]
        %v2575 = vsel %vm2267, %v2201, 0
        %2577 = vmatprep.subr.mxu0 0.0
        %2578 = vmatpush1.msra.mxu0 0.0
        %2579 = vmatprep.subr.mxu0 0.0
        %2580 = vmatpush1.msra.mxu0 0.0
        %2581 = vmatprep.subr.mxu0 0.0
        %2582 = vmatpush1.msra.mxu0 0.0
        %2583 = vmatprep.subr.mxu0 0.0
        %2584 = vmatpush1.msra.mxu0 0.0
        %2585 = vmatprep.subr.mxu0 0.0
        %2586 = vmatpush1.msra.mxu0 0.0
        %2587 = vmatprep.subr.mxu0 0.0
        %2588 = vmatpush1.msra.mxu0 0.0
        %2589 = vmatprep.subr.mxu0 0.0
        %2590 = vmatpush1.msra.mxu0 0.0
        %2591 = vmatprep.subr.mxu0 0.0
        %2592 = vmatpush1.msra.mxu0 0.0
        %2593 = vmatprep.subr.mxu0 0.0
        %2594 = vmatpush1.msra.mxu0 0.0
        %2595 = vmatprep.subr.mxu0 0.0
        %2596 = vmatpush1.msra.mxu0 0.0
        %2597 = vmatprep.subr.mxu0 0.0
        %2598 = vmatpush1.msra.mxu0 0.0
        %2599 = vmatprep.subr.mxu0 0.0
        %2600 = vmatpush1.msra.mxu0 0.0
        %2601 = vmatprep.subr.mxu0 0.0
        %2602 = vmatpush1.msra.mxu0 %v2573
        %2603 = vmatprep.subr.mxu0 0.0
        %2604 = vmatpush1.msra.mxu0 %v2572
        %2605 = vmatprep.subr.mxu0 0.0
        %2606 = vmatpush1.msra.mxu0 %v2571
        %2607 = vmatprep.subr.mxu0 0.0
        %2608 = vmatpush1.msra.mxu0 %v2570
        %2609 = vmatprep.subr.mxu0 0.0
        %2610 = vmatpush2.msra.mxu0 0.0
        %2611 = vmatprep.subr.mxu0 0.0
        %2612 = vmatpush2.msra.mxu0 0.0
        %2613 = vmatprep.subr.mxu0 0.0
        %2614 = vmatpush2.msra.mxu0 0.0
        %2615 = vmatprep.subr.mxu0 0.0
        %2616 = vmatpush2.msra.mxu0 0.0
        %2617 = vmatprep.subr.mxu0 0.0
        %2618 = vmatpush2.msra.mxu0 0.0
        %2619 = vmatprep.subr.mxu0 0.0
        %2620 = vmatpush2.msra.mxu0 0.0
        %2621 = vmatprep.subr.mxu0 0.0
        %2622 = vmatpush2.msra.mxu0 0.0
        %2623 = vmatprep.subr.mxu0 0.0
        %2624 = vmatpush2.msra.mxu0 0.0
        %2625 = vmatprep.subr.mxu0 0.0
        %2626 = vmatpush2.msra.mxu0 0.0
        %2627 = vmatprep.subr.mxu0 0.0
        %2628 = vmatpush2.msra.mxu0 0.0
        %2629 = vmatprep.subr.mxu0 0.0
        %2630 = vmatpush2.msra.mxu0 0.0
        %2631 = vmatprep.subr.mxu0 0.0
        %2632 = vmatpush2.msra.mxu0 0.0
        %2633 = vmatprep.subr.mxu0 0.0
        %2634 = vmatpush2.msra.mxu0 0.0
        %2635 = vmatprep.subr.mxu0 0.0
        %2636 = vmatpush2.msra.mxu0 0.0
        %2637 = vmatprep.subr.mxu0 0.0
        %2638 = vmatpush2.msra.mxu0 0.0
        %2639 = vmatprep.subr.mxu0 0.0
        %2640 = vmatpush2.msra.mxu0 0.0
        %2641 = vmatprep.mubr.f32.mxu0 0.0
        %2642 = vmatmul.mubr.f32.gmra.mxu0 %v2575
        %v2643 = vpop.f32.mrf.mxu0
        %v2644 = vadd.f32 0.0, %v2643
        %v2645 = vpop.f32.mrf.mxu0
        %2646 = vdwg.mxu0
        %v2647 = vadd.f32 %v2569, %v2644
        %v2648 = vld [vmem:[%s1 + $0x220] sm:$0xff]
        %v2649 = vld [vmem:[%s1 + $0x228] sm:$0xff]
        %v2650 = vld [vmem:[%s1 + $0x230] sm:$0xff]
        %v2651 = vld [vmem:[%s1 + $0x238] sm:$0xff]
        %v2653 = vsel %vm2267, %v2206, 0
        %2655 = vmatprep.subr.mxu0 0.0
        %2656 = vmatpush1.msra.mxu0 0.0
        %2657 = vmatprep.subr.mxu0 0.0
        %2658 = vmatpush1.msra.mxu0 0.0
        %2659 = vmatprep.subr.mxu0 0.0
        %2660 = vmatpush1.msra.mxu0 0.0
        %2661 = vmatprep.subr.mxu0 0.0
        %2662 = vmatpush1.msra.mxu0 0.0
        %2663 = vmatprep.subr.mxu0 0.0
        %2664 = vmatpush1.msra.mxu0 0.0
        %2665 = vmatprep.subr.mxu0 0.0
        %2666 = vmatpush1.msra.mxu0 0.0
        %2667 = vmatprep.subr.mxu0 0.0
        %2668 = vmatpush1.msra.mxu0 0.0
        %2669 = vmatprep.subr.mxu0 0.0
        %2670 = vmatpush1.msra.mxu0 0.0
        %2671 = vmatprep.subr.mxu0 0.0
        %2672 = vmatpush1.msra.mxu0 0.0
        %2673 = vmatprep.subr.mxu0 0.0
        %2674 = vmatpush1.msra.mxu0 0.0
        %2675 = vmatprep.subr.mxu0 0.0
        %2676 = vmatpush1.msra.mxu0 0.0
        %2677 = vmatprep.subr.mxu0 0.0
        %2678 = vmatpush1.msra.mxu0 0.0
        %2679 = vmatprep.subr.mxu0 0.0
        %2680 = vmatpush1.msra.mxu0 %v2651
        %2681 = vmatprep.subr.mxu0 0.0
        %2682 = vmatpush1.msra.mxu0 %v2650
        %2683 = vmatprep.subr.mxu0 0.0
        %2684 = vmatpush1.msra.mxu0 %v2649
        %2685 = vmatprep.subr.mxu0 0.0
        %2686 = vmatpush1.msra.mxu0 %v2648
        %2687 = vmatprep.subr.mxu0 0.0
        %2688 = vmatpush2.msra.mxu0 0.0
        %2689 = vmatprep.subr.mxu0 0.0
        %2690 = vmatpush2.msra.mxu0 0.0
        %2691 = vmatprep.subr.mxu0 0.0
        %2692 = vmatpush2.msra.mxu0 0.0
        %2693 = vmatprep.subr.mxu0 0.0
        %2694 = vmatpush2.msra.mxu0 0.0
        %2695 = vmatprep.subr.mxu0 0.0
        %2696 = vmatpush2.msra.mxu0 0.0
        %2697 = vmatprep.subr.mxu0 0.0
        %2698 = vmatpush2.msra.mxu0 0.0
        %2699 = vmatprep.subr.mxu0 0.0
        %2700 = vmatpush2.msra.mxu0 0.0
        %2701 = vmatprep.subr.mxu0 0.0
        %2702 = vmatpush2.msra.mxu0 0.0
        %2703 = vmatprep.subr.mxu0 0.0
        %2704 = vmatpush2.msra.mxu0 0.0
        %2705 = vmatprep.subr.mxu0 0.0
        %2706 = vmatpush2.msra.mxu0 0.0
        %2707 = vmatprep.subr.mxu0 0.0
        %2708 = vmatpush2.msra.mxu0 0.0
        %2709 = vmatprep.subr.mxu0 0.0
        %2710 = vmatpush2.msra.mxu0 0.0
        %2711 = vmatprep.subr.mxu0 0.0
        %2712 = vmatpush2.msra.mxu0 0.0
        %2713 = vmatprep.subr.mxu0 0.0
        %2714 = vmatpush2.msra.mxu0 0.0
        %2715 = vmatprep.subr.mxu0 0.0
        %2716 = vmatpush2.msra.mxu0 0.0
        %2717 = vmatprep.subr.mxu0 0.0
        %2718 = vmatpush2.msra.mxu0 0.0
        %2719 = vmatprep.mubr.f32.mxu0 0.0
        %2720 = vmatmul.mubr.f32.gmra.mxu0 %v2653
        %v2721 = vpop.f32.mrf.mxu0
        %v2722 = vadd.f32 0.0, %v2721
        %v2723 = vpop.f32.mrf.mxu0
        %2724 = vdwg.mxu0
        %v2725 = vadd.f32 %v2647, %v2722
        %v2726 = vld [vmem:[%s1 + $0x240] sm:$0xff]
        %v2727 = vld [vmem:[%s1 + $0x248] sm:$0xff]
        %v2728 = vld [vmem:[%s1 + $0x250] sm:$0xff]
        %v2729 = vld [vmem:[%s1 + $0x258] sm:$0xff]
        %v2731 = vsel %vm2267, %v2211, 0
        %2733 = vmatprep.subr.mxu0 0.0
        %2734 = vmatpush1.msra.mxu0 0.0
        %2735 = vmatprep.subr.mxu0 0.0
        %2736 = vmatpush1.msra.mxu0 0.0
        %2737 = vmatprep.subr.mxu0 0.0
        %2738 = vmatpush1.msra.mxu0 0.0
        %2739 = vmatprep.subr.mxu0 0.0
        %2740 = vmatpush1.msra.mxu0 0.0
        %2741 = vmatprep.subr.mxu0 0.0
        %2742 = vmatpush1.msra.mxu0 0.0
        %2743 = vmatprep.subr.mxu0 0.0
        %2744 = vmatpush1.msra.mxu0 0.0
        %2745 = vmatprep.subr.mxu0 0.0
        %2746 = vmatpush1.msra.mxu0 0.0
        %2747 = vmatprep.subr.mxu0 0.0
        %2748 = vmatpush1.msra.mxu0 0.0
        %2749 = vmatprep.subr.mxu0 0.0
        %2750 = vmatpush1.msra.mxu0 0.0
        %2751 = vmatprep.subr.mxu0 0.0
        %2752 = vmatpush1.msra.mxu0 0.0
        %2753 = vmatprep.subr.mxu0 0.0
        %2754 = vmatpush1.msra.mxu0 0.0
        %2755 = vmatprep.subr.mxu0 0.0
        %2756 = vmatpush1.msra.mxu0 0.0
        %2757 = vmatprep.subr.mxu0 0.0
        %2758 = vmatpush1.msra.mxu0 %v2729
        %2759 = vmatprep.subr.mxu0 0.0
        %2760 = vmatpush1.msra.mxu0 %v2728
        %2761 = vmatprep.subr.mxu0 0.0
        %2762 = vmatpush1.msra.mxu0 %v2727
        %2763 = vmatprep.subr.mxu0 0.0
        %2764 = vmatpush1.msra.mxu0 %v2726
        %2765 = vmatprep.subr.mxu0 0.0
        %2766 = vmatpush2.msra.mxu0 0.0
        %2767 = vmatprep.subr.mxu0 0.0
        %2768 = vmatpush2.msra.mxu0 0.0
        %2769 = vmatprep.subr.mxu0 0.0
        %2770 = vmatpush2.msra.mxu0 0.0
        %2771 = vmatprep.subr.mxu0 0.0
        %2772 = vmatpush2.msra.mxu0 0.0
        %2773 = vmatprep.subr.mxu0 0.0
        %2774 = vmatpush2.msra.mxu0 0.0
        %2775 = vmatprep.subr.mxu0 0.0
        %2776 = vmatpush2.msra.mxu0 0.0
        %2777 = vmatprep.subr.mxu0 0.0
        %2778 = vmatpush2.msra.mxu0 0.0
        %2779 = vmatprep.subr.mxu0 0.0
        %2780 = vmatpush2.msra.mxu0 0.0
        %2781 = vmatprep.subr.mxu0 0.0
        %2782 = vmatpush2.msra.mxu0 0.0
        %2783 = vmatprep.subr.mxu0 0.0
        %2784 = vmatpush2.msra.mxu0 0.0
        %2785 = vmatprep.subr.mxu0 0.0
        %2786 = vmatpush2.msra.mxu0 0.0
        %2787 = vmatprep.subr.mxu0 0.0
        %2788 = vmatpush2.msra.mxu0 0.0
        %2789 = vmatprep.subr.mxu0 0.0
        %2790 = vmatpush2.msra.mxu0 0.0
        %2791 = vmatprep.subr.mxu0 0.0
        %2792 = vmatpush2.msra.mxu0 0.0
        %2793 = vmatprep.subr.mxu0 0.0
        %2794 = vmatpush2.msra.mxu0 0.0
        %2795 = vmatprep.subr.mxu0 0.0
        %2796 = vmatpush2.msra.mxu0 0.0
        %2797 = vmatprep.mubr.f32.mxu0 0.0
        %2798 = vmatmul.mubr.f32.gmra.mxu0 %v2731
        %v2799 = vpop.f32.mrf.mxu0
        %v2800 = vadd.f32 0.0, %v2799
        %v2801 = vpop.f32.mrf.mxu0
        %2802 = vdwg.mxu0
        %v2803 = vadd.f32 %v2725, %v2800
        %v2804 = vld [vmem:[%s1 + $0x260] sm:$0xff]
        %v2805 = vld [vmem:[%s1 + $0x268] sm:$0xff]
        %v2806 = vld [vmem:[%s1 + $0x270] sm:$0xff]
        %v2807 = vld [vmem:[%s1 + $0x278] sm:$0xff]
        %v2809 = vsel %vm2267, %v2216, 0
        %2811 = vmatprep.subr.mxu0 0.0
        %2812 = vmatpush1.msra.mxu0 0.0
        %2813 = vmatprep.subr.mxu0 0.0
        %2814 = vmatpush1.msra.mxu0 0.0
        %2815 = vmatprep.subr.mxu0 0.0
        %2816 = vmatpush1.msra.mxu0 0.0
        %2817 = vmatprep.subr.mxu0 0.0
        %2818 = vmatpush1.msra.mxu0 0.0
        %2819 = vmatprep.subr.mxu0 0.0
        %2820 = vmatpush1.msra.mxu0 0.0
        %2821 = vmatprep.subr.mxu0 0.0
        %2822 = vmatpush1.msra.mxu0 0.0
        %2823 = vmatprep.subr.mxu0 0.0
        %2824 = vmatpush1.msra.mxu0 0.0
        %2825 = vmatprep.subr.mxu0 0.0
        %2826 = vmatpush1.msra.mxu0 0.0
        %2827 = vmatprep.subr.mxu0 0.0
        %2828 = vmatpush1.msra.mxu0 0.0
        %2829 = vmatprep.subr.mxu0 0.0
        %2830 = vmatpush1.msra.mxu0 0.0
        %2831 = vmatprep.subr.mxu0 0.0
        %2832 = vmatpush1.msra.mxu0 0.0
        %2833 = vmatprep.subr.mxu0 0.0
        %2834 = vmatpush1.msra.mxu0 0.0
        %2835 = vmatprep.subr.mxu0 0.0
        %2836 = vmatpush1.msra.mxu0 %v2807
        %2837 = vmatprep.subr.mxu0 0.0
        %2838 = vmatpush1.msra.mxu0 %v2806
        %2839 = vmatprep.subr.mxu0 0.0
        %2840 = vmatpush1.msra.mxu0 %v2805
        %2841 = vmatprep.subr.mxu0 0.0
        %2842 = vmatpush1.msra.mxu0 %v2804
        %2843 = vmatprep.subr.mxu0 0.0
        %2844 = vmatpush2.msra.mxu0 0.0
        %2845 = vmatprep.subr.mxu0 0.0
        %2846 = vmatpush2.msra.mxu0 0.0
        %2847 = vmatprep.subr.mxu0 0.0
        %2848 = vmatpush2.msra.mxu0 0.0
        %2849 = vmatprep.subr.mxu0 0.0
        %2850 = vmatpush2.msra.mxu0 0.0
        %2851 = vmatprep.subr.mxu0 0.0
        %2852 = vmatpush2.msra.mxu0 0.0
        %2853 = vmatprep.subr.mxu0 0.0
        %2854 = vmatpush2.msra.mxu0 0.0
        %2855 = vmatprep.subr.mxu0 0.0
        %2856 = vmatpush2.msra.mxu0 0.0
        %2857 = vmatprep.subr.mxu0 0.0
        %2858 = vmatpush2.msra.mxu0 0.0
        %2859 = vmatprep.subr.mxu0 0.0
        %2860 = vmatpush2.msra.mxu0 0.0
        %2861 = vmatprep.subr.mxu0 0.0
        %2862 = vmatpush2.msra.mxu0 0.0
        %2863 = vmatprep.subr.mxu0 0.0
        %2864 = vmatpush2.msra.mxu0 0.0
        %2865 = vmatprep.subr.mxu0 0.0
        %2866 = vmatpush2.msra.mxu0 0.0
        %2867 = vmatprep.subr.mxu0 0.0
        %2868 = vmatpush2.msra.mxu0 0.0
        %2869 = vmatprep.subr.mxu0 0.0
        %2870 = vmatpush2.msra.mxu0 0.0
        %2871 = vmatprep.subr.mxu0 0.0
        %2872 = vmatpush2.msra.mxu0 0.0
        %2873 = vmatprep.subr.mxu0 0.0
        %2874 = vmatpush2.msra.mxu0 0.0
        %2875 = vmatprep.mubr.f32.mxu0 0.0
        %2876 = vmatmul.mubr.f32.gmra.mxu0 %v2809
        %v2877 = vpop.f32.mrf.mxu0
        %v2878 = vadd.f32 0.0, %v2877
        %v2879 = vpop.f32.mrf.mxu0
        %2880 = vdwg.mxu0
        %v2881 = vadd.f32 %v2803, %v2878
        %v2882 = vld [vmem:[%s1 + $0x280] sm:$0xff]
        %v2883 = vld [vmem:[%s1 + $0x288] sm:$0xff]
        %v2884 = vld [vmem:[%s1 + $0x290] sm:$0xff]
        %v2885 = vld [vmem:[%s1 + $0x298] sm:$0xff]
        %v2887 = vsel %vm2267, %v2221, 0
        %2889 = vmatprep.subr.mxu0 0.0
        %2890 = vmatpush1.msra.mxu0 0.0
        %2891 = vmatprep.subr.mxu0 0.0
        %2892 = vmatpush1.msra.mxu0 0.0
        %2893 = vmatprep.subr.mxu0 0.0
        %2894 = vmatpush1.msra.mxu0 0.0
        %2895 = vmatprep.subr.mxu0 0.0
        %2896 = vmatpush1.msra.mxu0 0.0
        %2897 = vmatprep.subr.mxu0 0.0
        %2898 = vmatpush1.msra.mxu0 0.0
        %2899 = vmatprep.subr.mxu0 0.0
        %2900 = vmatpush1.msra.mxu0 0.0
        %2901 = vmatprep.subr.mxu0 0.0
        %2902 = vmatpush1.msra.mxu0 0.0
        %2903 = vmatprep.subr.mxu0 0.0
        %2904 = vmatpush1.msra.mxu0 0.0
        %2905 = vmatprep.subr.mxu0 0.0
        %2906 = vmatpush1.msra.mxu0 0.0
        %2907 = vmatprep.subr.mxu0 0.0
        %2908 = vmatpush1.msra.mxu0 0.0
        %2909 = vmatprep.subr.mxu0 0.0
        %2910 = vmatpush1.msra.mxu0 0.0
        %2911 = vmatprep.subr.mxu0 0.0
        %2912 = vmatpush1.msra.mxu0 0.0
        %2913 = vmatprep.subr.mxu0 0.0
        %2914 = vmatpush1.msra.mxu0 %v2885
        %2915 = vmatprep.subr.mxu0 0.0
        %2916 = vmatpush1.msra.mxu0 %v2884
        %2917 = vmatprep.subr.mxu0 0.0
        %2918 = vmatpush1.msra.mxu0 %v2883
        %2919 = vmatprep.subr.mxu0 0.0
        %2920 = vmatpush1.msra.mxu0 %v2882
        %2921 = vmatprep.subr.mxu0 0.0
        %2922 = vmatpush2.msra.mxu0 0.0
        %2923 = vmatprep.subr.mxu0 0.0
        %2924 = vmatpush2.msra.mxu0 0.0
        %2925 = vmatprep.subr.mxu0 0.0
        %2926 = vmatpush2.msra.mxu0 0.0
        %2927 = vmatprep.subr.mxu0 0.0
        %2928 = vmatpush2.msra.mxu0 0.0
        %2929 = vmatprep.subr.mxu0 0.0
        %2930 = vmatpush2.msra.mxu0 0.0
        %2931 = vmatprep.subr.mxu0 0.0
        %2932 = vmatpush2.msra.mxu0 0.0
        %2933 = vmatprep.subr.mxu0 0.0
        %2934 = vmatpush2.msra.mxu0 0.0
        %2935 = vmatprep.subr.mxu0 0.0
        %2936 = vmatpush2.msra.mxu0 0.0
        %2937 = vmatprep.subr.mxu0 0.0
        %2938 = vmatpush2.msra.mxu0 0.0
        %2939 = vmatprep.subr.mxu0 0.0
        %2940 = vmatpush2.msra.mxu0 0.0
        %2941 = vmatprep.subr.mxu0 0.0
        %2942 = vmatpush2.msra.mxu0 0.0
        %2943 = vmatprep.subr.mxu0 0.0
        %2944 = vmatpush2.msra.mxu0 0.0
        %2945 = vmatprep.subr.mxu0 0.0
        %2946 = vmatpush2.msra.mxu0 0.0
        %2947 = vmatprep.subr.mxu0 0.0
        %2948 = vmatpush2.msra.mxu0 0.0
        %2949 = vmatprep.subr.mxu0 0.0
        %2950 = vmatpush2.msra.mxu0 0.0
        %2951 = vmatprep.subr.mxu0 0.0
        %2952 = vmatpush2.msra.mxu0 0.0
        %2953 = vmatprep.mubr.f32.mxu0 0.0
        %2954 = vmatmul.mubr.f32.gmra.mxu0 %v2887
        %v2955 = vpop.f32.mrf.mxu0
        %v2956 = vadd.f32 0.0, %v2955
        %v2957 = vpop.f32.mrf.mxu0
        %2958 = vdwg.mxu0
        %v2959 = vadd.f32 %v2881, %v2956
        %v2960 = vld [vmem:[%s1 + $0x2a0] sm:$0xff]
        %v2961 = vld [vmem:[%s1 + $0x2a8] sm:$0xff]
        %v2962 = vld [vmem:[%s1 + $0x2b0] sm:$0xff]
        %v2963 = vld [vmem:[%s1 + $0x2b8] sm:$0xff]
        %v2965 = vsel %vm2267, %v2226, 0
        %2967 = vmatprep.subr.mxu0 0.0
        %2968 = vmatpush1.msra.mxu0 0.0
        %2969 = vmatprep.subr.mxu0 0.0
        %2970 = vmatpush1.msra.mxu0 0.0
        %2971 = vmatprep.subr.mxu0 0.0
        %2972 = vmatpush1.msra.mxu0 0.0
        %2973 = vmatprep.subr.mxu0 0.0
        %2974 = vmatpush1.msra.mxu0 0.0
        %2975 = vmatprep.subr.mxu0 0.0
        %2976 = vmatpush1.msra.mxu0 0.0
        %2977 = vmatprep.subr.mxu0 0.0
        %2978 = vmatpush1.msra.mxu0 0.0
        %2979 = vmatprep.subr.mxu0 0.0
        %2980 = vmatpush1.msra.mxu0 0.0
        %2981 = vmatprep.subr.mxu0 0.0
        %2982 = vmatpush1.msra.mxu0 0.0
        %2983 = vmatprep.subr.mxu0 0.0
        %2984 = vmatpush1.msra.mxu0 0.0
        %2985 = vmatprep.subr.mxu0 0.0
        %2986 = vmatpush1.msra.mxu0 0.0
        %2987 = vmatprep.subr.mxu0 0.0
        %2988 = vmatpush1.msra.mxu0 0.0
        %2989 = vmatprep.subr.mxu0 0.0
        %2990 = vmatpush1.msra.mxu0 0.0
        %2991 = vmatprep.subr.mxu0 0.0
        %2992 = vmatpush1.msra.mxu0 %v2963
        %2993 = vmatprep.subr.mxu0 0.0
        %2994 = vmatpush1.msra.mxu0 %v2962
        %2995 = vmatprep.subr.mxu0 0.0
        %2996 = vmatpush1.msra.mxu0 %v2961
        %2997 = vmatprep.subr.mxu0 0.0
        %2998 = vmatpush1.msra.mxu0 %v2960
        %2999 = vmatprep.subr.mxu0 0.0
        %3000 = vmatpush2.msra.mxu0 0.0
        %3001 = vmatprep.subr.mxu0 0.0
        %3002 = vmatpush2.msra.mxu0 0.0
        %3003 = vmatprep.subr.mxu0 0.0
        %3004 = vmatpush2.msra.mxu0 0.0
        %3005 = vmatprep.subr.mxu0 0.0
        %3006 = vmatpush2.msra.mxu0 0.0
        %3007 = vmatprep.subr.mxu0 0.0
        %3008 = vmatpush2.msra.mxu0 0.0
        %3009 = vmatprep.subr.mxu0 0.0
        %3010 = vmatpush2.msra.mxu0 0.0
        %3011 = vmatprep.subr.mxu0 0.0
        %3012 = vmatpush2.msra.mxu0 0.0
        %3013 = vmatprep.subr.mxu0 0.0
        %3014 = vmatpush2.msra.mxu0 0.0
        %3015 = vmatprep.subr.mxu0 0.0
        %3016 = vmatpush2.msra.mxu0 0.0
        %3017 = vmatprep.subr.mxu0 0.0
        %3018 = vmatpush2.msra.mxu0 0.0
        %3019 = vmatprep.subr.mxu0 0.0
        %3020 = vmatpush2.msra.mxu0 0.0
        %3021 = vmatprep.subr.mxu0 0.0
        %3022 = vmatpush2.msra.mxu0 0.0
        %3023 = vmatprep.subr.mxu0 0.0
        %3024 = vmatpush2.msra.mxu0 0.0
        %3025 = vmatprep.subr.mxu0 0.0
        %3026 = vmatpush2.msra.mxu0 0.0
        %3027 = vmatprep.subr.mxu0 0.0
        %3028 = vmatpush2.msra.mxu0 0.0
        %3029 = vmatprep.subr.mxu0 0.0
        %3030 = vmatpush2.msra.mxu0 0.0
        %3031 = vmatprep.mubr.f32.mxu0 0.0
        %3032 = vmatmul.mubr.f32.gmra.mxu0 %v2965
        %v3033 = vpop.f32.mrf.mxu0
        %v3034 = vadd.f32 0.0, %v3033
        %v3035 = vpop.f32.mrf.mxu0
        %3036 = vdwg.mxu0
        %v3037 = vadd.f32 %v2959, %v3034
        %v3038 = vld [vmem:[%s1 + $0x2c0] sm:$0xff]
        %v3039 = vld [vmem:[%s1 + $0x2c8] sm:$0xff]
        %v3040 = vld [vmem:[%s1 + $0x2d0] sm:$0xff]
        %v3041 = vld [vmem:[%s1 + $0x2d8] sm:$0xff]
        %v3043 = vsel %vm2267, %v2231, 0
        %3045 = vmatprep.subr.mxu0 0.0
        %3046 = vmatpush1.msra.mxu0 0.0
        %3047 = vmatprep.subr.mxu0 0.0
        %3048 = vmatpush1.msra.mxu0 0.0
        %3049 = vmatprep.subr.mxu0 0.0
        %3050 = vmatpush1.msra.mxu0 0.0
        %3051 = vmatprep.subr.mxu0 0.0
        %3052 = vmatpush1.msra.mxu0 0.0
        %3053 = vmatprep.subr.mxu0 0.0
        %3054 = vmatpush1.msra.mxu0 0.0
        %3055 = vmatprep.subr.mxu0 0.0
        %3056 = vmatpush1.msra.mxu0 0.0
        %3057 = vmatprep.subr.mxu0 0.0
        %3058 = vmatpush1.msra.mxu0 0.0
        %3059 = vmatprep.subr.mxu0 0.0
        %3060 = vmatpush1.msra.mxu0 0.0
        %3061 = vmatprep.subr.mxu0 0.0
        %3062 = vmatpush1.msra.mxu0 0.0
        %3063 = vmatprep.subr.mxu0 0.0
        %3064 = vmatpush1.msra.mxu0 0.0
        %3065 = vmatprep.subr.mxu0 0.0
        %3066 = vmatpush1.msra.mxu0 0.0
        %3067 = vmatprep.subr.mxu0 0.0
        %3068 = vmatpush1.msra.mxu0 0.0
        %3069 = vmatprep.subr.mxu0 0.0
        %3070 = vmatpush1.msra.mxu0 %v3041
        %3071 = vmatprep.subr.mxu0 0.0
        %3072 = vmatpush1.msra.mxu0 %v3040
        %3073 = vmatprep.subr.mxu0 0.0
        %3074 = vmatpush1.msra.mxu0 %v3039
        %3075 = vmatprep.subr.mxu0 0.0
        %3076 = vmatpush1.msra.mxu0 %v3038
        %3077 = vmatprep.subr.mxu0 0.0
        %3078 = vmatpush2.msra.mxu0 0.0
        %3079 = vmatprep.subr.mxu0 0.0
        %3080 = vmatpush2.msra.mxu0 0.0
        %3081 = vmatprep.subr.mxu0 0.0
        %3082 = vmatpush2.msra.mxu0 0.0
        %3083 = vmatprep.subr.mxu0 0.0
        %3084 = vmatpush2.msra.mxu0 0.0
        %3085 = vmatprep.subr.mxu0 0.0
        %3086 = vmatpush2.msra.mxu0 0.0
        %3087 = vmatprep.subr.mxu0 0.0
        %3088 = vmatpush2.msra.mxu0 0.0
        %3089 = vmatprep.subr.mxu0 0.0
        %3090 = vmatpush2.msra.mxu0 0.0
        %3091 = vmatprep.subr.mxu0 0.0
        %3092 = vmatpush2.msra.mxu0 0.0
        %3093 = vmatprep.subr.mxu0 0.0
        %3094 = vmatpush2.msra.mxu0 0.0
        %3095 = vmatprep.subr.mxu0 0.0
        %3096 = vmatpush2.msra.mxu0 0.0
        %3097 = vmatprep.subr.mxu0 0.0
        %3098 = vmatpush2.msra.mxu0 0.0
        %3099 = vmatprep.subr.mxu0 0.0
        %3100 = vmatpush2.msra.mxu0 0.0
        %3101 = vmatprep.subr.mxu0 0.0
        %3102 = vmatpush2.msra.mxu0 0.0
        %3103 = vmatprep.subr.mxu0 0.0
        %3104 = vmatpush2.msra.mxu0 0.0
        %3105 = vmatprep.subr.mxu0 0.0
        %3106 = vmatpush2.msra.mxu0 0.0
        %3107 = vmatprep.subr.mxu0 0.0
        %3108 = vmatpush2.msra.mxu0 0.0
        %3109 = vmatprep.mubr.f32.mxu0 0.0
        %3110 = vmatmul.mubr.f32.gmra.mxu0 %v3043
        %v3111 = vpop.f32.mrf.mxu0
        %v3112 = vadd.f32 0.0, %v3111
        %v3113 = vpop.f32.mrf.mxu0
        %3114 = vdwg.mxu0
        %v3115 = vadd.f32 %v3037, %v3112
        %v3116 = vld [vmem:[%s1 + $0x2e0] sm:$0xff]
        %v3117 = vld [vmem:[%s1 + $0x2e8] sm:$0xff]
        %v3118 = vld [vmem:[%s1 + $0x2f0] sm:$0xff]
        %v3119 = vld [vmem:[%s1 + $0x2f8] sm:$0xff]
        %v3121 = vsel %vm2267, %v2236, 0
        %3123 = vmatprep.subr.mxu0 0.0
        %3124 = vmatpush1.msra.mxu0 0.0
        %3125 = vmatprep.subr.mxu0 0.0
        %3126 = vmatpush1.msra.mxu0 0.0
        %3127 = vmatprep.subr.mxu0 0.0
        %3128 = vmatpush1.msra.mxu0 0.0
        %3129 = vmatprep.subr.mxu0 0.0
        %3130 = vmatpush1.msra.mxu0 0.0
        %3131 = vmatprep.subr.mxu0 0.0
        %3132 = vmatpush1.msra.mxu0 0.0
        %3133 = vmatprep.subr.mxu0 0.0
        %3134 = vmatpush1.msra.mxu0 0.0
        %3135 = vmatprep.subr.mxu0 0.0
        %3136 = vmatpush1.msra.mxu0 0.0
        %3137 = vmatprep.subr.mxu0 0.0
        %3138 = vmatpush1.msra.mxu0 0.0
        %3139 = vmatprep.subr.mxu0 0.0
        %3140 = vmatpush1.msra.mxu0 0.0
        %3141 = vmatprep.subr.mxu0 0.0
        %3142 = vmatpush1.msra.mxu0 0.0
        %3143 = vmatprep.subr.mxu0 0.0
        %3144 = vmatpush1.msra.mxu0 0.0
        %3145 = vmatprep.subr.mxu0 0.0
        %3146 = vmatpush1.msra.mxu0 0.0
        %3147 = vmatprep.subr.mxu0 0.0
        %3148 = vmatpush1.msra.mxu0 %v3119
        %3149 = vmatprep.subr.mxu0 0.0
        %3150 = vmatpush1.msra.mxu0 %v3118
        %3151 = vmatprep.subr.mxu0 0.0
        %3152 = vmatpush1.msra.mxu0 %v3117
        %3153 = vmatprep.subr.mxu0 0.0
        %3154 = vmatpush1.msra.mxu0 %v3116
        %3155 = vmatprep.subr.mxu0 0.0
        %3156 = vmatpush2.msra.mxu0 0.0
        %3157 = vmatprep.subr.mxu0 0.0
        %3158 = vmatpush2.msra.mxu0 0.0
        %3159 = vmatprep.subr.mxu0 0.0
        %3160 = vmatpush2.msra.mxu0 0.0
        %3161 = vmatprep.subr.mxu0 0.0
        %3162 = vmatpush2.msra.mxu0 0.0
        %3163 = vmatprep.subr.mxu0 0.0
        %3164 = vmatpush2.msra.mxu0 0.0
        %3165 = vmatprep.subr.mxu0 0.0
        %3166 = vmatpush2.msra.mxu0 0.0
        %3167 = vmatprep.subr.mxu0 0.0
        %3168 = vmatpush2.msra.mxu0 0.0
        %3169 = vmatprep.subr.mxu0 0.0
        %3170 = vmatpush2.msra.mxu0 0.0
        %3171 = vmatprep.subr.mxu0 0.0
        %3172 = vmatpush2.msra.mxu0 0.0
        %3173 = vmatprep.subr.mxu0 0.0
        %3174 = vmatpush2.msra.mxu0 0.0
        %3175 = vmatprep.subr.mxu0 0.0
        %3176 = vmatpush2.msra.mxu0 0.0
        %3177 = vmatprep.subr.mxu0 0.0
        %3178 = vmatpush2.msra.mxu0 0.0
        %3179 = vmatprep.subr.mxu0 0.0
        %3180 = vmatpush2.msra.mxu0 0.0
        %3181 = vmatprep.subr.mxu0 0.0
        %3182 = vmatpush2.msra.mxu0 0.0
        %3183 = vmatprep.subr.mxu0 0.0
        %3184 = vmatpush2.msra.mxu0 0.0
        %3185 = vmatprep.subr.mxu0 0.0
        %3186 = vmatpush2.msra.mxu0 0.0
        %3187 = vmatprep.mubr.f32.mxu0 0.0
        %3188 = vmatmul.mubr.f32.gmra.mxu0 %v3121
        %v3189 = vpop.f32.mrf.mxu0
        %v3190 = vadd.f32 0.0, %v3189
        %v3191 = vpop.f32.mrf.mxu0
        %3192 = vdwg.mxu0
        %v3193 = vadd.f32 %v3115, %v3190
        %v3194 = vld [vmem:[%s1 + $0x300] sm:$0xff]
        %v3195 = vld [vmem:[%s1 + $0x308] sm:$0xff]
        %v3196 = vld [vmem:[%s1 + $0x310] sm:$0xff]
        %v3197 = vld [vmem:[%s1 + $0x318] sm:$0xff]
        %v3199 = vsel %vm2267, %v2241, 0
        %3201 = vmatprep.subr.mxu0 0.0
        %3202 = vmatpush1.msra.mxu0 0.0
        %3203 = vmatprep.subr.mxu0 0.0
        %3204 = vmatpush1.msra.mxu0 0.0
        %3205 = vmatprep.subr.mxu0 0.0
        %3206 = vmatpush1.msra.mxu0 0.0
        %3207 = vmatprep.subr.mxu0 0.0
        %3208 = vmatpush1.msra.mxu0 0.0
        %3209 = vmatprep.subr.mxu0 0.0
        %3210 = vmatpush1.msra.mxu0 0.0
        %3211 = vmatprep.subr.mxu0 0.0
        %3212 = vmatpush1.msra.mxu0 0.0
        %3213 = vmatprep.subr.mxu0 0.0
        %3214 = vmatpush1.msra.mxu0 0.0
        %3215 = vmatprep.subr.mxu0 0.0
        %3216 = vmatpush1.msra.mxu0 0.0
        %3217 = vmatprep.subr.mxu0 0.0
        %3218 = vmatpush1.msra.mxu0 0.0
        %3219 = vmatprep.subr.mxu0 0.0
        %3220 = vmatpush1.msra.mxu0 0.0
        %3221 = vmatprep.subr.mxu0 0.0
        %3222 = vmatpush1.msra.mxu0 0.0
        %3223 = vmatprep.subr.mxu0 0.0
        %3224 = vmatpush1.msra.mxu0 0.0
        %3225 = vmatprep.subr.mxu0 0.0
        %3226 = vmatpush1.msra.mxu0 %v3197
        %3227 = vmatprep.subr.mxu0 0.0
        %3228 = vmatpush1.msra.mxu0 %v3196
        %3229 = vmatprep.subr.mxu0 0.0
        %3230 = vmatpush1.msra.mxu0 %v3195
        %3231 = vmatprep.subr.mxu0 0.0
        %3232 = vmatpush1.msra.mxu0 %v3194
        %3233 = vmatprep.subr.mxu0 0.0
        %3234 = vmatpush2.msra.mxu0 0.0
        %3235 = vmatprep.subr.mxu0 0.0
        %3236 = vmatpush2.msra.mxu0 0.0
        %3237 = vmatprep.subr.mxu0 0.0
        %3238 = vmatpush2.msra.mxu0 0.0
        %3239 = vmatprep.subr.mxu0 0.0
        %3240 = vmatpush2.msra.mxu0 0.0
        %3241 = vmatprep.subr.mxu0 0.0
        %3242 = vmatpush2.msra.mxu0 0.0
        %3243 = vmatprep.subr.mxu0 0.0
        %3244 = vmatpush2.msra.mxu0 0.0
        %3245 = vmatprep.subr.mxu0 0.0
        %3246 = vmatpush2.msra.mxu0 0.0
        %3247 = vmatprep.subr.mxu0 0.0
        %3248 = vmatpush2.msra.mxu0 0.0
        %3249 = vmatprep.subr.mxu0 0.0
        %3250 = vmatpush2.msra.mxu0 0.0
        %3251 = vmatprep.subr.mxu0 0.0
        %3252 = vmatpush2.msra.mxu0 0.0
        %3253 = vmatprep.subr.mxu0 0.0
        %3254 = vmatpush2.msra.mxu0 0.0
        %3255 = vmatprep.subr.mxu0 0.0
        %3256 = vmatpush2.msra.mxu0 0.0
        %3257 = vmatprep.subr.mxu0 0.0
        %3258 = vmatpush2.msra.mxu0 0.0
        %3259 = vmatprep.subr.mxu0 0.0
        %3260 = vmatpush2.msra.mxu0 0.0
        %3261 = vmatprep.subr.mxu0 0.0
        %3262 = vmatpush2.msra.mxu0 0.0
        %3263 = vmatprep.subr.mxu0 0.0
        %3264 = vmatpush2.msra.mxu0 0.0
        %3265 = vmatprep.mubr.f32.mxu0 0.0
        %3266 = vmatmul.mubr.f32.gmra.mxu0 %v3199
        %v3267 = vpop.f32.mrf.mxu0
        %v3268 = vadd.f32 0.0, %v3267
        %v3269 = vpop.f32.mrf.mxu0
        %3270 = vdwg.mxu0
        %v3271 = vadd.f32 %v3193, %v3268
        %v3272 = vld [vmem:[%s1 + $0x320] sm:$0xff]
        %v3273 = vld [vmem:[%s1 + $0x328] sm:$0xff]
        %v3274 = vld [vmem:[%s1 + $0x330] sm:$0xff]
        %v3275 = vld [vmem:[%s1 + $0x338] sm:$0xff]
        %v3277 = vsel %vm2267, %v2246, 0
        %3279 = vmatprep.subr.mxu0 0.0
        %3280 = vmatpush1.msra.mxu0 0.0
        %3281 = vmatprep.subr.mxu0 0.0
        %3282 = vmatpush1.msra.mxu0 0.0
        %3283 = vmatprep.subr.mxu0 0.0
        %3284 = vmatpush1.msra.mxu0 0.0
        %3285 = vmatprep.subr.mxu0 0.0
        %3286 = vmatpush1.msra.mxu0 0.0
        %3287 = vmatprep.subr.mxu0 0.0
        %3288 = vmatpush1.msra.mxu0 0.0
        %3289 = vmatprep.subr.mxu0 0.0
        %3290 = vmatpush1.msra.mxu0 0.0
        %3291 = vmatprep.subr.mxu0 0.0
        %3292 = vmatpush1.msra.mxu0 0.0
        %3293 = vmatprep.subr.mxu0 0.0
        %3294 = vmatpush1.msra.mxu0 0.0
        %3295 = vmatprep.subr.mxu0 0.0
        %3296 = vmatpush1.msra.mxu0 0.0
        %3297 = vmatprep.subr.mxu0 0.0
        %3298 = vmatpush1.msra.mxu0 0.0
        %3299 = vmatprep.subr.mxu0 0.0
        %3300 = vmatpush1.msra.mxu0 0.0
        %3301 = vmatprep.subr.mxu0 0.0
        %3302 = vmatpush1.msra.mxu0 0.0
        %3303 = vmatprep.subr.mxu0 0.0
        %3304 = vmatpush1.msra.mxu0 %v3275
        %3305 = vmatprep.subr.mxu0 0.0
        %3306 = vmatpush1.msra.mxu0 %v3274
        %3307 = vmatprep.subr.mxu0 0.0
        %3308 = vmatpush1.msra.mxu0 %v3273
        %3309 = vmatprep.subr.mxu0 0.0
        %3310 = vmatpush1.msra.mxu0 %v3272
        %3311 = vmatprep.subr.mxu0 0.0
        %3312 = vmatpush2.msra.mxu0 0.0
        %3313 = vmatprep.subr.mxu0 0.0
        %3314 = vmatpush2.msra.mxu0 0.0
        %3315 = vmatprep.subr.mxu0 0.0
        %3316 = vmatpush2.msra.mxu0 0.0
        %3317 = vmatprep.subr.mxu0 0.0
        %3318 = vmatpush2.msra.mxu0 0.0
        %3319 = vmatprep.subr.mxu0 0.0
        %3320 = vmatpush2.msra.mxu0 0.0
        %3321 = vmatprep.subr.mxu0 0.0
        %3322 = vmatpush2.msra.mxu0 0.0
        %3323 = vmatprep.subr.mxu0 0.0
        %3324 = vmatpush2.msra.mxu0 0.0
        %3325 = vmatprep.subr.mxu0 0.0
        %3326 = vmatpush2.msra.mxu0 0.0
        %3327 = vmatprep.subr.mxu0 0.0
        %3328 = vmatpush2.msra.mxu0 0.0
        %3329 = vmatprep.subr.mxu0 0.0
        %3330 = vmatpush2.msra.mxu0 0.0
        %3331 = vmatprep.subr.mxu0 0.0
        %3332 = vmatpush2.msra.mxu0 0.0
        %3333 = vmatprep.subr.mxu0 0.0
        %3334 = vmatpush2.msra.mxu0 0.0
        %3335 = vmatprep.subr.mxu0 0.0
        %3336 = vmatpush2.msra.mxu0 0.0
        %3337 = vmatprep.subr.mxu0 0.0
        %3338 = vmatpush2.msra.mxu0 0.0
        %3339 = vmatprep.subr.mxu0 0.0
        %3340 = vmatpush2.msra.mxu0 0.0
        %3341 = vmatprep.subr.mxu0 0.0
        %3342 = vmatpush2.msra.mxu0 0.0
        %3343 = vmatprep.mubr.f32.mxu0 0.0
        %3344 = vmatmul.mubr.f32.gmra.mxu0 %v3277
        %v3345 = vpop.f32.mrf.mxu0
        %v3346 = vadd.f32 0.0, %v3345
        %v3347 = vpop.f32.mrf.mxu0
        %3348 = vdwg.mxu0
        %v3349 = vadd.f32 %v3271, %v3346
        %v3350 = vld [vmem:[%s1 + $0x340] sm:$0xff]
        %v3351 = vld [vmem:[%s1 + $0x348] sm:$0xff]
        %v3352 = vld [vmem:[%s1 + $0x350] sm:$0xff]
        %v3353 = vld [vmem:[%s1 + $0x358] sm:$0xff]
        %v3355 = vsel %vm2267, %v2251, 0
        %3357 = vmatprep.subr.mxu0 0.0
        %3358 = vmatpush1.msra.mxu0 0.0
        %3359 = vmatprep.subr.mxu0 0.0
        %3360 = vmatpush1.msra.mxu0 0.0
        %3361 = vmatprep.subr.mxu0 0.0
        %3362 = vmatpush1.msra.mxu0 0.0
        %3363 = vmatprep.subr.mxu0 0.0
        %3364 = vmatpush1.msra.mxu0 0.0
        %3365 = vmatprep.subr.mxu0 0.0
        %3366 = vmatpush1.msra.mxu0 0.0
        %3367 = vmatprep.subr.mxu0 0.0
        %3368 = vmatpush1.msra.mxu0 0.0
        %3369 = vmatprep.subr.mxu0 0.0
        %3370 = vmatpush1.msra.mxu0 0.0
        %3371 = vmatprep.subr.mxu0 0.0
        %3372 = vmatpush1.msra.mxu0 0.0
        %3373 = vmatprep.subr.mxu0 0.0
        %3374 = vmatpush1.msra.mxu0 0.0
        %3375 = vmatprep.subr.mxu0 0.0
        %3376 = vmatpush1.msra.mxu0 0.0
        %3377 = vmatprep.subr.mxu0 0.0
        %3378 = vmatpush1.msra.mxu0 0.0
        %3379 = vmatprep.subr.mxu0 0.0
        %3380 = vmatpush1.msra.mxu0 0.0
        %3381 = vmatprep.subr.mxu0 0.0
        %3382 = vmatpush1.msra.mxu0 %v3353
        %3383 = vmatprep.subr.mxu0 0.0
        %3384 = vmatpush1.msra.mxu0 %v3352
        %3385 = vmatprep.subr.mxu0 0.0
        %3386 = vmatpush1.msra.mxu0 %v3351
        %3387 = vmatprep.subr.mxu0 0.0
        %3388 = vmatpush1.msra.mxu0 %v3350
        %3389 = vmatprep.subr.mxu0 0.0
        %3390 = vmatpush2.msra.mxu0 0.0
        %3391 = vmatprep.subr.mxu0 0.0
        %3392 = vmatpush2.msra.mxu0 0.0
        %3393 = vmatprep.subr.mxu0 0.0
        %3394 = vmatpush2.msra.mxu0 0.0
        %3395 = vmatprep.subr.mxu0 0.0
        %3396 = vmatpush2.msra.mxu0 0.0
        %3397 = vmatprep.subr.mxu0 0.0
        %3398 = vmatpush2.msra.mxu0 0.0
        %3399 = vmatprep.subr.mxu0 0.0
        %3400 = vmatpush2.msra.mxu0 0.0
        %3401 = vmatprep.subr.mxu0 0.0
        %3402 = vmatpush2.msra.mxu0 0.0
        %3403 = vmatprep.subr.mxu0 0.0
        %3404 = vmatpush2.msra.mxu0 0.0
        %3405 = vmatprep.subr.mxu0 0.0
        %3406 = vmatpush2.msra.mxu0 0.0
        %3407 = vmatprep.subr.mxu0 0.0
        %3408 = vmatpush2.msra.mxu0 0.0
        %3409 = vmatprep.subr.mxu0 0.0
        %3410 = vmatpush2.msra.mxu0 0.0
        %3411 = vmatprep.subr.mxu0 0.0
        %3412 = vmatpush2.msra.mxu0 0.0
        %3413 = vmatprep.subr.mxu0 0.0
        %3414 = vmatpush2.msra.mxu0 0.0
        %3415 = vmatprep.subr.mxu0 0.0
        %3416 = vmatpush2.msra.mxu0 0.0
        %3417 = vmatprep.subr.mxu0 0.0
        %3418 = vmatpush2.msra.mxu0 0.0
        %3419 = vmatprep.subr.mxu0 0.0
        %3420 = vmatpush2.msra.mxu0 0.0
        %3421 = vmatprep.mubr.f32.mxu0 0.0
        %3422 = vmatmul.mubr.f32.gmra.mxu0 %v3355
        %v3423 = vpop.f32.mrf.mxu0
        %v3424 = vadd.f32 0.0, %v3423
        %v3425 = vpop.f32.mrf.mxu0
        %3426 = vdwg.mxu0
        %v3427 = vadd.f32 %v3349, %v3424
        %v3428 = vld [vmem:[%s1 + $0x360] sm:$0xff]
        %v3429 = vld [vmem:[%s1 + $0x368] sm:$0xff]
        %v3430 = vld [vmem:[%s1 + $0x370] sm:$0xff]
        %v3431 = vld [vmem:[%s1 + $0x378] sm:$0xff]
        %v3433 = vsel %vm2267, %v2256, 0
        %3435 = vmatprep.subr.mxu0 0.0
        %3436 = vmatpush1.msra.mxu0 0.0
        %3437 = vmatprep.subr.mxu0 0.0
        %3438 = vmatpush1.msra.mxu0 0.0
        %3439 = vmatprep.subr.mxu0 0.0
        %3440 = vmatpush1.msra.mxu0 0.0
        %3441 = vmatprep.subr.mxu0 0.0
        %3442 = vmatpush1.msra.mxu0 0.0
        %3443 = vmatprep.subr.mxu0 0.0
        %3444 = vmatpush1.msra.mxu0 0.0
        %3445 = vmatprep.subr.mxu0 0.0
        %3446 = vmatpush1.msra.mxu0 0.0
        %3447 = vmatprep.subr.mxu0 0.0
        %3448 = vmatpush1.msra.mxu0 0.0
        %3449 = vmatprep.subr.mxu0 0.0
        %3450 = vmatpush1.msra.mxu0 0.0
        %3451 = vmatprep.subr.mxu0 0.0
        %3452 = vmatpush1.msra.mxu0 0.0
        %3453 = vmatprep.subr.mxu0 0.0
        %3454 = vmatpush1.msra.mxu0 0.0
        %3455 = vmatprep.subr.mxu0 0.0
        %3456 = vmatpush1.msra.mxu0 0.0
        %3457 = vmatprep.subr.mxu0 0.0
        %3458 = vmatpush1.msra.mxu0 0.0
        %3459 = vmatprep.subr.mxu0 0.0
        %3460 = vmatpush1.msra.mxu0 %v3431
        %3461 = vmatprep.subr.mxu0 0.0
        %3462 = vmatpush1.msra.mxu0 %v3430
        %3463 = vmatprep.subr.mxu0 0.0
        %3464 = vmatpush1.msra.mxu0 %v3429
        %3465 = vmatprep.subr.mxu0 0.0
        %3466 = vmatpush1.msra.mxu0 %v3428
        %3467 = vmatprep.subr.mxu0 0.0
        %3468 = vmatpush2.msra.mxu0 0.0
        %3469 = vmatprep.subr.mxu0 0.0
        %3470 = vmatpush2.msra.mxu0 0.0
        %3471 = vmatprep.subr.mxu0 0.0
        %3472 = vmatpush2.msra.mxu0 0.0
        %3473 = vmatprep.subr.mxu0 0.0
        %3474 = vmatpush2.msra.mxu0 0.0
        %3475 = vmatprep.subr.mxu0 0.0
        %3476 = vmatpush2.msra.mxu0 0.0
        %3477 = vmatprep.subr.mxu0 0.0
        %3478 = vmatpush2.msra.mxu0 0.0
        %3479 = vmatprep.subr.mxu0 0.0
        %3480 = vmatpush2.msra.mxu0 0.0
        %3481 = vmatprep.subr.mxu0 0.0
        %3482 = vmatpush2.msra.mxu0 0.0
        %3483 = vmatprep.subr.mxu0 0.0
        %3484 = vmatpush2.msra.mxu0 0.0
        %3485 = vmatprep.subr.mxu0 0.0
        %3486 = vmatpush2.msra.mxu0 0.0
        %3487 = vmatprep.subr.mxu0 0.0
        %3488 = vmatpush2.msra.mxu0 0.0
        %3489 = vmatprep.subr.mxu0 0.0
        %3490 = vmatpush2.msra.mxu0 0.0
        %3491 = vmatprep.subr.mxu0 0.0
        %3492 = vmatpush2.msra.mxu0 0.0
        %3493 = vmatprep.subr.mxu0 0.0
        %3494 = vmatpush2.msra.mxu0 0.0
        %3495 = vmatprep.subr.mxu0 0.0
        %3496 = vmatpush2.msra.mxu0 0.0
        %3497 = vmatprep.subr.mxu0 0.0
        %3498 = vmatpush2.msra.mxu0 0.0
        %3499 = vmatprep.mubr.f32.mxu0 0.0
        %3500 = vmatmul.mubr.f32.gmra.mxu0 %v3433
        %v3501 = vpop.f32.mrf.mxu0
        %v3502 = vadd.f32 0.0, %v3501
        %v3503 = vpop.f32.mrf.mxu0
        %3504 = vdwg.mxu0
        %v3505 = vadd.f32 %v3427, %v3502
        %v3506 = vld [vmem:[%s2 + $0x410] sm:$0x1]
        %v3507 = vlaneseq
        %v3508 = vshrl.u32 %v3507, 7
        %v3509 = vsub.s32 0, %v3508
        %v3510 = vrot.slane %v3506, %v3509
        %v3511 = vadd.f32 %v3505, %v3510
        %vm3512 = vcmp.gt.f32.partialorder %v3511, 0.0
        %v3513 = vmul.f32 %v3511, 0.2
        %v3514 = vsel %vm3512, %v3511, %v3513
        %v3515 = vld [vmem:[%s1 + $0x580] sm:$0xff]
        %v3516 = vld [vmem:[%s1 + $0x588] sm:$0xff]
        %v3517 = vld [vmem:[%s1 + $0x590] sm:$0xff]
        %v3518 = vld [vmem:[%s1 + $0x598] sm:$0xff]
        %v3519 = vld [vmem:[%s1 + $0x5a0] sm:$0xff]
        %v3520 = vld [vmem:[%s1 + $0x5a8] sm:$0xff]
        %v3521 = vld [vmem:[%s1 + $0x5b0] sm:$0xff]
        %v3522 = vld [vmem:[%s1 + $0x5b8] sm:$0xff]
        %v3523 = vld [vmem:[%s1 + $0x5c0] sm:$0xff]
        %v3524 = vld [vmem:[%s1 + $0x5c8] sm:$0xff]
        %v3525 = vld [vmem:[%s1 + $0x5d0] sm:$0xff]
        %v3526 = vld [vmem:[%s1 + $0x5d8] sm:$0xff]
        %v3527 = vld [vmem:[%s1 + $0x5e0] sm:$0xff]
        %v3528 = vld [vmem:[%s1 + $0x5e8] sm:$0xff]
        %v3529 = vld [vmem:[%s1 + $0x5f0] sm:$0xff]
        %v3530 = vld [vmem:[%s1 + $0x5f8] sm:$0xff]
        %vm3531 = vcmask 31744
        %v3533 = vsel %vm3531, %v3515, 0
        %v3536 = vsel %vm3531, %v3516, 0
        %v3539 = vsel %vm3531, %v3517, 0
        %v3542 = vsel %vm3531, %v3518, 0
        %v3545 = vsel %vm3531, %v3519, 0
        %v3548 = vsel %vm3531, %v3520, 0
        %v3551 = vsel %vm3531, %v3521, 0
        %v3554 = vsel %vm3531, %v3522, 0
        %v3557 = vsel %vm3531, %v3523, 0
        %v3560 = vsel %vm3531, %v3524, 0
        %v3563 = vsel %vm3531, %v3525, 0
        %v3566 = vsel %vm3531, %v3526, 0
        %v3569 = vsel %vm3531, %v3527, 0
        %v3572 = vsel %vm3531, %v3528, 0
        %v3575 = vsel %vm3531, %v3529, 0
        %v3578 = vsel %vm3531, %v3530, 0
        %vm3580 = vcmask 1043456
        %v3582 = vsel %vm3580, %v3514, 0
        %3584 = vmatprep.subr.mxu0 0.0
        %3585 = vmatpush1.msra.mxu0 0.0
        %3586 = vmatprep.subr.mxu0 0.0
        %3587 = vmatpush1.msra.mxu0 0.0
        %3588 = vmatprep.subr.mxu0 0.0
        %3589 = vmatpush1.msra.mxu0 0.0
        %3590 = vmatprep.subr.mxu0 0.0
        %3591 = vmatpush1.msra.mxu0 0.0
        %3592 = vmatprep.subr.mxu0 0.0
        %3593 = vmatpush1.msra.mxu0 0.0
        %3594 = vmatprep.subr.mxu0 0.0
        %3595 = vmatpush1.msra.mxu0 0.0
        %3596 = vmatprep.subr.mxu0 0.0
        %3597 = vmatpush1.msra.mxu0 0.0
        %3598 = vmatprep.subr.mxu0 0.0
        %3599 = vmatpush1.msra.mxu0 0.0
        %3600 = vmatprep.subr.mxu0 0.0
        %3601 = vmatpush1.msra.mxu0 0.0
        %3602 = vmatprep.subr.mxu0 0.0
        %3603 = vmatpush1.msra.mxu0 0.0
        %3604 = vmatprep.subr.mxu0 0.0
        %3605 = vmatpush1.msra.mxu0 0.0
        %3606 = vmatprep.subr.mxu0 0.0
        %3607 = vmatpush1.msra.mxu0 0.0
        %3608 = vmatprep.subr.mxu0 0.0
        %3609 = vmatpush1.msra.mxu0 0.0
        %3610 = vmatprep.subr.mxu0 0.0
        %3611 = vmatpush1.msra.mxu0 0.0
        %3612 = vmatprep.subr.mxu0 0.0
        %3613 = vmatpush1.msra.mxu0 0.0
        %3614 = vmatprep.subr.mxu0 0.0
        %3615 = vmatpush1.msra.mxu0 %v3582
        %3616 = vmatprep.subr.mxu0 0.0
        %3617 = vmatpush2.msra.mxu0 0.0
        %3618 = vmatprep.subr.mxu0 0.0
        %3619 = vmatpush2.msra.mxu0 0.0
        %3620 = vmatprep.subr.mxu0 0.0
        %3621 = vmatpush2.msra.mxu0 0.0
        %3622 = vmatprep.subr.mxu0 0.0
        %3623 = vmatpush2.msra.mxu0 0.0
        %3624 = vmatprep.subr.mxu0 0.0
        %3625 = vmatpush2.msra.mxu0 0.0
        %3626 = vmatprep.subr.mxu0 0.0
        %3627 = vmatpush2.msra.mxu0 0.0
        %3628 = vmatprep.subr.mxu0 0.0
        %3629 = vmatpush2.msra.mxu0 0.0
        %3630 = vmatprep.subr.mxu0 0.0
        %3631 = vmatpush2.msra.mxu0 0.0
        %3632 = vmatprep.subr.mxu0 0.0
        %3633 = vmatpush2.msra.mxu0 0.0
        %3634 = vmatprep.subr.mxu0 0.0
        %3635 = vmatpush2.msra.mxu0 0.0
        %3636 = vmatprep.subr.mxu0 0.0
        %3637 = vmatpush2.msra.mxu0 0.0
        %3638 = vmatprep.subr.mxu0 0.0
        %3639 = vmatpush2.msra.mxu0 0.0
        %3640 = vmatprep.subr.mxu0 0.0
        %3641 = vmatpush2.msra.mxu0 0.0
        %3642 = vmatprep.subr.mxu0 0.0
        %3643 = vmatpush2.msra.mxu0 0.0
        %3644 = vmatprep.subr.mxu0 0.0
        %3645 = vmatpush2.msra.mxu0 0.0
        %3646 = vmatprep.subr.mxu0 0.0
        %3647 = vmatpush2.msra.mxu0 0.0
        %3648 = vmatprep.mubr.f32.mxu0 0.0
        %3649 = vmatmul.mubr.f32.gmra.mxu0 %v3533
        %v3650 = vpop.f32.mrf.mxu0
        %v3651 = vadd.f32 0.0, %v3650
        %v3652 = vpop.f32.mrf.mxu0
        %3653 = vmatprep.mubr.f32.mxu0 0.0
        %3654 = vmatmul.mubr.f32.gmra.mxu0 %v3536
        %v3655 = vpop.f32.mrf.mxu0
        %v3656 = vadd.f32 0.0, %v3655
        %v3657 = vpop.f32.mrf.mxu0
        %3658 = vmatprep.mubr.f32.mxu0 0.0
        %3659 = vmatmul.mubr.f32.gmra.mxu0 %v3539
        %v3660 = vpop.f32.mrf.mxu0
        %v3661 = vadd.f32 0.0, %v3660
        %v3662 = vpop.f32.mrf.mxu0
        %3663 = vmatprep.mubr.f32.mxu0 0.0
        %3664 = vmatmul.mubr.f32.gmra.mxu0 %v3542
        %v3665 = vpop.f32.mrf.mxu0
        %v3666 = vadd.f32 0.0, %v3665
        %v3667 = vpop.f32.mrf.mxu0
        %3668 = vmatprep.mubr.f32.mxu0 0.0
        %3669 = vmatmul.mubr.f32.gmra.mxu0 %v3545
        %v3670 = vpop.f32.mrf.mxu0
        %v3671 = vadd.f32 0.0, %v3670
        %v3672 = vpop.f32.mrf.mxu0
        %3673 = vmatprep.mubr.f32.mxu0 0.0
        %3674 = vmatmul.mubr.f32.gmra.mxu0 %v3548
        %v3675 = vpop.f32.mrf.mxu0
        %v3676 = vadd.f32 0.0, %v3675
        %v3677 = vpop.f32.mrf.mxu0
        %3678 = vmatprep.mubr.f32.mxu0 0.0
        %3679 = vmatmul.mubr.f32.gmra.mxu0 %v3551
        %v3680 = vpop.f32.mrf.mxu0
        %v3681 = vadd.f32 0.0, %v3680
        %v3682 = vpop.f32.mrf.mxu0
        %3683 = vmatprep.mubr.f32.mxu0 0.0
        %3684 = vmatmul.mubr.f32.gmra.mxu0 %v3554
        %v3685 = vpop.f32.mrf.mxu0
        %v3686 = vadd.f32 0.0, %v3685
        %v3687 = vpop.f32.mrf.mxu0
        %3688 = vmatprep.mubr.f32.mxu0 0.0
        %3689 = vmatmul.mubr.f32.gmra.mxu0 %v3557
        %v3690 = vpop.f32.mrf.mxu0
        %v3691 = vadd.f32 0.0, %v3690
        %v3692 = vpop.f32.mrf.mxu0
        %3693 = vmatprep.mubr.f32.mxu0 0.0
        %3694 = vmatmul.mubr.f32.gmra.mxu0 %v3560
        %v3695 = vpop.f32.mrf.mxu0
        %v3696 = vadd.f32 0.0, %v3695
        %v3697 = vpop.f32.mrf.mxu0
        %3698 = vmatprep.mubr.f32.mxu0 0.0
        %3699 = vmatmul.mubr.f32.gmra.mxu0 %v3563
        %v3700 = vpop.f32.mrf.mxu0
        %v3701 = vadd.f32 0.0, %v3700
        %v3702 = vpop.f32.mrf.mxu0
        %3703 = vmatprep.mubr.f32.mxu0 0.0
        %3704 = vmatmul.mubr.f32.gmra.mxu0 %v3566
        %v3705 = vpop.f32.mrf.mxu0
        %v3706 = vadd.f32 0.0, %v3705
        %v3707 = vpop.f32.mrf.mxu0
        %3708 = vmatprep.mubr.f32.mxu0 0.0
        %3709 = vmatmul.mubr.f32.gmra.mxu0 %v3569
        %v3710 = vpop.f32.mrf.mxu0
        %v3711 = vadd.f32 0.0, %v3710
        %v3712 = vpop.f32.mrf.mxu0
        %3713 = vmatprep.mubr.f32.mxu0 0.0
        %3714 = vmatmul.mubr.f32.gmra.mxu0 %v3572
        %v3715 = vpop.f32.mrf.mxu0
        %v3716 = vadd.f32 0.0, %v3715
        %v3717 = vpop.f32.mrf.mxu0
        %3718 = vmatprep.mubr.f32.mxu0 0.0
        %3719 = vmatmul.mubr.f32.gmra.mxu0 %v3575
        %v3720 = vpop.f32.mrf.mxu0
        %v3721 = vadd.f32 0.0, %v3720
        %v3722 = vpop.f32.mrf.mxu0
        %3723 = vmatprep.mubr.f32.mxu0 0.0
        %3724 = vmatmul.mubr.f32.gmra.mxu0 %v3578
        %v3725 = vpop.f32.mrf.mxu0
        %v3726 = vadd.f32 0.0, %v3725
        %v3727 = vpop.f32.mrf.mxu0
        %3728 = vdwg.mxu0
        %v3729 = vld [vmem:[%s2] sm:$0xff]
        %v3730 = vld [vmem:[%s2 + $0x8] sm:$0xff]
        %v3731 = vld [vmem:[%s2 + $0x10] sm:$0xff]
        %v3732 = vld [vmem:[%s2 + $0x18] sm:$0xff]
        %v3733 = vld [vmem:[%s2 + $0x20] sm:$0xff]
        %v3734 = vld [vmem:[%s2 + $0x28] sm:$0xff]
        %v3735 = vld [vmem:[%s2 + $0x30] sm:$0xff]
        %v3736 = vld [vmem:[%s2 + $0x38] sm:$0xff]
        %v3737 = vld [vmem:[%s2 + $0x40] sm:$0xff]
        %v3738 = vld [vmem:[%s2 + $0x48] sm:$0xff]
        %v3739 = vld [vmem:[%s2 + $0x50] sm:$0xff]
        %v3740 = vld [vmem:[%s2 + $0x58] sm:$0xff]
        %v3741 = vld [vmem:[%s2 + $0x60] sm:$0xff]
        %v3742 = vld [vmem:[%s2 + $0x68] sm:$0xff]
        %v3743 = vld [vmem:[%s2 + $0x70] sm:$0xff]
        %v3744 = vld [vmem:[%s2 + $0x78] sm:$0xff]
        %v3746 = vsel %vm358, %v3656, 0
        %3748 = vmatprep.subr.mxu0 0.0
        %3749 = vmatpush1.msra.mxu0 0.0
        %3750 = vmatprep.subr.mxu0 0.0
        %3751 = vmatpush1.msra.mxu0 0.0
        %3752 = vmatprep.subr.mxu0 0.0
        %3753 = vmatpush1.msra.mxu0 0.0
        %3754 = vmatprep.subr.mxu0 0.0
        %3755 = vmatpush1.msra.mxu0 0.0
        %3756 = vmatprep.subr.mxu0 0.0
        %3757 = vmatpush1.msra.mxu0 0.0
        %3758 = vmatprep.subr.mxu0 0.0
        %3759 = vmatpush1.msra.mxu0 0.0
        %3760 = vmatprep.subr.mxu0 0.0
        %3761 = vmatpush1.msra.mxu0 0.0
        %3762 = vmatprep.subr.mxu0 0.0
        %3763 = vmatpush1.msra.mxu0 0.0
        %3764 = vmatprep.subr.mxu0 0.0
        %3765 = vmatpush1.msra.mxu0 %v3744
        %3766 = vmatprep.subr.mxu0 0.0
        %3767 = vmatpush1.msra.mxu0 %v3743
        %3768 = vmatprep.subr.mxu0 0.0
        %3769 = vmatpush1.msra.mxu0 %v3742
        %3770 = vmatprep.subr.mxu0 0.0
        %3771 = vmatpush1.msra.mxu0 %v3741
        %3772 = vmatprep.subr.mxu0 0.0
        %3773 = vmatpush1.msra.mxu0 %v3740
        %3774 = vmatprep.subr.mxu0 0.0
        %3775 = vmatpush1.msra.mxu0 %v3739
        %3776 = vmatprep.subr.mxu0 0.0
        %3777 = vmatpush1.msra.mxu0 %v3738
        %3778 = vmatprep.subr.mxu0 0.0
        %3779 = vmatpush1.msra.mxu0 %v3737
        %3780 = vmatprep.subr.mxu0 0.0
        %3781 = vmatpush2.msra.mxu0 0.0
        %3782 = vmatprep.subr.mxu0 0.0
        %3783 = vmatpush2.msra.mxu0 0.0
        %3784 = vmatprep.subr.mxu0 0.0
        %3785 = vmatpush2.msra.mxu0 0.0
        %3786 = vmatprep.subr.mxu0 0.0
        %3787 = vmatpush2.msra.mxu0 0.0
        %3788 = vmatprep.subr.mxu0 0.0
        %3789 = vmatpush2.msra.mxu0 0.0
        %3790 = vmatprep.subr.mxu0 0.0
        %3791 = vmatpush2.msra.mxu0 0.0
        %3792 = vmatprep.subr.mxu0 0.0
        %3793 = vmatpush2.msra.mxu0 0.0
        %3794 = vmatprep.subr.mxu0 0.0
        %3795 = vmatpush2.msra.mxu0 0.0
        %3796 = vmatprep.subr.mxu0 0.0
        %3797 = vmatpush2.msra.mxu0 0.0
        %3798 = vmatprep.subr.mxu0 0.0
        %3799 = vmatpush2.msra.mxu0 0.0
        %3800 = vmatprep.subr.mxu0 0.0
        %3801 = vmatpush2.msra.mxu0 0.0
        %3802 = vmatprep.subr.mxu0 0.0
        %3803 = vmatpush2.msra.mxu0 0.0
        %3804 = vmatprep.subr.mxu0 0.0
        %3805 = vmatpush2.msra.mxu0 0.0
        %3806 = vmatprep.subr.mxu0 0.0
        %3807 = vmatpush2.msra.mxu0 0.0
        %3808 = vmatprep.subr.mxu0 0.0
        %3809 = vmatpush2.msra.mxu0 0.0
        %3810 = vmatprep.subr.mxu0 0.0
        %3811 = vmatpush2.msra.mxu0 0.0
        %3812 = vmatprep.mubr.f32.mxu0 0.0
        %3813 = vmatmul.mubr.f32.gmra.mxu0 %v3746
        %v3814 = vpop.f32.mrf.mxu0
        %v3815 = vadd.f32 0.0, %v3814
        %v3816 = vpop.f32.mrf.mxu0
        %3817 = vdwg.mxu0
        %v3819 = vsel %vm358, %v3651, 0
        %3821 = vmatprep.subr.mxu0 0.0
        %3822 = vmatpush1.msra.mxu0 0.0
        %3823 = vmatprep.subr.mxu0 0.0
        %3824 = vmatpush1.msra.mxu0 0.0
        %3825 = vmatprep.subr.mxu0 0.0
        %3826 = vmatpush1.msra.mxu0 0.0
        %3827 = vmatprep.subr.mxu0 0.0
        %3828 = vmatpush1.msra.mxu0 0.0
        %3829 = vmatprep.subr.mxu0 0.0
        %3830 = vmatpush1.msra.mxu0 0.0
        %3831 = vmatprep.subr.mxu0 0.0
        %3832 = vmatpush1.msra.mxu0 0.0
        %3833 = vmatprep.subr.mxu0 0.0
        %3834 = vmatpush1.msra.mxu0 0.0
        %3835 = vmatprep.subr.mxu0 0.0
        %3836 = vmatpush1.msra.mxu0 0.0
        %3837 = vmatprep.subr.mxu0 0.0
        %3838 = vmatpush1.msra.mxu0 %v3736
        %3839 = vmatprep.subr.mxu0 0.0
        %3840 = vmatpush1.msra.mxu0 %v3735
        %3841 = vmatprep.subr.mxu0 0.0
        %3842 = vmatpush1.msra.mxu0 %v3734
        %3843 = vmatprep.subr.mxu0 0.0
        %3844 = vmatpush1.msra.mxu0 %v3733
        %3845 = vmatprep.subr.mxu0 0.0
        %3846 = vmatpush1.msra.mxu0 %v3732
        %3847 = vmatprep.subr.mxu0 0.0
        %3848 = vmatpush1.msra.mxu0 %v3731
        %3849 = vmatprep.subr.mxu0 0.0
        %3850 = vmatpush1.msra.mxu0 %v3730
        %3851 = vmatprep.subr.mxu0 0.0
        %3852 = vmatpush1.msra.mxu0 %v3729
        %3853 = vmatprep.subr.mxu0 0.0
        %3854 = vmatpush2.msra.mxu0 0.0
        %3855 = vmatprep.subr.mxu0 0.0
        %3856 = vmatpush2.msra.mxu0 0.0
        %3857 = vmatprep.subr.mxu0 0.0
        %3858 = vmatpush2.msra.mxu0 0.0
        %3859 = vmatprep.subr.mxu0 0.0
        %3860 = vmatpush2.msra.mxu0 0.0
        %3861 = vmatprep.subr.mxu0 0.0
        %3862 = vmatpush2.msra.mxu0 0.0
        %3863 = vmatprep.subr.mxu0 0.0
        %3864 = vmatpush2.msra.mxu0 0.0
        %3865 = vmatprep.subr.mxu0 0.0
        %3866 = vmatpush2.msra.mxu0 0.0
        %3867 = vmatprep.subr.mxu0 0.0
        %3868 = vmatpush2.msra.mxu0 0.0
        %3869 = vmatprep.subr.mxu0 0.0
        %3870 = vmatpush2.msra.mxu0 0.0
        %3871 = vmatprep.subr.mxu0 0.0
        %3872 = vmatpush2.msra.mxu0 0.0
        %3873 = vmatprep.subr.mxu0 0.0
        %3874 = vmatpush2.msra.mxu0 0.0
        %3875 = vmatprep.subr.mxu0 0.0
        %3876 = vmatpush2.msra.mxu0 0.0
        %3877 = vmatprep.subr.mxu0 0.0
        %3878 = vmatpush2.msra.mxu0 0.0
        %3879 = vmatprep.subr.mxu0 0.0
        %3880 = vmatpush2.msra.mxu0 0.0
        %3881 = vmatprep.subr.mxu0 0.0
        %3882 = vmatpush2.msra.mxu0 0.0
        %3883 = vmatprep.subr.mxu0 0.0
        %3884 = vmatpush2.msra.mxu0 0.0
        %3885 = vmatprep.mubr.f32.mxu0 0.0
        %3886 = vmatmul.mubr.f32.gmra.mxu0 %v3819
        %v3887 = vpop.f32.mrf.mxu0
        %v3888 = vadd.f32 %v3815, %v3887
        %v3889 = vpop.f32.mrf.mxu0
        %3890 = vdwg.mxu0
        %v3891 = vld [vmem:[%s2 + $0x80] sm:$0xff]
        %v3892 = vld [vmem:[%s2 + $0x88] sm:$0xff]
        %v3893 = vld [vmem:[%s2 + $0x90] sm:$0xff]
        %v3894 = vld [vmem:[%s2 + $0x98] sm:$0xff]
        %v3895 = vld [vmem:[%s2 + $0xa0] sm:$0xff]
        %v3896 = vld [vmem:[%s2 + $0xa8] sm:$0xff]
        %v3897 = vld [vmem:[%s2 + $0xb0] sm:$0xff]
        %v3898 = vld [vmem:[%s2 + $0xb8] sm:$0xff]
        %v3900 = vsel %vm358, %v3661, 0
        %3902 = vmatprep.subr.mxu0 0.0
        %3903 = vmatpush1.msra.mxu0 0.0
        %3904 = vmatprep.subr.mxu0 0.0
        %3905 = vmatpush1.msra.mxu0 0.0
        %3906 = vmatprep.subr.mxu0 0.0
        %3907 = vmatpush1.msra.mxu0 0.0
        %3908 = vmatprep.subr.mxu0 0.0
        %3909 = vmatpush1.msra.mxu0 0.0
        %3910 = vmatprep.subr.mxu0 0.0
        %3911 = vmatpush1.msra.mxu0 0.0
        %3912 = vmatprep.subr.mxu0 0.0
        %3913 = vmatpush1.msra.mxu0 0.0
        %3914 = vmatprep.subr.mxu0 0.0
        %3915 = vmatpush1.msra.mxu0 0.0
        %3916 = vmatprep.subr.mxu0 0.0
        %3917 = vmatpush1.msra.mxu0 0.0
        %3918 = vmatprep.subr.mxu0 0.0
        %3919 = vmatpush1.msra.mxu0 %v3898
        %3920 = vmatprep.subr.mxu0 0.0
        %3921 = vmatpush1.msra.mxu0 %v3897
        %3922 = vmatprep.subr.mxu0 0.0
        %3923 = vmatpush1.msra.mxu0 %v3896
        %3924 = vmatprep.subr.mxu0 0.0
        %3925 = vmatpush1.msra.mxu0 %v3895
        %3926 = vmatprep.subr.mxu0 0.0
        %3927 = vmatpush1.msra.mxu0 %v3894
        %3928 = vmatprep.subr.mxu0 0.0
        %3929 = vmatpush1.msra.mxu0 %v3893
        %3930 = vmatprep.subr.mxu0 0.0
        %3931 = vmatpush1.msra.mxu0 %v3892
        %3932 = vmatprep.subr.mxu0 0.0
        %3933 = vmatpush1.msra.mxu0 %v3891
        %3934 = vmatprep.subr.mxu0 0.0
        %3935 = vmatpush2.msra.mxu0 0.0
        %3936 = vmatprep.subr.mxu0 0.0
        %3937 = vmatpush2.msra.mxu0 0.0
        %3938 = vmatprep.subr.mxu0 0.0
        %3939 = vmatpush2.msra.mxu0 0.0
        %3940 = vmatprep.subr.mxu0 0.0
        %3941 = vmatpush2.msra.mxu0 0.0
        %3942 = vmatprep.subr.mxu0 0.0
        %3943 = vmatpush2.msra.mxu0 0.0
        %3944 = vmatprep.subr.mxu0 0.0
        %3945 = vmatpush2.msra.mxu0 0.0
        %3946 = vmatprep.subr.mxu0 0.0
        %3947 = vmatpush2.msra.mxu0 0.0
        %3948 = vmatprep.subr.mxu0 0.0
        %3949 = vmatpush2.msra.mxu0 0.0
        %3950 = vmatprep.subr.mxu0 0.0
        %3951 = vmatpush2.msra.mxu0 0.0
        %3952 = vmatprep.subr.mxu0 0.0
        %3953 = vmatpush2.msra.mxu0 0.0
        %3954 = vmatprep.subr.mxu0 0.0
        %3955 = vmatpush2.msra.mxu0 0.0
        %3956 = vmatprep.subr.mxu0 0.0
        %3957 = vmatpush2.msra.mxu0 0.0
        %3958 = vmatprep.subr.mxu0 0.0
        %3959 = vmatpush2.msra.mxu0 0.0
        %3960 = vmatprep.subr.mxu0 0.0
        %3961 = vmatpush2.msra.mxu0 0.0
        %3962 = vmatprep.subr.mxu0 0.0
        %3963 = vmatpush2.msra.mxu0 0.0
        %3964 = vmatprep.subr.mxu0 0.0
        %3965 = vmatpush2.msra.mxu0 0.0
        %3966 = vmatprep.mubr.f32.mxu0 0.0
        %3967 = vmatmul.mubr.f32.gmra.mxu0 %v3900
        %v3968 = vpop.f32.mrf.mxu0
        %v3969 = vadd.f32 0.0, %v3968
        %v3970 = vpop.f32.mrf.mxu0
        %3971 = vdwg.mxu0
        %v3972 = vadd.f32 %v3888, %v3969
        %v3973 = vld [vmem:[%s2 + $0xc0] sm:$0xff]
        %v3974 = vld [vmem:[%s2 + $0xc8] sm:$0xff]
        %v3975 = vld [vmem:[%s2 + $0xd0] sm:$0xff]
        %v3976 = vld [vmem:[%s2 + $0xd8] sm:$0xff]
        %v3977 = vld [vmem:[%s2 + $0xe0] sm:$0xff]
        %v3978 = vld [vmem:[%s2 + $0xe8] sm:$0xff]
        %v3979 = vld [vmem:[%s2 + $0xf0] sm:$0xff]
        %v3980 = vld [vmem:[%s2 + $0xf8] sm:$0xff]
        %v3982 = vsel %vm358, %v3666, 0
        %3984 = vmatprep.subr.mxu0 0.0
        %3985 = vmatpush1.msra.mxu0 0.0
        %3986 = vmatprep.subr.mxu0 0.0
        %3987 = vmatpush1.msra.mxu0 0.0
        %3988 = vmatprep.subr.mxu0 0.0
        %3989 = vmatpush1.msra.mxu0 0.0
        %3990 = vmatprep.subr.mxu0 0.0
        %3991 = vmatpush1.msra.mxu0 0.0
        %3992 = vmatprep.subr.mxu0 0.0
        %3993 = vmatpush1.msra.mxu0 0.0
        %3994 = vmatprep.subr.mxu0 0.0
        %3995 = vmatpush1.msra.mxu0 0.0
        %3996 = vmatprep.subr.mxu0 0.0
        %3997 = vmatpush1.msra.mxu0 0.0
        %3998 = vmatprep.subr.mxu0 0.0
        %3999 = vmatpush1.msra.mxu0 0.0
        %4000 = vmatprep.subr.mxu0 0.0
        %4001 = vmatpush1.msra.mxu0 %v3980
        %4002 = vmatprep.subr.mxu0 0.0
        %4003 = vmatpush1.msra.mxu0 %v3979
        %4004 = vmatprep.subr.mxu0 0.0
        %4005 = vmatpush1.msra.mxu0 %v3978
        %4006 = vmatprep.subr.mxu0 0.0
        %4007 = vmatpush1.msra.mxu0 %v3977
        %4008 = vmatprep.subr.mxu0 0.0
        %4009 = vmatpush1.msra.mxu0 %v3976
        %4010 = vmatprep.subr.mxu0 0.0
        %4011 = vmatpush1.msra.mxu0 %v3975
        %4012 = vmatprep.subr.mxu0 0.0
        %4013 = vmatpush1.msra.mxu0 %v3974
        %4014 = vmatprep.subr.mxu0 0.0
        %4015 = vmatpush1.msra.mxu0 %v3973
        %4016 = vmatprep.subr.mxu0 0.0
        %4017 = vmatpush2.msra.mxu0 0.0
        %4018 = vmatprep.subr.mxu0 0.0
        %4019 = vmatpush2.msra.mxu0 0.0
        %4020 = vmatprep.subr.mxu0 0.0
        %4021 = vmatpush2.msra.mxu0 0.0
        %4022 = vmatprep.subr.mxu0 0.0
        %4023 = vmatpush2.msra.mxu0 0.0
        %4024 = vmatprep.subr.mxu0 0.0
        %4025 = vmatpush2.msra.mxu0 0.0
        %4026 = vmatprep.subr.mxu0 0.0
        %4027 = vmatpush2.msra.mxu0 0.0
        %4028 = vmatprep.subr.mxu0 0.0
        %4029 = vmatpush2.msra.mxu0 0.0
        %4030 = vmatprep.subr.mxu0 0.0
        %4031 = vmatpush2.msra.mxu0 0.0
        %4032 = vmatprep.subr.mxu0 0.0
        %4033 = vmatpush2.msra.mxu0 0.0
        %4034 = vmatprep.subr.mxu0 0.0
        %4035 = vmatpush2.msra.mxu0 0.0
        %4036 = vmatprep.subr.mxu0 0.0
        %4037 = vmatpush2.msra.mxu0 0.0
        %4038 = vmatprep.subr.mxu0 0.0
        %4039 = vmatpush2.msra.mxu0 0.0
        %4040 = vmatprep.subr.mxu0 0.0
        %4041 = vmatpush2.msra.mxu0 0.0
        %4042 = vmatprep.subr.mxu0 0.0
        %4043 = vmatpush2.msra.mxu0 0.0
        %4044 = vmatprep.subr.mxu0 0.0
        %4045 = vmatpush2.msra.mxu0 0.0
        %4046 = vmatprep.subr.mxu0 0.0
        %4047 = vmatpush2.msra.mxu0 0.0
        %4048 = vmatprep.mubr.f32.mxu0 0.0
        %4049 = vmatmul.mubr.f32.gmra.mxu0 %v3982
        %v4050 = vpop.f32.mrf.mxu0
        %v4051 = vadd.f32 0.0, %v4050
        %v4052 = vpop.f32.mrf.mxu0
        %4053 = vdwg.mxu0
        %v4054 = vadd.f32 %v3972, %v4051
        %v4055 = vld [vmem:[%s2 + $0x100] sm:$0xff]
        %v4056 = vld [vmem:[%s2 + $0x108] sm:$0xff]
        %v4057 = vld [vmem:[%s2 + $0x110] sm:$0xff]
        %v4058 = vld [vmem:[%s2 + $0x118] sm:$0xff]
        %v4059 = vld [vmem:[%s2 + $0x120] sm:$0xff]
        %v4060 = vld [vmem:[%s2 + $0x128] sm:$0xff]
        %v4061 = vld [vmem:[%s2 + $0x130] sm:$0xff]
        %v4062 = vld [vmem:[%s2 + $0x138] sm:$0xff]
        %v4064 = vsel %vm358, %v3671, 0
        %4066 = vmatprep.subr.mxu0 0.0
        %4067 = vmatpush1.msra.mxu0 0.0
        %4068 = vmatprep.subr.mxu0 0.0
        %4069 = vmatpush1.msra.mxu0 0.0
        %4070 = vmatprep.subr.mxu0 0.0
        %4071 = vmatpush1.msra.mxu0 0.0
        %4072 = vmatprep.subr.mxu0 0.0
        %4073 = vmatpush1.msra.mxu0 0.0
        %4074 = vmatprep.subr.mxu0 0.0
        %4075 = vmatpush1.msra.mxu0 0.0
        %4076 = vmatprep.subr.mxu0 0.0
        %4077 = vmatpush1.msra.mxu0 0.0
        %4078 = vmatprep.subr.mxu0 0.0
        %4079 = vmatpush1.msra.mxu0 0.0
        %4080 = vmatprep.subr.mxu0 0.0
        %4081 = vmatpush1.msra.mxu0 0.0
        %4082 = vmatprep.subr.mxu0 0.0
        %4083 = vmatpush1.msra.mxu0 %v4062
        %4084 = vmatprep.subr.mxu0 0.0
        %4085 = vmatpush1.msra.mxu0 %v4061
        %4086 = vmatprep.subr.mxu0 0.0
        %4087 = vmatpush1.msra.mxu0 %v4060
        %4088 = vmatprep.subr.mxu0 0.0
        %4089 = vmatpush1.msra.mxu0 %v4059
        %4090 = vmatprep.subr.mxu0 0.0
        %4091 = vmatpush1.msra.mxu0 %v4058
        %4092 = vmatprep.subr.mxu0 0.0
        %4093 = vmatpush1.msra.mxu0 %v4057
        %4094 = vmatprep.subr.mxu0 0.0
        %4095 = vmatpush1.msra.mxu0 %v4056
        %4096 = vmatprep.subr.mxu0 0.0
        %4097 = vmatpush1.msra.mxu0 %v4055
        %4098 = vmatprep.subr.mxu0 0.0
        %4099 = vmatpush2.msra.mxu0 0.0
        %4100 = vmatprep.subr.mxu0 0.0
        %4101 = vmatpush2.msra.mxu0 0.0
        %4102 = vmatprep.subr.mxu0 0.0
        %4103 = vmatpush2.msra.mxu0 0.0
        %4104 = vmatprep.subr.mxu0 0.0
        %4105 = vmatpush2.msra.mxu0 0.0
        %4106 = vmatprep.subr.mxu0 0.0
        %4107 = vmatpush2.msra.mxu0 0.0
        %4108 = vmatprep.subr.mxu0 0.0
        %4109 = vmatpush2.msra.mxu0 0.0
        %4110 = vmatprep.subr.mxu0 0.0
        %4111 = vmatpush2.msra.mxu0 0.0
        %4112 = vmatprep.subr.mxu0 0.0
        %4113 = vmatpush2.msra.mxu0 0.0
        %4114 = vmatprep.subr.mxu0 0.0
        %4115 = vmatpush2.msra.mxu0 0.0
        %4116 = vmatprep.subr.mxu0 0.0
        %4117 = vmatpush2.msra.mxu0 0.0
        %4118 = vmatprep.subr.mxu0 0.0
        %4119 = vmatpush2.msra.mxu0 0.0
        %4120 = vmatprep.subr.mxu0 0.0
        %4121 = vmatpush2.msra.mxu0 0.0
        %4122 = vmatprep.subr.mxu0 0.0
        %4123 = vmatpush2.msra.mxu0 0.0
        %4124 = vmatprep.subr.mxu0 0.0
        %4125 = vmatpush2.msra.mxu0 0.0
        %4126 = vmatprep.subr.mxu0 0.0
        %4127 = vmatpush2.msra.mxu0 0.0
        %4128 = vmatprep.subr.mxu0 0.0
        %4129 = vmatpush2.msra.mxu0 0.0
        %4130 = vmatprep.mubr.f32.mxu0 0.0
        %4131 = vmatmul.mubr.f32.gmra.mxu0 %v4064
        %v4132 = vpop.f32.mrf.mxu0
        %v4133 = vadd.f32 0.0, %v4132
        %v4134 = vpop.f32.mrf.mxu0
        %4135 = vdwg.mxu0
        %v4136 = vadd.f32 %v4054, %v4133
        %v4137 = vld [vmem:[%s2 + $0x140] sm:$0xff]
        %v4138 = vld [vmem:[%s2 + $0x148] sm:$0xff]
        %v4139 = vld [vmem:[%s2 + $0x150] sm:$0xff]
        %v4140 = vld [vmem:[%s2 + $0x158] sm:$0xff]
        %v4141 = vld [vmem:[%s2 + $0x160] sm:$0xff]
        %v4142 = vld [vmem:[%s2 + $0x168] sm:$0xff]
        %v4143 = vld [vmem:[%s2 + $0x170] sm:$0xff]
        %v4144 = vld [vmem:[%s2 + $0x178] sm:$0xff]
        %v4146 = vsel %vm358, %v3676, 0
        %4148 = vmatprep.subr.mxu0 0.0
        %4149 = vmatpush1.msra.mxu0 0.0
        %4150 = vmatprep.subr.mxu0 0.0
        %4151 = vmatpush1.msra.mxu0 0.0
        %4152 = vmatprep.subr.mxu0 0.0
        %4153 = vmatpush1.msra.mxu0 0.0
        %4154 = vmatprep.subr.mxu0 0.0
        %4155 = vmatpush1.msra.mxu0 0.0
        %4156 = vmatprep.subr.mxu0 0.0
        %4157 = vmatpush1.msra.mxu0 0.0
        %4158 = vmatprep.subr.mxu0 0.0
        %4159 = vmatpush1.msra.mxu0 0.0
        %4160 = vmatprep.subr.mxu0 0.0
        %4161 = vmatpush1.msra.mxu0 0.0
        %4162 = vmatprep.subr.mxu0 0.0
        %4163 = vmatpush1.msra.mxu0 0.0
        %4164 = vmatprep.subr.mxu0 0.0
        %4165 = vmatpush1.msra.mxu0 %v4144
        %4166 = vmatprep.subr.mxu0 0.0
        %4167 = vmatpush1.msra.mxu0 %v4143
        %4168 = vmatprep.subr.mxu0 0.0
        %4169 = vmatpush1.msra.mxu0 %v4142
        %4170 = vmatprep.subr.mxu0 0.0
        %4171 = vmatpush1.msra.mxu0 %v4141
        %4172 = vmatprep.subr.mxu0 0.0
        %4173 = vmatpush1.msra.mxu0 %v4140
        %4174 = vmatprep.subr.mxu0 0.0
        %4175 = vmatpush1.msra.mxu0 %v4139
        %4176 = vmatprep.subr.mxu0 0.0
        %4177 = vmatpush1.msra.mxu0 %v4138
        %4178 = vmatprep.subr.mxu0 0.0
        %4179 = vmatpush1.msra.mxu0 %v4137
        %4180 = vmatprep.subr.mxu0 0.0
        %4181 = vmatpush2.msra.mxu0 0.0
        %4182 = vmatprep.subr.mxu0 0.0
        %4183 = vmatpush2.msra.mxu0 0.0
        %4184 = vmatprep.subr.mxu0 0.0
        %4185 = vmatpush2.msra.mxu0 0.0
        %4186 = vmatprep.subr.mxu0 0.0
        %4187 = vmatpush2.msra.mxu0 0.0
        %4188 = vmatprep.subr.mxu0 0.0
        %4189 = vmatpush2.msra.mxu0 0.0
        %4190 = vmatprep.subr.mxu0 0.0
        %4191 = vmatpush2.msra.mxu0 0.0
        %4192 = vmatprep.subr.mxu0 0.0
        %4193 = vmatpush2.msra.mxu0 0.0
        %4194 = vmatprep.subr.mxu0 0.0
        %4195 = vmatpush2.msra.mxu0 0.0
        %4196 = vmatprep.subr.mxu0 0.0
        %4197 = vmatpush2.msra.mxu0 0.0
        %4198 = vmatprep.subr.mxu0 0.0
        %4199 = vmatpush2.msra.mxu0 0.0
        %4200 = vmatprep.subr.mxu0 0.0
        %4201 = vmatpush2.msra.mxu0 0.0
        %4202 = vmatprep.subr.mxu0 0.0
        %4203 = vmatpush2.msra.mxu0 0.0
        %4204 = vmatprep.subr.mxu0 0.0
        %4205 = vmatpush2.msra.mxu0 0.0
        %4206 = vmatprep.subr.mxu0 0.0
        %4207 = vmatpush2.msra.mxu0 0.0
        %4208 = vmatprep.subr.mxu0 0.0
        %4209 = vmatpush2.msra.mxu0 0.0
        %4210 = vmatprep.subr.mxu0 0.0
        %4211 = vmatpush2.msra.mxu0 0.0
        %4212 = vmatprep.mubr.f32.mxu0 0.0
        %4213 = vmatmul.mubr.f32.gmra.mxu0 %v4146
        %v4214 = vpop.f32.mrf.mxu0
        %v4215 = vadd.f32 0.0, %v4214
        %v4216 = vpop.f32.mrf.mxu0
        %4217 = vdwg.mxu0
        %v4218 = vadd.f32 %v4136, %v4215
        %v4219 = vld [vmem:[%s2 + $0x180] sm:$0xff]
        %v4220 = vld [vmem:[%s2 + $0x188] sm:$0xff]
        %v4221 = vld [vmem:[%s2 + $0x190] sm:$0xff]
        %v4222 = vld [vmem:[%s2 + $0x198] sm:$0xff]
        %v4223 = vld [vmem:[%s2 + $0x1a0] sm:$0xff]
        %v4224 = vld [vmem:[%s2 + $0x1a8] sm:$0xff]
        %v4225 = vld [vmem:[%s2 + $0x1b0] sm:$0xff]
        %v4226 = vld [vmem:[%s2 + $0x1b8] sm:$0xff]
        %v4228 = vsel %vm358, %v3681, 0
        %4230 = vmatprep.subr.mxu0 0.0
        %4231 = vmatpush1.msra.mxu0 0.0
        %4232 = vmatprep.subr.mxu0 0.0
        %4233 = vmatpush1.msra.mxu0 0.0
        %4234 = vmatprep.subr.mxu0 0.0
        %4235 = vmatpush1.msra.mxu0 0.0
        %4236 = vmatprep.subr.mxu0 0.0
        %4237 = vmatpush1.msra.mxu0 0.0
        %4238 = vmatprep.subr.mxu0 0.0
        %4239 = vmatpush1.msra.mxu0 0.0
        %4240 = vmatprep.subr.mxu0 0.0
        %4241 = vmatpush1.msra.mxu0 0.0
        %4242 = vmatprep.subr.mxu0 0.0
        %4243 = vmatpush1.msra.mxu0 0.0
        %4244 = vmatprep.subr.mxu0 0.0
        %4245 = vmatpush1.msra.mxu0 0.0
        %4246 = vmatprep.subr.mxu0 0.0
        %4247 = vmatpush1.msra.mxu0 %v4226
        %4248 = vmatprep.subr.mxu0 0.0
        %4249 = vmatpush1.msra.mxu0 %v4225
        %4250 = vmatprep.subr.mxu0 0.0
        %4251 = vmatpush1.msra.mxu0 %v4224
        %4252 = vmatprep.subr.mxu0 0.0
        %4253 = vmatpush1.msra.mxu0 %v4223
        %4254 = vmatprep.subr.mxu0 0.0
        %4255 = vmatpush1.msra.mxu0 %v4222
        %4256 = vmatprep.subr.mxu0 0.0
        %4257 = vmatpush1.msra.mxu0 %v4221
        %4258 = vmatprep.subr.mxu0 0.0
        %4259 = vmatpush1.msra.mxu0 %v4220
        %4260 = vmatprep.subr.mxu0 0.0
        %4261 = vmatpush1.msra.mxu0 %v4219
        %4262 = vmatprep.subr.mxu0 0.0
        %4263 = vmatpush2.msra.mxu0 0.0
        %4264 = vmatprep.subr.mxu0 0.0
        %4265 = vmatpush2.msra.mxu0 0.0
        %4266 = vmatprep.subr.mxu0 0.0
        %4267 = vmatpush2.msra.mxu0 0.0
        %4268 = vmatprep.subr.mxu0 0.0
        %4269 = vmatpush2.msra.mxu0 0.0
        %4270 = vmatprep.subr.mxu0 0.0
        %4271 = vmatpush2.msra.mxu0 0.0
        %4272 = vmatprep.subr.mxu0 0.0
        %4273 = vmatpush2.msra.mxu0 0.0
        %4274 = vmatprep.subr.mxu0 0.0
        %4275 = vmatpush2.msra.mxu0 0.0
        %4276 = vmatprep.subr.mxu0 0.0
        %4277 = vmatpush2.msra.mxu0 0.0
        %4278 = vmatprep.subr.mxu0 0.0
        %4279 = vmatpush2.msra.mxu0 0.0
        %4280 = vmatprep.subr.mxu0 0.0
        %4281 = vmatpush2.msra.mxu0 0.0
        %4282 = vmatprep.subr.mxu0 0.0
        %4283 = vmatpush2.msra.mxu0 0.0
        %4284 = vmatprep.subr.mxu0 0.0
        %4285 = vmatpush2.msra.mxu0 0.0
        %4286 = vmatprep.subr.mxu0 0.0
        %4287 = vmatpush2.msra.mxu0 0.0
        %4288 = vmatprep.subr.mxu0 0.0
        %4289 = vmatpush2.msra.mxu0 0.0
        %4290 = vmatprep.subr.mxu0 0.0
        %4291 = vmatpush2.msra.mxu0 0.0
        %4292 = vmatprep.subr.mxu0 0.0
        %4293 = vmatpush2.msra.mxu0 0.0
        %4294 = vmatprep.mubr.f32.mxu0 0.0
        %4295 = vmatmul.mubr.f32.gmra.mxu0 %v4228
        %v4296 = vpop.f32.mrf.mxu0
        %v4297 = vadd.f32 0.0, %v4296
        %v4298 = vpop.f32.mrf.mxu0
        %4299 = vdwg.mxu0
        %v4300 = vadd.f32 %v4218, %v4297
        %v4301 = vld [vmem:[%s2 + $0x1c0] sm:$0xff]
        %v4302 = vld [vmem:[%s2 + $0x1c8] sm:$0xff]
        %v4303 = vld [vmem:[%s2 + $0x1d0] sm:$0xff]
        %v4304 = vld [vmem:[%s2 + $0x1d8] sm:$0xff]
        %v4305 = vld [vmem:[%s2 + $0x1e0] sm:$0xff]
        %v4306 = vld [vmem:[%s2 + $0x1e8] sm:$0xff]
        %v4307 = vld [vmem:[%s2 + $0x1f0] sm:$0xff]
        %v4308 = vld [vmem:[%s2 + $0x1f8] sm:$0xff]
        %v4310 = vsel %vm358, %v3686, 0
        %4312 = vmatprep.subr.mxu0 0.0
        %4313 = vmatpush1.msra.mxu0 0.0
        %4314 = vmatprep.subr.mxu0 0.0
        %4315 = vmatpush1.msra.mxu0 0.0
        %4316 = vmatprep.subr.mxu0 0.0
        %4317 = vmatpush1.msra.mxu0 0.0
        %4318 = vmatprep.subr.mxu0 0.0
        %4319 = vmatpush1.msra.mxu0 0.0
        %4320 = vmatprep.subr.mxu0 0.0
        %4321 = vmatpush1.msra.mxu0 0.0
        %4322 = vmatprep.subr.mxu0 0.0
        %4323 = vmatpush1.msra.mxu0 0.0
        %4324 = vmatprep.subr.mxu0 0.0
        %4325 = vmatpush1.msra.mxu0 0.0
        %4326 = vmatprep.subr.mxu0 0.0
        %4327 = vmatpush1.msra.mxu0 0.0
        %4328 = vmatprep.subr.mxu0 0.0
        %4329 = vmatpush1.msra.mxu0 %v4308
        %4330 = vmatprep.subr.mxu0 0.0
        %4331 = vmatpush1.msra.mxu0 %v4307
        %4332 = vmatprep.subr.mxu0 0.0
        %4333 = vmatpush1.msra.mxu0 %v4306
        %4334 = vmatprep.subr.mxu0 0.0
        %4335 = vmatpush1.msra.mxu0 %v4305
        %4336 = vmatprep.subr.mxu0 0.0
        %4337 = vmatpush1.msra.mxu0 %v4304
        %4338 = vmatprep.subr.mxu0 0.0
        %4339 = vmatpush1.msra.mxu0 %v4303
        %4340 = vmatprep.subr.mxu0 0.0
        %4341 = vmatpush1.msra.mxu0 %v4302
        %4342 = vmatprep.subr.mxu0 0.0
        %4343 = vmatpush1.msra.mxu0 %v4301
        %4344 = vmatprep.subr.mxu0 0.0
        %4345 = vmatpush2.msra.mxu0 0.0
        %4346 = vmatprep.subr.mxu0 0.0
        %4347 = vmatpush2.msra.mxu0 0.0
        %4348 = vmatprep.subr.mxu0 0.0
        %4349 = vmatpush2.msra.mxu0 0.0
        %4350 = vmatprep.subr.mxu0 0.0
        %4351 = vmatpush2.msra.mxu0 0.0
        %4352 = vmatprep.subr.mxu0 0.0
        %4353 = vmatpush2.msra.mxu0 0.0
        %4354 = vmatprep.subr.mxu0 0.0
        %4355 = vmatpush2.msra.mxu0 0.0
        %4356 = vmatprep.subr.mxu0 0.0
        %4357 = vmatpush2.msra.mxu0 0.0
        %4358 = vmatprep.subr.mxu0 0.0
        %4359 = vmatpush2.msra.mxu0 0.0
        %4360 = vmatprep.subr.mxu0 0.0
        %4361 = vmatpush2.msra.mxu0 0.0
        %4362 = vmatprep.subr.mxu0 0.0
        %4363 = vmatpush2.msra.mxu0 0.0
        %4364 = vmatprep.subr.mxu0 0.0
        %4365 = vmatpush2.msra.mxu0 0.0
        %4366 = vmatprep.subr.mxu0 0.0
        %4367 = vmatpush2.msra.mxu0 0.0
        %4368 = vmatprep.subr.mxu0 0.0
        %4369 = vmatpush2.msra.mxu0 0.0
        %4370 = vmatprep.subr.mxu0 0.0
        %4371 = vmatpush2.msra.mxu0 0.0
        %4372 = vmatprep.subr.mxu0 0.0
        %4373 = vmatpush2.msra.mxu0 0.0
        %4374 = vmatprep.subr.mxu0 0.0
        %4375 = vmatpush2.msra.mxu0 0.0
        %4376 = vmatprep.mubr.f32.mxu0 0.0
        %4377 = vmatmul.mubr.f32.gmra.mxu0 %v4310
        %v4378 = vpop.f32.mrf.mxu0
        %v4379 = vadd.f32 0.0, %v4378
        %v4380 = vpop.f32.mrf.mxu0
        %4381 = vdwg.mxu0
        %v4382 = vadd.f32 %v4300, %v4379
        %v4383 = vld [vmem:[%s2 + $0x200] sm:$0xff]
        %v4384 = vld [vmem:[%s2 + $0x208] sm:$0xff]
        %v4385 = vld [vmem:[%s2 + $0x210] sm:$0xff]
        %v4386 = vld [vmem:[%s2 + $0x218] sm:$0xff]
        %v4387 = vld [vmem:[%s2 + $0x220] sm:$0xff]
        %v4388 = vld [vmem:[%s2 + $0x228] sm:$0xff]
        %v4389 = vld [vmem:[%s2 + $0x230] sm:$0xff]
        %v4390 = vld [vmem:[%s2 + $0x238] sm:$0xff]
        %v4392 = vsel %vm358, %v3691, 0
        %4394 = vmatprep.subr.mxu0 0.0
        %4395 = vmatpush1.msra.mxu0 0.0
        %4396 = vmatprep.subr.mxu0 0.0
        %4397 = vmatpush1.msra.mxu0 0.0
        %4398 = vmatprep.subr.mxu0 0.0
        %4399 = vmatpush1.msra.mxu0 0.0
        %4400 = vmatprep.subr.mxu0 0.0
        %4401 = vmatpush1.msra.mxu0 0.0
        %4402 = vmatprep.subr.mxu0 0.0
        %4403 = vmatpush1.msra.mxu0 0.0
        %4404 = vmatprep.subr.mxu0 0.0
        %4405 = vmatpush1.msra.mxu0 0.0
        %4406 = vmatprep.subr.mxu0 0.0
        %4407 = vmatpush1.msra.mxu0 0.0
        %4408 = vmatprep.subr.mxu0 0.0
        %4409 = vmatpush1.msra.mxu0 0.0
        %4410 = vmatprep.subr.mxu0 0.0
        %4411 = vmatpush1.msra.mxu0 %v4390
        %4412 = vmatprep.subr.mxu0 0.0
        %4413 = vmatpush1.msra.mxu0 %v4389
        %4414 = vmatprep.subr.mxu0 0.0
        %4415 = vmatpush1.msra.mxu0 %v4388
        %4416 = vmatprep.subr.mxu0 0.0
        %4417 = vmatpush1.msra.mxu0 %v4387
        %4418 = vmatprep.subr.mxu0 0.0
        %4419 = vmatpush1.msra.mxu0 %v4386
        %4420 = vmatprep.subr.mxu0 0.0
        %4421 = vmatpush1.msra.mxu0 %v4385
        %4422 = vmatprep.subr.mxu0 0.0
        %4423 = vmatpush1.msra.mxu0 %v4384
        %4424 = vmatprep.subr.mxu0 0.0
        %4425 = vmatpush1.msra.mxu0 %v4383
        %4426 = vmatprep.subr.mxu0 0.0
        %4427 = vmatpush2.msra.mxu0 0.0
        %4428 = vmatprep.subr.mxu0 0.0
        %4429 = vmatpush2.msra.mxu0 0.0
        %4430 = vmatprep.subr.mxu0 0.0
        %4431 = vmatpush2.msra.mxu0 0.0
        %4432 = vmatprep.subr.mxu0 0.0
        %4433 = vmatpush2.msra.mxu0 0.0
        %4434 = vmatprep.subr.mxu0 0.0
        %4435 = vmatpush2.msra.mxu0 0.0
        %4436 = vmatprep.subr.mxu0 0.0
        %4437 = vmatpush2.msra.mxu0 0.0
        %4438 = vmatprep.subr.mxu0 0.0
        %4439 = vmatpush2.msra.mxu0 0.0
        %4440 = vmatprep.subr.mxu0 0.0
        %4441 = vmatpush2.msra.mxu0 0.0
        %4442 = vmatprep.subr.mxu0 0.0
        %4443 = vmatpush2.msra.mxu0 0.0
        %4444 = vmatprep.subr.mxu0 0.0
        %4445 = vmatpush2.msra.mxu0 0.0
        %4446 = vmatprep.subr.mxu0 0.0
        %4447 = vmatpush2.msra.mxu0 0.0
        %4448 = vmatprep.subr.mxu0 0.0
        %4449 = vmatpush2.msra.mxu0 0.0
        %4450 = vmatprep.subr.mxu0 0.0
        %4451 = vmatpush2.msra.mxu0 0.0
        %4452 = vmatprep.subr.mxu0 0.0
        %4453 = vmatpush2.msra.mxu0 0.0
        %4454 = vmatprep.subr.mxu0 0.0
        %4455 = vmatpush2.msra.mxu0 0.0
        %4456 = vmatprep.subr.mxu0 0.0
        %4457 = vmatpush2.msra.mxu0 0.0
        %4458 = vmatprep.mubr.f32.mxu0 0.0
        %4459 = vmatmul.mubr.f32.gmra.mxu0 %v4392
        %v4460 = vpop.f32.mrf.mxu0
        %v4461 = vadd.f32 0.0, %v4460
        %v4462 = vpop.f32.mrf.mxu0
        %4463 = vdwg.mxu0
        %v4464 = vadd.f32 %v4382, %v4461
        %v4465 = vld [vmem:[%s2 + $0x240] sm:$0xff]
        %v4466 = vld [vmem:[%s2 + $0x248] sm:$0xff]
        %v4467 = vld [vmem:[%s2 + $0x250] sm:$0xff]
        %v4468 = vld [vmem:[%s2 + $0x258] sm:$0xff]
        %v4469 = vld [vmem:[%s2 + $0x260] sm:$0xff]
        %v4470 = vld [vmem:[%s2 + $0x268] sm:$0xff]
        %v4471 = vld [vmem:[%s2 + $0x270] sm:$0xff]
        %v4472 = vld [vmem:[%s2 + $0x278] sm:$0xff]
        %v4474 = vsel %vm358, %v3696, 0
        %4476 = vmatprep.subr.mxu0 0.0
        %4477 = vmatpush1.msra.mxu0 0.0
        %4478 = vmatprep.subr.mxu0 0.0
        %4479 = vmatpush1.msra.mxu0 0.0
        %4480 = vmatprep.subr.mxu0 0.0
        %4481 = vmatpush1.msra.mxu0 0.0
        %4482 = vmatprep.subr.mxu0 0.0
        %4483 = vmatpush1.msra.mxu0 0.0
        %4484 = vmatprep.subr.mxu0 0.0
        %4485 = vmatpush1.msra.mxu0 0.0
        %4486 = vmatprep.subr.mxu0 0.0
        %4487 = vmatpush1.msra.mxu0 0.0
        %4488 = vmatprep.subr.mxu0 0.0
        %4489 = vmatpush1.msra.mxu0 0.0
        %4490 = vmatprep.subr.mxu0 0.0
        %4491 = vmatpush1.msra.mxu0 0.0
        %4492 = vmatprep.subr.mxu0 0.0
        %4493 = vmatpush1.msra.mxu0 %v4472
        %4494 = vmatprep.subr.mxu0 0.0
        %4495 = vmatpush1.msra.mxu0 %v4471
        %4496 = vmatprep.subr.mxu0 0.0
        %4497 = vmatpush1.msra.mxu0 %v4470
        %4498 = vmatprep.subr.mxu0 0.0
        %4499 = vmatpush1.msra.mxu0 %v4469
        %4500 = vmatprep.subr.mxu0 0.0
        %4501 = vmatpush1.msra.mxu0 %v4468
        %4502 = vmatprep.subr.mxu0 0.0
        %4503 = vmatpush1.msra.mxu0 %v4467
        %4504 = vmatprep.subr.mxu0 0.0
        %4505 = vmatpush1.msra.mxu0 %v4466
        %4506 = vmatprep.subr.mxu0 0.0
        %4507 = vmatpush1.msra.mxu0 %v4465
        %4508 = vmatprep.subr.mxu0 0.0
        %4509 = vmatpush2.msra.mxu0 0.0
        %4510 = vmatprep.subr.mxu0 0.0
        %4511 = vmatpush2.msra.mxu0 0.0
        %4512 = vmatprep.subr.mxu0 0.0
        %4513 = vmatpush2.msra.mxu0 0.0
        %4514 = vmatprep.subr.mxu0 0.0
        %4515 = vmatpush2.msra.mxu0 0.0
        %4516 = vmatprep.subr.mxu0 0.0
        %4517 = vmatpush2.msra.mxu0 0.0
        %4518 = vmatprep.subr.mxu0 0.0
        %4519 = vmatpush2.msra.mxu0 0.0
        %4520 = vmatprep.subr.mxu0 0.0
        %4521 = vmatpush2.msra.mxu0 0.0
        %4522 = vmatprep.subr.mxu0 0.0
        %4523 = vmatpush2.msra.mxu0 0.0
        %4524 = vmatprep.subr.mxu0 0.0
        %4525 = vmatpush2.msra.mxu0 0.0
        %4526 = vmatprep.subr.mxu0 0.0
        %4527 = vmatpush2.msra.mxu0 0.0
        %4528 = vmatprep.subr.mxu0 0.0
        %4529 = vmatpush2.msra.mxu0 0.0
        %4530 = vmatprep.subr.mxu0 0.0
        %4531 = vmatpush2.msra.mxu0 0.0
        %4532 = vmatprep.subr.mxu0 0.0
        %4533 = vmatpush2.msra.mxu0 0.0
        %4534 = vmatprep.subr.mxu0 0.0
        %4535 = vmatpush2.msra.mxu0 0.0
        %4536 = vmatprep.subr.mxu0 0.0
        %4537 = vmatpush2.msra.mxu0 0.0
        %4538 = vmatprep.subr.mxu0 0.0
        %4539 = vmatpush2.msra.mxu0 0.0
        %4540 = vmatprep.mubr.f32.mxu0 0.0
        %4541 = vmatmul.mubr.f32.gmra.mxu0 %v4474
        %v4542 = vpop.f32.mrf.mxu0
        %v4543 = vadd.f32 0.0, %v4542
        %v4544 = vpop.f32.mrf.mxu0
        %4545 = vdwg.mxu0
        %v4546 = vadd.f32 %v4464, %v4543
        %v4547 = vld [vmem:[%s2 + $0x280] sm:$0xff]
        %v4548 = vld [vmem:[%s2 + $0x288] sm:$0xff]
        %v4549 = vld [vmem:[%s2 + $0x290] sm:$0xff]
        %v4550 = vld [vmem:[%s2 + $0x298] sm:$0xff]
        %v4551 = vld [vmem:[%s2 + $0x2a0] sm:$0xff]
        %v4552 = vld [vmem:[%s2 + $0x2a8] sm:$0xff]
        %v4553 = vld [vmem:[%s2 + $0x2b0] sm:$0xff]
        %v4554 = vld [vmem:[%s2 + $0x2b8] sm:$0xff]
        %v4556 = vsel %vm358, %v3701, 0
        %4558 = vmatprep.subr.mxu0 0.0
        %4559 = vmatpush1.msra.mxu0 0.0
        %4560 = vmatprep.subr.mxu0 0.0
        %4561 = vmatpush1.msra.mxu0 0.0
        %4562 = vmatprep.subr.mxu0 0.0
        %4563 = vmatpush1.msra.mxu0 0.0
        %4564 = vmatprep.subr.mxu0 0.0
        %4565 = vmatpush1.msra.mxu0 0.0
        %4566 = vmatprep.subr.mxu0 0.0
        %4567 = vmatpush1.msra.mxu0 0.0
        %4568 = vmatprep.subr.mxu0 0.0
        %4569 = vmatpush1.msra.mxu0 0.0
        %4570 = vmatprep.subr.mxu0 0.0
        %4571 = vmatpush1.msra.mxu0 0.0
        %4572 = vmatprep.subr.mxu0 0.0
        %4573 = vmatpush1.msra.mxu0 0.0
        %4574 = vmatprep.subr.mxu0 0.0
        %4575 = vmatpush1.msra.mxu0 %v4554
        %4576 = vmatprep.subr.mxu0 0.0
        %4577 = vmatpush1.msra.mxu0 %v4553
        %4578 = vmatprep.subr.mxu0 0.0
        %4579 = vmatpush1.msra.mxu0 %v4552
        %4580 = vmatprep.subr.mxu0 0.0
        %4581 = vmatpush1.msra.mxu0 %v4551
        %4582 = vmatprep.subr.mxu0 0.0
        %4583 = vmatpush1.msra.mxu0 %v4550
        %4584 = vmatprep.subr.mxu0 0.0
        %4585 = vmatpush1.msra.mxu0 %v4549
        %4586 = vmatprep.subr.mxu0 0.0
        %4587 = vmatpush1.msra.mxu0 %v4548
        %4588 = vmatprep.subr.mxu0 0.0
        %4589 = vmatpush1.msra.mxu0 %v4547
        %4590 = vmatprep.subr.mxu0 0.0
        %4591 = vmatpush2.msra.mxu0 0.0
        %4592 = vmatprep.subr.mxu0 0.0
        %4593 = vmatpush2.msra.mxu0 0.0
        %4594 = vmatprep.subr.mxu0 0.0
        %4595 = vmatpush2.msra.mxu0 0.0
        %4596 = vmatprep.subr.mxu0 0.0
        %4597 = vmatpush2.msra.mxu0 0.0
        %4598 = vmatprep.subr.mxu0 0.0
        %4599 = vmatpush2.msra.mxu0 0.0
        %4600 = vmatprep.subr.mxu0 0.0
        %4601 = vmatpush2.msra.mxu0 0.0
        %4602 = vmatprep.subr.mxu0 0.0
        %4603 = vmatpush2.msra.mxu0 0.0
        %4604 = vmatprep.subr.mxu0 0.0
        %4605 = vmatpush2.msra.mxu0 0.0
        %4606 = vmatprep.subr.mxu0 0.0
        %4607 = vmatpush2.msra.mxu0 0.0
        %4608 = vmatprep.subr.mxu0 0.0
        %4609 = vmatpush2.msra.mxu0 0.0
        %4610 = vmatprep.subr.mxu0 0.0
        %4611 = vmatpush2.msra.mxu0 0.0
        %4612 = vmatprep.subr.mxu0 0.0
        %4613 = vmatpush2.msra.mxu0 0.0
        %4614 = vmatprep.subr.mxu0 0.0
        %4615 = vmatpush2.msra.mxu0 0.0
        %4616 = vmatprep.subr.mxu0 0.0
        %4617 = vmatpush2.msra.mxu0 0.0
        %4618 = vmatprep.subr.mxu0 0.0
        %4619 = vmatpush2.msra.mxu0 0.0
        %4620 = vmatprep.subr.mxu0 0.0
        %4621 = vmatpush2.msra.mxu0 0.0
        %4622 = vmatprep.mubr.f32.mxu0 0.0
        %4623 = vmatmul.mubr.f32.gmra.mxu0 %v4556
        %v4624 = vpop.f32.mrf.mxu0
        %v4625 = vadd.f32 0.0, %v4624
        %v4626 = vpop.f32.mrf.mxu0
        %4627 = vdwg.mxu0
        %v4628 = vadd.f32 %v4546, %v4625
        %v4629 = vld [vmem:[%s2 + $0x2c0] sm:$0xff]
        %v4630 = vld [vmem:[%s2 + $0x2c8] sm:$0xff]
        %v4631 = vld [vmem:[%s2 + $0x2d0] sm:$0xff]
        %v4632 = vld [vmem:[%s2 + $0x2d8] sm:$0xff]
        %v4633 = vld [vmem:[%s2 + $0x2e0] sm:$0xff]
        %v4634 = vld [vmem:[%s2 + $0x2e8] sm:$0xff]
        %v4635 = vld [vmem:[%s2 + $0x2f0] sm:$0xff]
        %v4636 = vld [vmem:[%s2 + $0x2f8] sm:$0xff]
        %v4638 = vsel %vm358, %v3706, 0
        %4640 = vmatprep.subr.mxu0 0.0
        %4641 = vmatpush1.msra.mxu0 0.0
        %4642 = vmatprep.subr.mxu0 0.0
        %4643 = vmatpush1.msra.mxu0 0.0
        %4644 = vmatprep.subr.mxu0 0.0
        %4645 = vmatpush1.msra.mxu0 0.0
        %4646 = vmatprep.subr.mxu0 0.0
        %4647 = vmatpush1.msra.mxu0 0.0
        %4648 = vmatprep.subr.mxu0 0.0
        %4649 = vmatpush1.msra.mxu0 0.0
        %4650 = vmatprep.subr.mxu0 0.0
        %4651 = vmatpush1.msra.mxu0 0.0
        %4652 = vmatprep.subr.mxu0 0.0
        %4653 = vmatpush1.msra.mxu0 0.0
        %4654 = vmatprep.subr.mxu0 0.0
        %4655 = vmatpush1.msra.mxu0 0.0
        %4656 = vmatprep.subr.mxu0 0.0
        %4657 = vmatpush1.msra.mxu0 %v4636
        %4658 = vmatprep.subr.mxu0 0.0
        %4659 = vmatpush1.msra.mxu0 %v4635
        %4660 = vmatprep.subr.mxu0 0.0
        %4661 = vmatpush1.msra.mxu0 %v4634
        %4662 = vmatprep.subr.mxu0 0.0
        %4663 = vmatpush1.msra.mxu0 %v4633
        %4664 = vmatprep.subr.mxu0 0.0
        %4665 = vmatpush1.msra.mxu0 %v4632
        %4666 = vmatprep.subr.mxu0 0.0
        %4667 = vmatpush1.msra.mxu0 %v4631
        %4668 = vmatprep.subr.mxu0 0.0
        %4669 = vmatpush1.msra.mxu0 %v4630
        %4670 = vmatprep.subr.mxu0 0.0
        %4671 = vmatpush1.msra.mxu0 %v4629
        %4672 = vmatprep.subr.mxu0 0.0
        %4673 = vmatpush2.msra.mxu0 0.0
        %4674 = vmatprep.subr.mxu0 0.0
        %4675 = vmatpush2.msra.mxu0 0.0
        %4676 = vmatprep.subr.mxu0 0.0
        %4677 = vmatpush2.msra.mxu0 0.0
        %4678 = vmatprep.subr.mxu0 0.0
        %4679 = vmatpush2.msra.mxu0 0.0
        %4680 = vmatprep.subr.mxu0 0.0
        %4681 = vmatpush2.msra.mxu0 0.0
        %4682 = vmatprep.subr.mxu0 0.0
        %4683 = vmatpush2.msra.mxu0 0.0
        %4684 = vmatprep.subr.mxu0 0.0
        %4685 = vmatpush2.msra.mxu0 0.0
        %4686 = vmatprep.subr.mxu0 0.0
        %4687 = vmatpush2.msra.mxu0 0.0
        %4688 = vmatprep.subr.mxu0 0.0
        %4689 = vmatpush2.msra.mxu0 0.0
        %4690 = vmatprep.subr.mxu0 0.0
        %4691 = vmatpush2.msra.mxu0 0.0
        %4692 = vmatprep.subr.mxu0 0.0
        %4693 = vmatpush2.msra.mxu0 0.0
        %4694 = vmatprep.subr.mxu0 0.0
        %4695 = vmatpush2.msra.mxu0 0.0
        %4696 = vmatprep.subr.mxu0 0.0
        %4697 = vmatpush2.msra.mxu0 0.0
        %4698 = vmatprep.subr.mxu0 0.0
        %4699 = vmatpush2.msra.mxu0 0.0
        %4700 = vmatprep.subr.mxu0 0.0
        %4701 = vmatpush2.msra.mxu0 0.0
        %4702 = vmatprep.subr.mxu0 0.0
        %4703 = vmatpush2.msra.mxu0 0.0
        %4704 = vmatprep.mubr.f32.mxu0 0.0
        %4705 = vmatmul.mubr.f32.gmra.mxu0 %v4638
        %v4706 = vpop.f32.mrf.mxu0
        %v4707 = vadd.f32 0.0, %v4706
        %v4708 = vpop.f32.mrf.mxu0
        %4709 = vdwg.mxu0
        %v4710 = vadd.f32 %v4628, %v4707
        %v4711 = vld [vmem:[%s2 + $0x300] sm:$0xff]
        %v4712 = vld [vmem:[%s2 + $0x308] sm:$0xff]
        %v4713 = vld [vmem:[%s2 + $0x310] sm:$0xff]
        %v4714 = vld [vmem:[%s2 + $0x318] sm:$0xff]
        %v4715 = vld [vmem:[%s2 + $0x320] sm:$0xff]
        %v4716 = vld [vmem:[%s2 + $0x328] sm:$0xff]
        %v4717 = vld [vmem:[%s2 + $0x330] sm:$0xff]
        %v4718 = vld [vmem:[%s2 + $0x338] sm:$0xff]
        %v4720 = vsel %vm358, %v3711, 0
        %4722 = vmatprep.subr.mxu0 0.0
        %4723 = vmatpush1.msra.mxu0 0.0
        %4724 = vmatprep.subr.mxu0 0.0
        %4725 = vmatpush1.msra.mxu0 0.0
        %4726 = vmatprep.subr.mxu0 0.0
        %4727 = vmatpush1.msra.mxu0 0.0
        %4728 = vmatprep.subr.mxu0 0.0
        %4729 = vmatpush1.msra.mxu0 0.0
        %4730 = vmatprep.subr.mxu0 0.0
        %4731 = vmatpush1.msra.mxu0 0.0
        %4732 = vmatprep.subr.mxu0 0.0
        %4733 = vmatpush1.msra.mxu0 0.0
        %4734 = vmatprep.subr.mxu0 0.0
        %4735 = vmatpush1.msra.mxu0 0.0
        %4736 = vmatprep.subr.mxu0 0.0
        %4737 = vmatpush1.msra.mxu0 0.0
        %4738 = vmatprep.subr.mxu0 0.0
        %4739 = vmatpush1.msra.mxu0 %v4718
        %4740 = vmatprep.subr.mxu0 0.0
        %4741 = vmatpush1.msra.mxu0 %v4717
        %4742 = vmatprep.subr.mxu0 0.0
        %4743 = vmatpush1.msra.mxu0 %v4716
        %4744 = vmatprep.subr.mxu0 0.0
        %4745 = vmatpush1.msra.mxu0 %v4715
        %4746 = vmatprep.subr.mxu0 0.0
        %4747 = vmatpush1.msra.mxu0 %v4714
        %4748 = vmatprep.subr.mxu0 0.0
        %4749 = vmatpush1.msra.mxu0 %v4713
        %4750 = vmatprep.subr.mxu0 0.0
        %4751 = vmatpush1.msra.mxu0 %v4712
        %4752 = vmatprep.subr.mxu0 0.0
        %4753 = vmatpush1.msra.mxu0 %v4711
        %4754 = vmatprep.subr.mxu0 0.0
        %4755 = vmatpush2.msra.mxu0 0.0
        %4756 = vmatprep.subr.mxu0 0.0
        %4757 = vmatpush2.msra.mxu0 0.0
        %4758 = vmatprep.subr.mxu0 0.0
        %4759 = vmatpush2.msra.mxu0 0.0
        %4760 = vmatprep.subr.mxu0 0.0
        %4761 = vmatpush2.msra.mxu0 0.0
        %4762 = vmatprep.subr.mxu0 0.0
        %4763 = vmatpush2.msra.mxu0 0.0
        %4764 = vmatprep.subr.mxu0 0.0
        %4765 = vmatpush2.msra.mxu0 0.0
        %4766 = vmatprep.subr.mxu0 0.0
        %4767 = vmatpush2.msra.mxu0 0.0
        %4768 = vmatprep.subr.mxu0 0.0
        %4769 = vmatpush2.msra.mxu0 0.0
        %4770 = vmatprep.subr.mxu0 0.0
        %4771 = vmatpush2.msra.mxu0 0.0
        %4772 = vmatprep.subr.mxu0 0.0
        %4773 = vmatpush2.msra.mxu0 0.0
        %4774 = vmatprep.subr.mxu0 0.0
        %4775 = vmatpush2.msra.mxu0 0.0
        %4776 = vmatprep.subr.mxu0 0.0
        %4777 = vmatpush2.msra.mxu0 0.0
        %4778 = vmatprep.subr.mxu0 0.0
        %4779 = vmatpush2.msra.mxu0 0.0
        %4780 = vmatprep.subr.mxu0 0.0
        %4781 = vmatpush2.msra.mxu0 0.0
        %4782 = vmatprep.subr.mxu0 0.0
        %4783 = vmatpush2.msra.mxu0 0.0
        %4784 = vmatprep.subr.mxu0 0.0
        %4785 = vmatpush2.msra.mxu0 0.0
        %4786 = vmatprep.mubr.f32.mxu0 0.0
        %4787 = vmatmul.mubr.f32.gmra.mxu0 %v4720
        %v4788 = vpop.f32.mrf.mxu0
        %v4789 = vadd.f32 0.0, %v4788
        %v4790 = vpop.f32.mrf.mxu0
        %4791 = vdwg.mxu0
        %v4792 = vadd.f32 %v4710, %v4789
        %v4793 = vld [vmem:[%s2 + $0x340] sm:$0xff]
        %v4794 = vld [vmem:[%s2 + $0x348] sm:$0xff]
        %v4795 = vld [vmem:[%s2 + $0x350] sm:$0xff]
        %v4796 = vld [vmem:[%s2 + $0x358] sm:$0xff]
        %v4797 = vld [vmem:[%s2 + $0x360] sm:$0xff]
        %v4798 = vld [vmem:[%s2 + $0x368] sm:$0xff]
        %v4799 = vld [vmem:[%s2 + $0x370] sm:$0xff]
        %v4800 = vld [vmem:[%s2 + $0x378] sm:$0xff]
        %v4802 = vsel %vm358, %v3716, 0
        %4804 = vmatprep.subr.mxu0 0.0
        %4805 = vmatpush1.msra.mxu0 0.0
        %4806 = vmatprep.subr.mxu0 0.0
        %4807 = vmatpush1.msra.mxu0 0.0
        %4808 = vmatprep.subr.mxu0 0.0
        %4809 = vmatpush1.msra.mxu0 0.0
        %4810 = vmatprep.subr.mxu0 0.0
        %4811 = vmatpush1.msra.mxu0 0.0
        %4812 = vmatprep.subr.mxu0 0.0
        %4813 = vmatpush1.msra.mxu0 0.0
        %4814 = vmatprep.subr.mxu0 0.0
        %4815 = vmatpush1.msra.mxu0 0.0
        %4816 = vmatprep.subr.mxu0 0.0
        %4817 = vmatpush1.msra.mxu0 0.0
        %4818 = vmatprep.subr.mxu0 0.0
        %4819 = vmatpush1.msra.mxu0 0.0
        %4820 = vmatprep.subr.mxu0 0.0
        %4821 = vmatpush1.msra.mxu0 %v4800
        %4822 = vmatprep.subr.mxu0 0.0
        %4823 = vmatpush1.msra.mxu0 %v4799
        %4824 = vmatprep.subr.mxu0 0.0
        %4825 = vmatpush1.msra.mxu0 %v4798
        %4826 = vmatprep.subr.mxu0 0.0
        %4827 = vmatpush1.msra.mxu0 %v4797
        %4828 = vmatprep.subr.mxu0 0.0
        %4829 = vmatpush1.msra.mxu0 %v4796
        %4830 = vmatprep.subr.mxu0 0.0
        %4831 = vmatpush1.msra.mxu0 %v4795
        %4832 = vmatprep.subr.mxu0 0.0
        %4833 = vmatpush1.msra.mxu0 %v4794
        %4834 = vmatprep.subr.mxu0 0.0
        %4835 = vmatpush1.msra.mxu0 %v4793
        %4836 = vmatprep.subr.mxu0 0.0
        %4837 = vmatpush2.msra.mxu0 0.0
        %4838 = vmatprep.subr.mxu0 0.0
        %4839 = vmatpush2.msra.mxu0 0.0
        %4840 = vmatprep.subr.mxu0 0.0
        %4841 = vmatpush2.msra.mxu0 0.0
        %4842 = vmatprep.subr.mxu0 0.0
        %4843 = vmatpush2.msra.mxu0 0.0
        %4844 = vmatprep.subr.mxu0 0.0
        %4845 = vmatpush2.msra.mxu0 0.0
        %4846 = vmatprep.subr.mxu0 0.0
        %4847 = vmatpush2.msra.mxu0 0.0
        %4848 = vmatprep.subr.mxu0 0.0
        %4849 = vmatpush2.msra.mxu0 0.0
        %4850 = vmatprep.subr.mxu0 0.0
        %4851 = vmatpush2.msra.mxu0 0.0
        %4852 = vmatprep.subr.mxu0 0.0
        %4853 = vmatpush2.msra.mxu0 0.0
        %4854 = vmatprep.subr.mxu0 0.0
        %4855 = vmatpush2.msra.mxu0 0.0
        %4856 = vmatprep.subr.mxu0 0.0
        %4857 = vmatpush2.msra.mxu0 0.0
        %4858 = vmatprep.subr.mxu0 0.0
        %4859 = vmatpush2.msra.mxu0 0.0
        %4860 = vmatprep.subr.mxu0 0.0
        %4861 = vmatpush2.msra.mxu0 0.0
        %4862 = vmatprep.subr.mxu0 0.0
        %4863 = vmatpush2.msra.mxu0 0.0
        %4864 = vmatprep.subr.mxu0 0.0
        %4865 = vmatpush2.msra.mxu0 0.0
        %4866 = vmatprep.subr.mxu0 0.0
        %4867 = vmatpush2.msra.mxu0 0.0
        %4868 = vmatprep.mubr.f32.mxu0 0.0
        %4869 = vmatmul.mubr.f32.gmra.mxu0 %v4802
        %v4870 = vpop.f32.mrf.mxu0
        %v4871 = vadd.f32 0.0, %v4870
        %v4872 = vpop.f32.mrf.mxu0
        %4873 = vdwg.mxu0
        %v4874 = vadd.f32 %v4792, %v4871
        %v4875 = vld [vmem:[%s2 + $0x380] sm:$0xff]
        %v4876 = vld [vmem:[%s2 + $0x388] sm:$0xff]
        %v4877 = vld [vmem:[%s2 + $0x390] sm:$0xff]
        %v4878 = vld [vmem:[%s2 + $0x398] sm:$0xff]
        %v4879 = vld [vmem:[%s2 + $0x3a0] sm:$0xff]
        %v4880 = vld [vmem:[%s2 + $0x3a8] sm:$0xff]
        %v4881 = vld [vmem:[%s2 + $0x3b0] sm:$0xff]
        %v4882 = vld [vmem:[%s2 + $0x3b8] sm:$0xff]
        %v4884 = vsel %vm358, %v3721, 0
        %4886 = vmatprep.subr.mxu0 0.0
        %4887 = vmatpush1.msra.mxu0 0.0
        %4888 = vmatprep.subr.mxu0 0.0
        %4889 = vmatpush1.msra.mxu0 0.0
        %4890 = vmatprep.subr.mxu0 0.0
        %4891 = vmatpush1.msra.mxu0 0.0
        %4892 = vmatprep.subr.mxu0 0.0
        %4893 = vmatpush1.msra.mxu0 0.0
        %4894 = vmatprep.subr.mxu0 0.0
        %4895 = vmatpush1.msra.mxu0 0.0
        %4896 = vmatprep.subr.mxu0 0.0
        %4897 = vmatpush1.msra.mxu0 0.0
        %4898 = vmatprep.subr.mxu0 0.0
        %4899 = vmatpush1.msra.mxu0 0.0
        %4900 = vmatprep.subr.mxu0 0.0
        %4901 = vmatpush1.msra.mxu0 0.0
        %4902 = vmatprep.subr.mxu0 0.0
        %4903 = vmatpush1.msra.mxu0 %v4882
        %4904 = vmatprep.subr.mxu0 0.0
        %4905 = vmatpush1.msra.mxu0 %v4881
        %4906 = vmatprep.subr.mxu0 0.0
        %4907 = vmatpush1.msra.mxu0 %v4880
        %4908 = vmatprep.subr.mxu0 0.0
        %4909 = vmatpush1.msra.mxu0 %v4879
        %4910 = vmatprep.subr.mxu0 0.0
        %4911 = vmatpush1.msra.mxu0 %v4878
        %4912 = vmatprep.subr.mxu0 0.0
        %4913 = vmatpush1.msra.mxu0 %v4877
        %4914 = vmatprep.subr.mxu0 0.0
        %4915 = vmatpush1.msra.mxu0 %v4876
        %4916 = vmatprep.subr.mxu0 0.0
        %4917 = vmatpush1.msra.mxu0 %v4875
        %4918 = vmatprep.subr.mxu0 0.0
        %4919 = vmatpush2.msra.mxu0 0.0
        %4920 = vmatprep.subr.mxu0 0.0
        %4921 = vmatpush2.msra.mxu0 0.0
        %4922 = vmatprep.subr.mxu0 0.0
        %4923 = vmatpush2.msra.mxu0 0.0
        %4924 = vmatprep.subr.mxu0 0.0
        %4925 = vmatpush2.msra.mxu0 0.0
        %4926 = vmatprep.subr.mxu0 0.0
        %4927 = vmatpush2.msra.mxu0 0.0
        %4928 = vmatprep.subr.mxu0 0.0
        %4929 = vmatpush2.msra.mxu0 0.0
        %4930 = vmatprep.subr.mxu0 0.0
        %4931 = vmatpush2.msra.mxu0 0.0
        %4932 = vmatprep.subr.mxu0 0.0
        %4933 = vmatpush2.msra.mxu0 0.0
        %4934 = vmatprep.subr.mxu0 0.0
        %4935 = vmatpush2.msra.mxu0 0.0
        %4936 = vmatprep.subr.mxu0 0.0
        %4937 = vmatpush2.msra.mxu0 0.0
        %4938 = vmatprep.subr.mxu0 0.0
        %4939 = vmatpush2.msra.mxu0 0.0
        %4940 = vmatprep.subr.mxu0 0.0
        %4941 = vmatpush2.msra.mxu0 0.0
        %4942 = vmatprep.subr.mxu0 0.0
        %4943 = vmatpush2.msra.mxu0 0.0
        %4944 = vmatprep.subr.mxu0 0.0
        %4945 = vmatpush2.msra.mxu0 0.0
        %4946 = vmatprep.subr.mxu0 0.0
        %4947 = vmatpush2.msra.mxu0 0.0
        %4948 = vmatprep.subr.mxu0 0.0
        %4949 = vmatpush2.msra.mxu0 0.0
        %4950 = vmatprep.mubr.f32.mxu0 0.0
        %4951 = vmatmul.mubr.f32.gmra.mxu0 %v4884
        %v4952 = vpop.f32.mrf.mxu0
        %v4953 = vadd.f32 0.0, %v4952
        %v4954 = vpop.f32.mrf.mxu0
        %4955 = vdwg.mxu0
        %v4956 = vadd.f32 %v4874, %v4953
        %v4957 = vld [vmem:[%s2 + $0x3c0] sm:$0xff]
        %v4958 = vld [vmem:[%s2 + $0x3c8] sm:$0xff]
        %v4959 = vld [vmem:[%s2 + $0x3d0] sm:$0xff]
        %v4960 = vld [vmem:[%s2 + $0x3d8] sm:$0xff]
        %v4961 = vld [vmem:[%s2 + $0x3e0] sm:$0xff]
        %v4962 = vld [vmem:[%s2 + $0x3e8] sm:$0xff]
        %v4963 = vld [vmem:[%s2 + $0x3f0] sm:$0xff]
        %v4964 = vld [vmem:[%s2 + $0x3f8] sm:$0xff]
        %v4966 = vsel %vm358, %v3726, 0
        %4968 = vmatprep.subr.mxu0 0.0
        %4969 = vmatpush1.msra.mxu0 0.0
        %4970 = vmatprep.subr.mxu0 0.0
        %4971 = vmatpush1.msra.mxu0 0.0
        %4972 = vmatprep.subr.mxu0 0.0
        %4973 = vmatpush1.msra.mxu0 0.0
        %4974 = vmatprep.subr.mxu0 0.0
        %4975 = vmatpush1.msra.mxu0 0.0
        %4976 = vmatprep.subr.mxu0 0.0
        %4977 = vmatpush1.msra.mxu0 0.0
        %4978 = vmatprep.subr.mxu0 0.0
        %4979 = vmatpush1.msra.mxu0 0.0
        %4980 = vmatprep.subr.mxu0 0.0
        %4981 = vmatpush1.msra.mxu0 0.0
        %4982 = vmatprep.subr.mxu0 0.0
        %4983 = vmatpush1.msra.mxu0 0.0
        %4984 = vmatprep.subr.mxu0 0.0
        %4985 = vmatpush1.msra.mxu0 %v4964
        %4986 = vmatprep.subr.mxu0 0.0
        %4987 = vmatpush1.msra.mxu0 %v4963
        %4988 = vmatprep.subr.mxu0 0.0
        %4989 = vmatpush1.msra.mxu0 %v4962
        %4990 = vmatprep.subr.mxu0 0.0
        %4991 = vmatpush1.msra.mxu0 %v4961
        %4992 = vmatprep.subr.mxu0 0.0
        %4993 = vmatpush1.msra.mxu0 %v4960
        %4994 = vmatprep.subr.mxu0 0.0
        %4995 = vmatpush1.msra.mxu0 %v4959
        %4996 = vmatprep.subr.mxu0 0.0
        %4997 = vmatpush1.msra.mxu0 %v4958
        %4998 = vmatprep.subr.mxu0 0.0
        %4999 = vmatpush1.msra.mxu0 %v4957
        %5000 = vmatprep.subr.mxu0 0.0
        %5001 = vmatpush2.msra.mxu0 0.0
        %5002 = vmatprep.subr.mxu0 0.0
        %5003 = vmatpush2.msra.mxu0 0.0
        %5004 = vmatprep.subr.mxu0 0.0
        %5005 = vmatpush2.msra.mxu0 0.0
        %5006 = vmatprep.subr.mxu0 0.0
        %5007 = vmatpush2.msra.mxu0 0.0
        %5008 = vmatprep.subr.mxu0 0.0
        %5009 = vmatpush2.msra.mxu0 0.0
        %5010 = vmatprep.subr.mxu0 0.0
        %5011 = vmatpush2.msra.mxu0 0.0
        %5012 = vmatprep.subr.mxu0 0.0
        %5013 = vmatpush2.msra.mxu0 0.0
        %5014 = vmatprep.subr.mxu0 0.0
        %5015 = vmatpush2.msra.mxu0 0.0
        %5016 = vmatprep.subr.mxu0 0.0
        %5017 = vmatpush2.msra.mxu0 0.0
        %5018 = vmatprep.subr.mxu0 0.0
        %5019 = vmatpush2.msra.mxu0 0.0
        %5020 = vmatprep.subr.mxu0 0.0
        %5021 = vmatpush2.msra.mxu0 0.0
        %5022 = vmatprep.subr.mxu0 0.0
        %5023 = vmatpush2.msra.mxu0 0.0
        %5024 = vmatprep.subr.mxu0 0.0
        %5025 = vmatpush2.msra.mxu0 0.0
        %5026 = vmatprep.subr.mxu0 0.0
        %5027 = vmatpush2.msra.mxu0 0.0
        %5028 = vmatprep.subr.mxu0 0.0
        %5029 = vmatpush2.msra.mxu0 0.0
        %5030 = vmatprep.subr.mxu0 0.0
        %5031 = vmatpush2.msra.mxu0 0.0
        %5032 = vmatprep.mubr.f32.mxu0 0.0
        %5033 = vmatmul.mubr.f32.gmra.mxu0 %v4966
        %v5034 = vpop.f32.mrf.mxu0
        %v5035 = vadd.f32 0.0, %v5034
        %v5036 = vpop.f32.mrf.mxu0
        %5037 = vdwg.mxu0
        %v5038 = vadd.f32 %v4956, %v5035
        %v5039 = vld [vmem:[%s2 + $0x418] sm:$0x1]
        %v5040 = vlaneseq
        %v5041 = vshrl.u32 %v5040, 7
        %v5042 = vsub.s32 0, %v5041
        %v5043 = vrot.slane %v5039, %v5042
        %v5044 = vadd.f32 %v5038, %v5043
        %vm5045 = vcmp.gt.f32.partialorder %v5044, 0.0
        %v5046 = vmul.f32 %v5044, 0.2
        %v5047 = vsel %vm5045, %v5044, %v5046
        %v5048 = vld [vmem:[%s1 + $0x380] sm:$0xff]
        %v5049 = vld [vmem:[%s1 + $0x388] sm:$0xff]
        %v5050 = vld [vmem:[%s1 + $0x390] sm:$0xff]
        %v5051 = vld [vmem:[%s1 + $0x398] sm:$0xff]
        %v5052 = vld [vmem:[%s1 + $0x3a0] sm:$0xff]
        %v5053 = vld [vmem:[%s1 + $0x3a8] sm:$0xff]
        %v5054 = vld [vmem:[%s1 + $0x3b0] sm:$0xff]
        %v5055 = vld [vmem:[%s1 + $0x3b8] sm:$0xff]
        %v5056 = vld [vmem:[%s1 + $0x3c0] sm:$0xff]
        %v5057 = vld [vmem:[%s1 + $0x3c8] sm:$0xff]
        %v5058 = vld [vmem:[%s1 + $0x3d0] sm:$0xff]
        %v5059 = vld [vmem:[%s1 + $0x3d8] sm:$0xff]
        %v5060 = vld [vmem:[%s1 + $0x3e0] sm:$0xff]
        %v5061 = vld [vmem:[%s1 + $0x3e8] sm:$0xff]
        %v5062 = vld [vmem:[%s1 + $0x3f0] sm:$0xff]
        %v5063 = vld [vmem:[%s1 + $0x3f8] sm:$0xff]
        %v5064 = vld [vmem:[%s2 + $0x420] sm:$0x1]
        %5065 = vmatprep.subr.mxu0 0.0
        %5066 = vmatpush1.msra.mxu0 %v5063
        %5067 = vmatprep.subr.mxu0 0.0
        %5068 = vmatpush1.msra.mxu0 %v5062
        %5069 = vmatprep.subr.mxu0 0.0
        %5070 = vmatpush1.msra.mxu0 %v5061
        %5071 = vmatprep.subr.mxu0 0.0
        %5072 = vmatpush1.msra.mxu0 %v5060
        %5073 = vmatprep.subr.mxu0 0.0
        %5074 = vmatpush1.msra.mxu0 %v5059
        %5075 = vmatprep.subr.mxu0 0.0
        %5076 = vmatpush1.msra.mxu0 %v5058
        %5077 = vmatprep.subr.mxu0 0.0
        %5078 = vmatpush1.msra.mxu0 %v5057
        %5079 = vmatprep.subr.mxu0 0.0
        %5080 = vmatpush1.msra.mxu0 %v5056
        %5081 = vmatprep.subr.mxu0 0.0
        %5082 = vmatpush1.msra.mxu0 %v5055
        %5083 = vmatprep.subr.mxu0 0.0
        %5084 = vmatpush1.msra.mxu0 %v5054
        %5085 = vmatprep.subr.mxu0 0.0
        %5086 = vmatpush1.msra.mxu0 %v5053
        %5087 = vmatprep.subr.mxu0 0.0
        %5088 = vmatpush1.msra.mxu0 %v5052
        %5089 = vmatprep.subr.mxu0 0.0
        %5090 = vmatpush1.msra.mxu0 %v5051
        %5091 = vmatprep.subr.mxu0 0.0
        %5092 = vmatpush1.msra.mxu0 %v5050
        %5093 = vmatprep.subr.mxu0 0.0
        %5094 = vmatpush1.msra.mxu0 %v5049
        %5095 = vmatprep.subr.mxu0 0.0
        %5096 = vmatpush1.msra.mxu0 %v5048
        %5097 = vmatprep.subr.mxu0 0.0
        %5098 = vmatpush2.msra.mxu0 0.0
        %5099 = vmatprep.subr.mxu0 0.0
        %5100 = vmatpush2.msra.mxu0 0.0
        %5101 = vmatprep.subr.mxu0 0.0
        %5102 = vmatpush2.msra.mxu0 0.0
        %5103 = vmatprep.subr.mxu0 0.0
        %5104 = vmatpush2.msra.mxu0 0.0
        %5105 = vmatprep.subr.mxu0 0.0
        %5106 = vmatpush2.msra.mxu0 0.0
        %5107 = vmatprep.subr.mxu0 0.0
        %5108 = vmatpush2.msra.mxu0 0.0
        %5109 = vmatprep.subr.mxu0 0.0
        %5110 = vmatpush2.msra.mxu0 0.0
        %5111 = vmatprep.subr.mxu0 0.0
        %5112 = vmatpush2.msra.mxu0 0.0
        %5113 = vmatprep.subr.mxu0 0.0
        %5114 = vmatpush2.msra.mxu0 0.0
        %5115 = vmatprep.subr.mxu0 0.0
        %5116 = vmatpush2.msra.mxu0 0.0
        %5117 = vmatprep.subr.mxu0 0.0
        %5118 = vmatpush2.msra.mxu0 0.0
        %5119 = vmatprep.subr.mxu0 0.0
        %5120 = vmatpush2.msra.mxu0 0.0
        %5121 = vmatprep.subr.mxu0 0.0
        %5122 = vmatpush2.msra.mxu0 0.0
        %5123 = vmatprep.subr.mxu0 0.0
        %5124 = vmatpush2.msra.mxu0 0.0
        %5125 = vmatprep.subr.mxu0 0.0
        %5126 = vmatpush2.msra.mxu0 0.0
        %5127 = vmatprep.subr.mxu0 0.0
        %5128 = vmatpush2.msra.mxu0 0.0
        %5129 = vmatprep.mubr.f32.mxu0 0.0
        %5130 = vmatmul.mubr.f32.gmra.mxu0 %v5047
        %v5131 = vpop.f32.mrf.mxu0
        %v5132 = vadd.f32 %v5064, %v5131
        %v5133 = vpop.f32.mrf.mxu0
        %5134 = vdwg.mxu0
        %vm5135 = vcmask 253952
        %5136 = vst.msk [vmem:[%s162] sm:$0x1] %vm5135, %v5132
        %s5137 = sand.u32 %s93, 1
        %s5138 = scalar_lea.sflag [#allocation3], %s5137
        %s5139 = sand.u32 %s93, 1
        %s5140 = scalar_lea.vmem [#allocation2], %s5139
        // Predicated region
        $region33: #{vae_encoder_forward.1} parent=31 // pred_check
          %p5141 = pneg %p103
        $region34: #{vae_encoder_forward.1} parent=31 // pred_check_branch
          %5143 = sbr.rel (%p5141) target = $region36
        $region35: #{vae_encoder_forward.1} parent=31 // pred_region
          %s5145 = ssub.s32 16, 16
          %5146 = vsyncadd %s5138, %s5145
          %s5147 = smul.addr %s17, 16
          %s5148 = scalar_lea.hbm %s3, %s5147
          %s5150 = sshll.u32 %s5140, 4
          %s5151 = int_to_ptr.vmem [resolvable:$true] %s5150
          %5153 = dma.vmem_to_hbm [thread:$0]  %s5151, 16, %s5148, %s5138
        $region36: #{vae_encoder_forward.1} parent=31 // pred_fallthru
          _
      $region32: #{vae_encoder_forward.1} parent=5 // pred_fallthru
        _
      %p5154 = scmp.le.s32.totalorder 2, %s12
      // Predicated region
      $region37: #{vae_encoder_forward.1} parent=5 // pred_check
        %p5155 = pneg %p5154
      $region38: #{vae_encoder_forward.1} parent=5 // pred_check_branch
        %5157 = sbr.rel (%p5155) target = $region40
      $region39: #{vae_encoder_forward.1} parent=5 // pred_region
        %s5158 = ssub.s32 %s12, 2
        // Predicated region
        $region41: #{vae_encoder_forward.1} parent=39 // pred_check
          %p5159 = pneg %p109
        $region42: #{vae_encoder_forward.1} parent=39 // pred_check_branch
          %5161 = sbr.rel (%p5159) target = $region44
        $region43: #{vae_encoder_forward.1} parent=39 // pred_region
          %s5162 = sand.u32 %s94, 1
          %s5163 = scalar_lea.sflag [#allocation3], %s5162
          %s5164 = sand.u32 %s94, 1
          %s5165 = scalar_lea.vmem [#allocation2], %s5164
          %5166 = dma.done %s5163, 16
        $region44: #{vae_encoder_forward.1} parent=39 // pred_fallthru
          _
      $region40: #{vae_encoder_forward.1} parent=5 // pred_fallthru
        _
    $region6: #{vae_encoder_forward.1} parent=1 // loop_footer
      %s16 = sadd.s32 1, %s12
    $region7: #{vae_encoder_forward.1} parent=1 // loop_footer_branch
      %11 = sbr.rel target = $region3
    $region8: #{vae_encoder_forward.1} parent=1 // loop_exit
      _
    %5167 = vsyncpa [#allocation3], 1
    %s5168 = scalar_lea.sflag [#allocation3], 1
    %5169 = vsyncpa %s5168, 1

</llo_original>
